<compile_context>
chip_gen: v6e
topology: v6e:2x2x1
jax: 0.10.0
libtpu: 0.0.40
codegen_flags: <defaults>
</compile_context>

<pallas_src>
import math
import jax
import jax.numpy as jnp
from jax.experimental import pallas as pl
from jax.experimental.pallas import tpu as pltpu

# ---------------- model hyper-parameters (small synthetic PhoBERT) -----------
BATCH        = 2
SEQ          = 8
HIDDEN       = 32
NUM_HEADS    = 2
HEAD_DIM     = HIDDEN // NUM_HEADS
INTERMEDIATE = 64
NUM_LAYERS   = 2
VOCAB        = 100
NUM_LABELS   = 3
LN_EPS       = 1e-5
NEG_INF      = -1e9

# ---------------- parameter-slab layout (lane-dense, 128 wide) ---------------
LANE       = 128
HDR_ROWS   = 8                                   # row0: emb LN g|b, row1: cls_b
CLS_W_OFF  = HDR_ROWS                            # rows 8:40  -> cls_w (32, <=128)
LAYER0_OFF = HDR_ROWS + HIDDEN                   # 40
LAYER_ROWS = HIDDEN + HIDDEN + INTERMEDIATE + 8  # attn_w + w1 + w2 + vec block = 136
SLAB_ROWS  = LAYER0_OFF + NUM_LAYERS * LAYER_ROWS
OUT_ROWS   = 8                                   # padded logits rows (lane-dense out)


# ---------------- fused Pallas kernel: whole forward --------------------------
def phobert_fused_kernel(x_ref, mask_ref, slab_ref, out_ref, ctx_ref):
    scale = 1.0 / math.sqrt(HEAD_DIM)

    def layernorm(y, g, b):
        mu = jnp.mean(y, axis=-1, keepdims=True)
        var = jnp.mean((y - mu) ** 2, axis=-1, keepdims=True)
        return (y - mu) * jax.lax.rsqrt(var + LN_EPS) * g + b

    # ---- header: embedding LayerNorm params + classifier bias ----
    hdr = slab_ref[0:HDR_ROWS, :]                       # (8, 128)
    emb_g = hdr[0:1, 0:HIDDEN]
    emb_b = hdr[0:1, HIDDEN:2 * HIDDEN]
    cls_b_row = hdr[1:2, :]                             # (1, 128) lane-padded bias

    # ---- embedding LayerNorm over all B*S rows at once ----
    x = layernorm(x_ref[...], emb_g, emb_b)             # (B*S, H)

    # ---- encoder layers (static Python loop; all weights VMEM resident) ----
    for li in range(NUM_LAYERS):
        base = LAYER0_OFF + li * LAYER_ROWS
        attn_w = slab_ref[base:base + HIDDEN, :]                                  # (32,128)=[wq|wk|wv|wo]
        w1 = slab_ref[base + HIDDEN:base + 2 * HIDDEN, 0:INTERMEDIATE]            # (32, 64)
        w2 = slab_ref[base + 2 * HIDDEN:base + 2 * HIDDEN + INTERMEDIATE, 0:HIDDEN]  # (64, 32)
        vec = slab_ref[base + LAYER_ROWS - 8:base + LAYER_ROWS, :]                # (8, 128)

        bq, bk = vec[0:1, 0:HIDDEN], vec[0:1, HIDDEN:2 * HIDDEN]
        bv, bo = vec[0:1, 2 * HIDDEN:3 * HIDDEN], vec[0:1, 3 * HIDDEN:4 * HIDDEN]
        ln1_g, ln1_b = vec[1:2, 0:HIDDEN], vec[1:2, HIDDEN:2 * HIDDEN]
        ln2_g, ln2_b = vec[1:2, 2 * HIDDEN:3 * HIDDEN], vec[1:2, 3 * HIDDEN:4 * HIDDEN]
        b1 = vec[2:3, 0:INTERMEDIATE]
        b2 = vec[2:3, INTERMEDIATE:INTERMEDIATE + HIDDEN]

        # fused Q/K/V projection: one (B*S, H) @ (H, 4H) matmul (wo column unused here)
        xw = jnp.dot(x, attn_w, preferred_element_type=jnp.float32)               # (16, 128)
        q = xw[:, 0:HIDDEN] + bq
        k = xw[:, HIDDEN:2 * HIDDEN] + bk
        v = xw[:, 2 * HIDDEN:3 * HIDDEN] + bv
        wo = attn_w[:, 3 * HIDDEN:4 * HIDDEN]                                     # (32, 32)

        # attention: static loop over (batch, head); no transposes, no concat
        for b in range(BATCH):
            r0 = b * SEQ
            mask_b = mask_ref[b:b + 1, :]                                         # (1, S) key bias
            qb = q[r0:r0 + SEQ, :]
            kb = k[r0:r0 + SEQ, :]
            vb = v[r0:r0 + SEQ, :]
            for h in range(NUM_HEADS):
                c0 = h * HEAD_DIM
                qh = qb[:, c0:c0 + HEAD_DIM]
                kh = kb[:, c0:c0 + HEAD_DIM]
                vh = vb[:, c0:c0 + HEAD_DIM]
                s = jax.lax.dot_general(qh, kh, (((1,), (1,)), ((), ())),
                                        preferred_element_type=jnp.float32)       # (S, S)
                s = s * scale + mask_b
                s = s - jnp.max(s, axis=-1, keepdims=True)
                p = jnp.exp(s)
                p = p * pl.reciprocal(jnp.sum(p, axis=-1, keepdims=True), approx=True)
                ctx_ref[r0:r0 + SEQ, c0:c0 + HEAD_DIM] = jnp.dot(
                    p, vh, preferred_element_type=jnp.float32)

        attn_out = jnp.dot(ctx_ref[...], wo, preferred_element_type=jnp.float32) + bo
        h1 = layernorm(x + attn_out, ln1_g, ln1_b)

        # feed-forward
        ff = jnp.dot(h1, w1, preferred_element_type=jnp.float32) + b1             # (16, 64)
        # TODO(synk): HF RoBERTa uses exact (erf) GELU; tanh approximation used here.
        ff = 0.5 * ff * (1.0 + jnp.tanh(0.7978845608028654 * (ff + 0.044715 * ff * ff * ff)))
        ff = jnp.dot(ff, w2, preferred_element_type=jnp.float32) + b2             # (16, 32)
        x = layernorm(h1 + ff, ln2_g, ln2_b)

    # ---- pooled CLS rows + classifier; dropout(0.3) is identity at inference ----
    cls_w_blk = slab_ref[CLS_W_OFF:CLS_W_OFF + HIDDEN, :]                         # (32,128), zero-padded cols
    pooled_rows = [x[b * SEQ:b * SEQ + 1, :] for b in range(BATCH)]
    pooled_rows.append(jnp.zeros((OUT_ROWS - BATCH, HIDDEN), jnp.float32))
    pooled = jnp.concatenate(pooled_rows, axis=0)                                 # (8, 32)
    # lane-dense full-block store; real logits live in [:BATCH, :NUM_LABELS]
    out_ref[...] = jnp.dot(pooled, cls_w_blk,
                           preferred_element_type=jnp.float32) + cls_b_row


# ---------------- parameter init + packing into one lane-dense slab ----------
def init_params(key):
    def nrm(k, shape, std=0.02):
        return (std * jax.random.normal(k, shape)).astype(jnp.float32)

    keys = jax.random.split(key, 4 + NUM_LAYERS)
    word_emb = nrm(keys[0], (VOCAB, HIDDEN))
    pos_emb  = nrm(keys[1], (SEQ, HIDDEN))
    type_emb = nrm(keys[2], (1, HIDDEN))
    emb_ln_g = jnp.ones((1, HIDDEN), jnp.float32)
    emb_ln_b = jnp.zeros((1, HIDDEN), jnp.float32)
    cls_w    = nrm(keys[3], (HIDDEN, NUM_LABELS))
    cls_b    = jnp.zeros((1, NUM_LABELS), jnp.float32)

    # header rows
    hdr0 = jnp.pad(jnp.concatenate([emb_ln_g, emb_ln_b], axis=1),
                   ((0, 0), (0, LANE - 2 * HIDDEN)))                       # (1, 128)
    hdr1 = jnp.pad(cls_b, ((0, 0), (0, LANE - NUM_LABELS)))                # (1, 128)
    header = jnp.concatenate(
        [hdr0, hdr1, jnp.zeros((HDR_ROWS - 2, LANE), jnp.float32)], axis=0)  # (8, 128)
    cls_w_blk = jnp.pad(cls_w, ((0, 0), (0, LANE - NUM_LABELS)))           # (32, 128)

    layer_blocks = []
    for li in range(NUM_LAYERS):
        lk = jax.random.split(keys[4 + li], 6)
        wq = nrm(lk[0], (HIDDEN, HIDDEN))
        wk = nrm(lk[1], (HIDDEN, HIDDEN))
        wv = nrm(lk[2], (HIDDEN, HIDDEN))
        wo = nrm(lk[3], (HIDDEN, HIDDEN))
        w1 = nrm(lk[4], (HIDDEN, INTERMEDIATE))
        w2 = nrm(lk[5], (INTERMEDIATE, HIDDEN))
        bq = jnp.zeros((1, HIDDEN), jnp.float32)
        bk = jnp.zeros((1, HIDDEN), jnp.float32)
        bv = jnp.zeros((1, HIDDEN), jnp.float32)
        bo = jnp.zeros((1, HIDDEN), jnp.float32)
        ln1_g = jnp.ones((1, HIDDEN), jnp.float32)
        ln1_b = jnp.zeros((1, HIDDEN), jnp.float32)
        ln2_g = jnp.ones((1, HIDDEN), jnp.float32)
        ln2_b = jnp.zeros((1, HIDDEN), jnp.float32)
        b1 = jnp.zeros((1, INTERMEDIATE), jnp.float32)
        b2 = jnp.zeros((1, HIDDEN), jnp.float32)

        attn_w = jnp.concatenate([wq, wk, wv, wo], axis=1)                 # (32, 128)
        w1_blk = jnp.pad(w1, ((0, 0), (0, LANE - INTERMEDIATE)))           # (32, 128)
        w2_blk = jnp.pad(w2, ((0, 0), (0, LANE - HIDDEN)))                 # (64, 128)
        vec0 = jnp.concatenate([bq, bk, bv, bo], axis=1)                   # (1, 128)
        vec1 = jnp.concatenate([ln1_g, ln1_b, ln2_g, ln2_b], axis=1)       # (1, 128)
        vec2 = jnp.pad(jnp.concatenate([b1, b2], axis=1),
                       ((0, 0), (0, LANE - INTERMEDIATE - HIDDEN)))        # (1, 128)
        vec_blk = jnp.concatenate(
            [vec0, vec1, vec2, jnp.zeros((5, LANE), jnp.float32)], axis=0)  # (8, 128)
        layer_blocks.append(
            jnp.concatenate([attn_w, w1_blk, w2_blk, vec_blk], axis=0))    # (136, 128)

    slab = jnp.concatenate([header, cls_w_blk] + layer_blocks, axis=0)     # (312, 128)
    assert slab.shape == (SLAB_ROWS, LANE)

    return {"word_emb": word_emb, "pos_emb": pos_emb, "type_emb": type_emb,
            "slab": slab}


# ---------------- full forward ------------------------------------------------
def phobert_classifier_forward(params, input_ids, attention_mask):
    # --- embedding gather + sum: plain-JAX glue (data-dependent lookup) ---
    x = (params["word_emb"][input_ids]
         + params["pos_emb"][None, :, :]
         + params["type_emb"][None, :, :])                        # (B, S, H)
    x_flat = x.reshape(BATCH * SEQ, HIDDEN).astype(jnp.float32)   # (B*S, H)

    # additive attention bias over keys: 0 where attended, -1e9 where padded
    add_mask = (1.0 - attention_mask.astype(jnp.float32)) * NEG_INF   # (B, S)

    out_pad = pl.pallas_call(
        phobert_fused_kernel,
        out_shape=jax.ShapeDtypeStruct((OUT_ROWS, LANE), jnp.float32),
        grid=(1,),
        in_specs=[
            pl.BlockSpec((BATCH * SEQ, HIDDEN), lambda i: (0, 0)),   # activations
            pl.BlockSpec((BATCH, SEQ), lambda i: (0, 0)),            # additive mask
            pl.BlockSpec((SLAB_ROWS, LANE), lambda i: (0, 0)),       # packed params
        ],
        out_specs=pl.BlockSpec((OUT_ROWS, LANE), lambda i: (0, 0)),
        scratch_shapes=[pltpu.VMEM((BATCH * SEQ, HIDDEN), jnp.float32)],  # head ctx
        compiler_params=pltpu.CompilerParams(dimension_semantics=("arbitrary",)),
    )(x_flat, add_mask, params["slab"])

    return out_pad[:BATCH, :NUM_LABELS]


if __name__ == "__main__":
    key = jax.random.PRNGKey(0)
    pkey, ikey = jax.random.split(key)
    params = init_params(pkey)

    input_ids = jax.random.randint(ikey, (BATCH, SEQ), 0, VOCAB, dtype=jnp.int32)
    # first sequence fully attended, second has 2 padding positions
    attention_mask = jnp.array(
        [[1] * SEQ,
         [1] * (SEQ - 2) + [0, 0]], dtype=jnp.int32)

    logits = phobert_classifier_forward(params, input_ids, attention_mask)
    logits = jax.block_until_ready(logits)
    assert logits.shape == (BATCH, NUM_LABELS)
    assert bool(jnp.all(jnp.isfinite(logits)))
    print("KERNEL_OK")
</pallas_src>

<mosaic_0001>
module attributes {stable_mosaic.version = 11 : i64} {
  func.func @phobert_fused_kernel(%arg0: i32, %arg1: memref<16x32xf32, #tpu.memory_space<vmem>>, %arg2: memref<2x8xf32, #tpu.memory_space<vmem>>, %arg3: memref<312x128xf32, #tpu.memory_space<vmem>>, %arg4: memref<8x128xf32, #tpu.memory_space<vmem>>, %arg5: memref<16x32xf32, #tpu.memory_space<vmem>>) attributes {dimension_semantics = [#tpu.dimension_semantics<arbitrary>], iteration_bounds = array<i64: 1>, scalar_prefetch = 0 : i64, scratch_operands = 1 : i64, tpu.core_type = #tpu.core_type<tc>, window_params = [{pipeline_mode = #tpu.pipeline_mode<synchronous>, transform_indices = @transform_0, window_bounds = array<i64: 16, 32>}, {pipeline_mode = #tpu.pipeline_mode<synchronous>, transform_indices = @transform_1, window_bounds = array<i64: 2, 8>}, {pipeline_mode = #tpu.pipeline_mode<synchronous>, transform_indices = @transform_2, window_bounds = array<i64: 312, 128>}, {pipeline_mode = #tpu.pipeline_mode<synchronous>, transform_indices = @transform_3, window_bounds = array<i64: 8, 128>}]} {
    %c0 = arith.constant 0 : index
    %c0_0 = arith.constant 0 : index
    %0 = vector.load %arg3[%c0, %c0_0] : memref<312x128xf32, #tpu.memory_space<vmem>>, vector<8x128xf32>
    %1 = vector.extract_strided_slice %0 {offsets = [0, 0], sizes = [1, 32], strides = [1, 1]} : vector<8x128xf32> to vector<1x32xf32>
    %2 = vector.extract_strided_slice %0 {offsets = [0, 32], sizes = [1, 32], strides = [1, 1]} : vector<8x128xf32> to vector<1x32xf32>
    %3 = vector.extract_strided_slice %0 {offsets = [1, 0], sizes = [1, 128], strides = [1, 1]} : vector<8x128xf32> to vector<1x128xf32>
    %c0_1 = arith.constant 0 : index
    %c0_2 = arith.constant 0 : index
    %4 = vector.load %arg1[%c0_1, %c0_2] : memref<16x32xf32, #tpu.memory_space<vmem>>, vector<16x32xf32>
    %cst = arith.constant dense<0.000000e+00> : vector<16xf32>
    %5 = vector.multi_reduction <add>, %4, %cst [1] : vector<16x32xf32> to vector<16xf32>
    %6 = vector.shape_cast %5 : vector<16xf32> to vector<16x1xf32>
    %cst_3 = arith.constant 3.200000e+01 : f32
    %7 = vector.broadcast %cst_3 : f32 to vector<16x1xf32>
    %8 = arith.divf %6, %7 : vector<16x1xf32>
    %9 = vector.broadcast %8 : vector<16x1xf32> to vector<16x32xf32>
    %10 = arith.subf %4, %9 : vector<16x32xf32>
    %11 = arith.mulf %10, %10 : vector<16x32xf32>
    %cst_4 = arith.constant dense<0.000000e+00> : vector<16xf32>
    %12 = vector.multi_reduction <add>, %11, %cst_4 [1] : vector<16x32xf32> to vector<16xf32>
    %13 = vector.shape_cast %12 : vector<16xf32> to vector<16x1xf32>
    %cst_5 = arith.constant 3.200000e+01 : f32
    %14 = vector.broadcast %cst_5 : f32 to vector<16x1xf32>
    %15 = arith.divf %13, %14 : vector<16x1xf32>
    %16 = vector.broadcast %8 : vector<16x1xf32> to vector<16x32xf32>
    %17 = arith.subf %4, %16 : vector<16x32xf32>
    %cst_6 = arith.constant 9.99999974E-6 : f32
    %18 = vector.broadcast %cst_6 : f32 to vector<16x1xf32>
    %19 = arith.addf %15, %18 : vector<16x1xf32>
    %20 = math.rsqrt %19 : vector<16x1xf32>
    %21 = vector.broadcast %20 : vector<16x1xf32> to vector<16x32xf32>
    %22 = arith.mulf %17, %21 : vector<16x32xf32>
    %23 = vector.broadcast %1 : vector<1x32xf32> to vector<16x32xf32>
    %24 = arith.mulf %22, %23 : vector<16x32xf32>
    %25 = vector.broadcast %2 : vector<1x32xf32> to vector<16x32xf32>
    %26 = arith.addf %24, %25 : vector<16x32xf32>
    %c40 = arith.constant 40 : index
    %c0_7 = arith.constant 0 : index
    %27 = vector.load %arg3[%c40, %c0_7] : memref<312x128xf32, #tpu.memory_space<vmem>>, vector<32x128xf32>
    %c72 = arith.constant 72 : index
    %c0_8 = arith.constant 0 : index
    %28 = vector.load %arg3[%c72, %c0_8] : memref<312x128xf32, #tpu.memory_space<vmem>>, vector<32x64xf32>
    %c104 = arith.constant 104 : index
    %c0_9 = arith.constant 0 : index
    %29 = vector.load %arg3[%c104, %c0_9] : memref<312x128xf32, #tpu.memory_space<vmem>>, vector<64x32xf32>
    %c168 = arith.constant 168 : index
    %c0_10 = arith.constant 0 : index
    %30 = vector.load %arg3[%c168, %c0_10] : memref<312x128xf32, #tpu.memory_space<vmem>>, vector<8x128xf32>
    %31 = vector.extract_strided_slice %30 {offsets = [0, 0], sizes = [1, 32], strides = [1, 1]} : vector<8x128xf32> to vector<1x32xf32>
    %32 = vector.extract_strided_slice %30 {offsets = [0, 32], sizes = [1, 32], strides = [1, 1]} : vector<8x128xf32> to vector<1x32xf32>
    %33 = vector.extract_strided_slice %30 {offsets = [0, 64], sizes = [1, 32], strides = [1, 1]} : vector<8x128xf32> to vector<1x32xf32>
    %34 = vector.extract_strided_slice %30 {offsets = [0, 96], sizes = [1, 32], strides = [1, 1]} : vector<8x128xf32> to vector<1x32xf32>
    %35 = vector.extract_strided_slice %30 {offsets = [1, 0], sizes = [1, 32], strides = [1, 1]} : vector<8x128xf32> to vector<1x32xf32>
    %36 = vector.extract_strided_slice %30 {offsets = [1, 32], sizes = [1, 32], strides = [1, 1]} : vector<8x128xf32> to vector<1x32xf32>
    %37 = vector.extract_strided_slice %30 {offsets = [1, 64], sizes = [1, 32], strides = [1, 1]} : vector<8x128xf32> to vector<1x32xf32>
    %38 = vector.extract_strided_slice %30 {offsets = [1, 96], sizes = [1, 32], strides = [1, 1]} : vector<8x128xf32> to vector<1x32xf32>
    %39 = vector.extract_strided_slice %30 {offsets = [2, 0], sizes = [1, 64], strides = [1, 1]} : vector<8x128xf32> to vector<1x64xf32>
    %40 = vector.extract_strided_slice %30 {offsets = [2, 64], sizes = [1, 32], strides = [1, 1]} : vector<8x128xf32> to vector<1x32xf32>
    %cst_11 = arith.constant dense<0.000000e+00> : vector<16x128xf32>
    %41 = tpu.matmul %26, %27, %cst_11 {dimension_numbers = #tpu.dot_dimension_numbers<[1], [0], [0], [1], [0, 0, 1, 1], [], []>} : vector<16x32xf32>, vector<32x128xf32>, vector<16x128xf32> -> vector<16x128xf32>
    %42 = vector.extract_strided_slice %41 {offsets = [0, 0], sizes = [16, 32], strides = [1, 1]} : vector<16x128xf32> to vector<16x32xf32>
    %43 = vector.broadcast %31 : vector<1x32xf32> to vector<16x32xf32>
    %44 = arith.addf %42, %43 : vector<16x32xf32>
    %45 = vector.extract_strided_slice %41 {offsets = [0, 32], sizes = [16, 32], strides = [1, 1]} : vector<16x128xf32> to vector<16x32xf32>
    %46 = vector.broadcast %32 : vector<1x32xf32> to vector<16x32xf32>
    %47 = arith.addf %45, %46 : vector<16x32xf32>
    %48 = vector.extract_strided_slice %41 {offsets = [0, 64], sizes = [16, 32], strides = [1, 1]} : vector<16x128xf32> to vector<16x32xf32>
    %49 = vector.broadcast %33 : vector<1x32xf32> to vector<16x32xf32>
    %50 = arith.addf %48, %49 : vector<16x32xf32>
    %51 = vector.extract_strided_slice %27 {offsets = [0, 96], sizes = [32, 32], strides = [1, 1]} : vector<32x128xf32> to vector<32x32xf32>
    %c0_12 = arith.constant 0 : index
    %c0_13 = arith.constant 0 : index
    %52 = vector.load %arg2[%c0_12, %c0_13] : memref<2x8xf32, #tpu.memory_space<vmem>>, vector<1x8xf32>
    %53 = vector.extract_strided_slice %44 {offsets = [0, 0], sizes = [8, 32], strides = [1, 1]} : vector<16x32xf32> to vector<8x32xf32>
    %54 = vector.extract_strided_slice %47 {offsets = [0, 0], sizes = [8, 32], strides = [1, 1]} : vector<16x32xf32> to vector<8x32xf32>
    %55 = vector.extract_strided_slice %50 {offsets = [0, 0], sizes = [8, 32], strides = [1, 1]} : vector<16x32xf32> to vector<8x32xf32>
    %56 = vector.extract_strided_slice %53 {offsets = [0, 0], sizes = [8, 16], strides = [1, 1]} : vector<8x32xf32> to vector<8x16xf32>
    %57 = vector.extract_strided_slice %54 {offsets = [0, 0], sizes = [8, 16], strides = [1, 1]} : vector<8x32xf32> to vector<8x16xf32>
    %58 = vector.extract_strided_slice %55 {offsets = [0, 0], sizes = [8, 16], strides = [1, 1]} : vector<8x32xf32> to vector<8x16xf32>
    %cst_14 = arith.constant dense<0.000000e+00> : vector<8x8xf32>
    %59 = tpu.matmul %56, %57, %cst_14 {dimension_numbers = #tpu.dot_dimension_numbers<[1], [1], [0], [0], [0, 0, 1, 0], [], []>} : vector<8x16xf32>, vector<8x16xf32>, vector<8x8xf32> -> vector<8x8xf32>
    %cst_15 = arith.constant 2.500000e-01 : f32
    %60 = vector.broadcast %cst_15 : f32 to vector<8x8xf32>
    %61 = arith.mulf %59, %60 : vector<8x8xf32>
    %62 = vector.broadcast %52 : vector<1x8xf32> to vector<8x8xf32>
    %63 = arith.addf %61, %62 : vector<8x8xf32>
    %cst_16 = arith.constant dense<0xFF800000> : vector<8xf32>
    %64 = vector.multi_reduction <maximumf>, %63, %cst_16 [1] : vector<8x8xf32> to vector<8xf32>
    %65 = vector.shape_cast %64 : vector<8xf32> to vector<8x1xf32>
    %66 = vector.broadcast %65 : vector<8x1xf32> to vector<8x8xf32>
    %67 = arith.subf %63, %66 : vector<8x8xf32>
    %68 = math.exp %67 : vector<8x8xf32>
    %cst_17 = arith.constant dense<0.000000e+00> : vector<8xf32>
    %69 = vector.multi_reduction <add>, %68, %cst_17 [1] : vector<8x8xf32> to vector<8xf32>
    %70 = vector.shape_cast %69 : vector<8xf32> to vector<8x1xf32>
    %71 = tpu.reciprocal %70 {approx = true} : vector<8x1xf32> -> vector<8x1xf32>
    %72 = vector.broadcast %71 : vector<8x1xf32> to vector<8x8xf32>
    %73 = arith.mulf %68, %72 : vector<8x8xf32>
    %cst_18 = arith.constant dense<0.000000e+00> : vector<8x16xf32>
    %74 = tpu.matmul %73, %58, %cst_18 {dimension_numbers = #tpu.dot_dimension_numbers<[1], [0], [0], [1], [0, 0, 1, 1], [], []>} : vector<8x8xf32>, vector<8x16xf32>, vector<8x16xf32> -> vector<8x16xf32>
    %c0_19 = arith.constant 0 : index
    %c0_20 = arith.constant 0 : index
    %75 = vector.load %arg5[%c0_19, %c0_20] : memref<16x32xf32, #tpu.memory_space<vmem>>, vector<8x16xf32>
    tpu.vector_store %arg5[%c0_19, %c0_20], %74 {strides = array<i32>} : memref<16x32xf32, #tpu.memory_space<vmem>>, vector<8x16xf32>,
    %76 = vector.extract_strided_slice %53 {offsets = [0, 16], sizes = [8, 16], strides = [1, 1]} : vector<8x32xf32> to vector<8x16xf32>
    %77 = vector.extract_strided_slice %54 {offsets = [0, 16], sizes = [8, 16], strides = [1, 1]} : vector<8x32xf32> to vector<8x16xf32>
    %78 = vector.extract_strided_slice %55 {offsets = [0, 16], sizes = [8, 16], strides = [1, 1]} : vector<8x32xf32> to vector<8x16xf32>
    %cst_21 = arith.constant dense<0.000000e+00> : vector<8x8xf32>
    %79 = tpu.matmul %76, %77, %cst_21 {dimension_numbers = #tpu.dot_dimension_numbers<[1], [1], [0], [0], [0, 0, 1, 0], [], []>} : vector<8x16xf32>, vector<8x16xf32>, vector<8x8xf32> -> vector<8x8xf32>
    %cst_22 = arith.constant 2.500000e-01 : f32
    %80 = vector.broadcast %cst_22 : f32 to vector<8x8xf32>
    %81 = arith.mulf %79, %80 : vector<8x8xf32>
    %82 = vector.broadcast %52 : vector<1x8xf32> to vector<8x8xf32>
    %83 = arith.addf %81, %82 : vector<8x8xf32>
    %cst_23 = arith.constant dense<0xFF800000> : vector<8xf32>
    %84 = vector.multi_reduction <maximumf>, %83, %cst_23 [1] : vector<8x8xf32> to vector<8xf32>
    %85 = vector.shape_cast %84 : vector<8xf32> to vector<8x1xf32>
    %86 = vector.broadcast %85 : vector<8x1xf32> to vector<8x8xf32>
    %87 = arith.subf %83, %86 : vector<8x8xf32>
    %88 = math.exp %87 : vector<8x8xf32>
    %cst_24 = arith.constant dense<0.000000e+00> : vector<8xf32>
    %89 = vector.multi_reduction <add>, %88, %cst_24 [1] : vector<8x8xf32> to vector<8xf32>
    %90 = vector.shape_cast %89 : vector<8xf32> to vector<8x1xf32>
    %91 = tpu.reciprocal %90 {approx = true} : vector<8x1xf32> -> vector<8x1xf32>
    %92 = vector.broadcast %91 : vector<8x1xf32> to vector<8x8xf32>
    %93 = arith.mulf %88, %92 : vector<8x8xf32>
    %cst_25 = arith.constant dense<0.000000e+00> : vector<8x16xf32>
    %94 = tpu.matmul %93, %78, %cst_25 {dimension_numbers = #tpu.dot_dimension_numbers<[1], [0], [0], [1], [0, 0, 1, 1], [], []>} : vector<8x8xf32>, vector<8x16xf32>, vector<8x16xf32> -> vector<8x16xf32>
    %c0_26 = arith.constant 0 : index
    %c16 = arith.constant 16 : index
    %95 = vector.load %arg5[%c0_26, %c16] : memref<16x32xf32, #tpu.memory_space<vmem>>, vector<8x16xf32>
    tpu.vector_store %arg5[%c0_26, %c16], %94 {strides = array<i32>} : memref<16x32xf32, #tpu.memory_space<vmem>>, vector<8x16xf32>,
    %c1 = arith.constant 1 : index
    %c0_27 = arith.constant 0 : index
    %96 = vector.load %arg2[%c1, %c0_27] : memref<2x8xf32, #tpu.memory_space<vmem>>, vector<1x8xf32>
    %97 = vector.extract_strided_slice %44 {offsets = [8, 0], sizes = [8, 32], strides = [1, 1]} : vector<16x32xf32> to vector<8x32xf32>
    %98 = vector.extract_strided_slice %47 {offsets = [8, 0], sizes = [8, 32], strides = [1, 1]} : vector<16x32xf32> to vector<8x32xf32>
    %99 = vector.extract_strided_slice %50 {offsets = [8, 0], sizes = [8, 32], strides = [1, 1]} : vector<16x32xf32> to vector<8x32xf32>
    %100 = vector.extract_strided_slice %97 {offsets = [0, 0], sizes = [8, 16], strides = [1, 1]} : vector<8x32xf32> to vector<8x16xf32>
    %101 = vector.extract_strided_slice %98 {offsets = [0, 0], sizes = [8, 16], strides = [1, 1]} : vector<8x32xf32> to vector<8x16xf32>
    %102 = vector.extract_strided_slice %99 {offsets = [0, 0], sizes = [8, 16], strides = [1, 1]} : vector<8x32xf32> to vector<8x16xf32>
    %cst_28 = arith.constant dense<0.000000e+00> : vector<8x8xf32>
    %103 = tpu.matmul %100, %101, %cst_28 {dimension_numbers = #tpu.dot_dimension_numbers<[1], [1], [0], [0], [0, 0, 1, 0], [], []>} : vector<8x16xf32>, vector<8x16xf32>, vector<8x8xf32> -> vector<8x8xf32>
    %cst_29 = arith.constant 2.500000e-01 : f32
    %104 = vector.broadcast %cst_29 : f32 to vector<8x8xf32>
    %105 = arith.mulf %103, %104 : vector<8x8xf32>
    %106 = vector.broadcast %96 : vector<1x8xf32> to vector<8x8xf32>
    %107 = arith.addf %105, %106 : vector<8x8xf32>
    %cst_30 = arith.constant dense<0xFF800000> : vector<8xf32>
    %108 = vector.multi_reduction <maximumf>, %107, %cst_30 [1] : vector<8x8xf32> to vector<8xf32>
    %109 = vector.shape_cast %108 : vector<8xf32> to vector<8x1xf32>
    %110 = vector.broadcast %109 : vector<8x1xf32> to vector<8x8xf32>
    %111 = arith.subf %107, %110 : vector<8x8xf32>
    %112 = math.exp %111 : vector<8x8xf32>
    %cst_31 = arith.constant dense<0.000000e+00> : vector<8xf32>
    %113 = vector.multi_reduction <add>, %112, %cst_31 [1] : vector<8x8xf32> to vector<8xf32>
    %114 = vector.shape_cast %113 : vector<8xf32> to vector<8x1xf32>
    %115 = tpu.reciprocal %114 {approx = true} : vector<8x1xf32> -> vector<8x1xf32>
    %116 = vector.broadcast %115 : vector<8x1xf32> to vector<8x8xf32>
    %117 = arith.mulf %112, %116 : vector<8x8xf32>
    %cst_32 = arith.constant dense<0.000000e+00> : vector<8x16xf32>
    %118 = tpu.matmul %117, %102, %cst_32 {dimension_numbers = #tpu.dot_dimension_numbers<[1], [0], [0], [1], [0, 0, 1, 1], [], []>} : vector<8x8xf32>, vector<8x16xf32>, vector<8x16xf32> -> vector<8x16xf32>
    %c8 = arith.constant 8 : index
    %c0_33 = arith.constant 0 : index
    %119 = vector.load %arg5[%c8, %c0_33] : memref<16x32xf32, #tpu.memory_space<vmem>>, vector<8x16xf32>
    tpu.vector_store %arg5[%c8, %c0_33], %118 {strides = array<i32>} : memref<16x32xf32, #tpu.memory_space<vmem>>, vector<8x16xf32>,
    %120 = vector.extract_strided_slice %97 {offsets = [0, 16], sizes = [8, 16], strides = [1, 1]} : vector<8x32xf32> to vector<8x16xf32>
    %121 = vector.extract_strided_slice %98 {offsets = [0, 16], sizes = [8, 16], strides = [1, 1]} : vector<8x32xf32> to vector<8x16xf32>
    %122 = vector.extract_strided_slice %99 {offsets = [0, 16], sizes = [8, 16], strides = [1, 1]} : vector<8x32xf32> to vector<8x16xf32>
    %cst_34 = arith.constant dense<0.000000e+00> : vector<8x8xf32>
    %123 = tpu.matmul %120, %121, %cst_34 {dimension_numbers = #tpu.dot_dimension_numbers<[1], [1], [0], [0], [0, 0, 1, 0], [], []>} : vector<8x16xf32>, vector<8x16xf32>, vector<8x8xf32> -> vector<8x8xf32>
    %cst_35 = arith.constant 2.500000e-01 : f32
    %124 = vector.broadcast %cst_35 : f32 to vector<8x8xf32>
    %125 = arith.mulf %123, %124 : vector<8x8xf32>
    %126 = vector.broadcast %96 : vector<1x8xf32> to vector<8x8xf32>
    %127 = arith.addf %125, %126 : vector<8x8xf32>
    %cst_36 = arith.constant dense<0xFF800000> : vector<8xf32>
    %128 = vector.multi_reduction <maximumf>, %127, %cst_36 [1] : vector<8x8xf32> to vector<8xf32>
    %129 = vector.shape_cast %128 : vector<8xf32> to vector<8x1xf32>
    %130 = vector.broadcast %129 : vector<8x1xf32> to vector<8x8xf32>
    %131 = arith.subf %127, %130 : vector<8x8xf32>
    %132 = math.exp %131 : vector<8x8xf32>
    %cst_37 = arith.constant dense<0.000000e+00> : vector<8xf32>
    %133 = vector.multi_reduction <add>, %132, %cst_37 [1] : vector<8x8xf32> to vector<8xf32>
    %134 = vector.shape_cast %133 : vector<8xf32> to vector<8x1xf32>
    %135 = tpu.reciprocal %134 {approx = true} : vector<8x1xf32> -> vector<8x1xf32>
    %136 = vector.broadcast %135 : vector<8x1xf32> to vector<8x8xf32>
    %137 = arith.mulf %132, %136 : vector<8x8xf32>
    %cst_38 = arith.constant dense<0.000000e+00> : vector<8x16xf32>
    %138 = tpu.matmul %137, %122, %cst_38 {dimension_numbers = #tpu.dot_dimension_numbers<[1], [0], [0], [1], [0, 0, 1, 1], [], []>} : vector<8x8xf32>, vector<8x16xf32>, vector<8x16xf32> -> vector<8x16xf32>
    %c8_39 = arith.constant 8 : index
    %c16_40 = arith.constant 16 : index
    %139 = vector.load %arg5[%c8_39, %c16_40] : memref<16x32xf32, #tpu.memory_space<vmem>>, vector<8x16xf32>
    tpu.vector_store %arg5[%c8_39, %c16_40], %138 {strides = array<i32>} : memref<16x32xf32, #tpu.memory_space<vmem>>, vector<8x16xf32>,
    %c0_41 = arith.constant 0 : index
    %c0_42 = arith.constant 0 : index
    %140 = vector.load %arg5[%c0_41, %c0_42] : memref<16x32xf32, #tpu.memory_space<vmem>>, vector<16x32xf32>
    %cst_43 = arith.constant dense<0.000000e+00> : vector<16x32xf32>
    %141 = tpu.matmul %140, %51, %cst_43 {dimension_numbers = #tpu.dot_dimension_numbers<[1], [0], [0], [1], [0, 0, 1, 1], [], []>} : vector<16x32xf32>, vector<32x32xf32>, vector<16x32xf32> -> vector<16x32xf32>
    %142 = vector.broadcast %34 : vector<1x32xf32> to vector<16x32xf32>
    %143 = arith.addf %141, %142 : vector<16x32xf32>
    %144 = arith.addf %26, %143 : vector<16x32xf32>
    %cst_44 = arith.constant dense<0.000000e+00> : vector<16xf32>
    %145 = vector.multi_reduction <add>, %144, %cst_44 [1] : vector<16x32xf32> to vector<16xf32>
    %146 = vector.shape_cast %145 : vector<16xf32> to vector<16x1xf32>
    %cst_45 = arith.constant 3.200000e+01 : f32
    %147 = vector.broadcast %cst_45 : f32 to vector<16x1xf32>
    %148 = arith.divf %146, %147 : vector<16x1xf32>
    %149 = vector.broadcast %148 : vector<16x1xf32> to vector<16x32xf32>
    %150 = arith.subf %144, %149 : vector<16x32xf32>
    %151 = arith.mulf %150, %150 : vector<16x32xf32>
    %cst_46 = arith.constant dense<0.000000e+00> : vector<16xf32>
    %152 = vector.multi_reduction <add>, %151, %cst_46 [1] : vector<16x32xf32> to vector<16xf32>
    %153 = vector.shape_cast %152 : vector<16xf32> to vector<16x1xf32>
    %cst_47 = arith.constant 3.200000e+01 : f32
    %154 = vector.broadcast %cst_47 : f32 to vector<16x1xf32>
    %155 = arith.divf %153, %154 : vector<16x1xf32>
    %156 = vector.broadcast %148 : vector<16x1xf32> to vector<16x32xf32>
    %157 = arith.subf %144, %156 : vector<16x32xf32>
    %cst_48 = arith.constant 9.99999974E-6 : f32
    %158 = vector.broadcast %cst_48 : f32 to vector<16x1xf32>
    %159 = arith.addf %155, %158 : vector<16x1xf32>
    %160 = math.rsqrt %159 : vector<16x1xf32>
    %161 = vector.broadcast %160 : vector<16x1xf32> to vector<16x32xf32>
    %162 = arith.mulf %157, %161 : vector<16x32xf32>
    %163 = vector.broadcast %35 : vector<1x32xf32> to vector<16x32xf32>
    %164 = arith.mulf %162, %163 : vector<16x32xf32>
    %165 = vector.broadcast %36 : vector<1x32xf32> to vector<16x32xf32>
    %166 = arith.addf %164, %165 : vector<16x32xf32>
    %cst_49 = arith.constant dense<0.000000e+00> : vector<16x64xf32>
    %167 = tpu.matmul %166, %28, %cst_49 {dimension_numbers = #tpu.dot_dimension_numbers<[1], [0], [0], [1], [0, 0, 1, 1], [], []>} : vector<16x32xf32>, vector<32x64xf32>, vector<16x64xf32> -> vector<16x64xf32>
    %168 = vector.broadcast %39 : vector<1x64xf32> to vector<16x64xf32>
    %169 = arith.addf %167, %168 : vector<16x64xf32>
    %cst_50 = arith.constant 5.000000e-01 : f32
    %170 = vector.broadcast %cst_50 : f32 to vector<16x64xf32>
    %171 = arith.mulf %170, %169 : vector<16x64xf32>
    %cst_51 = arith.constant 4.471500e-02 : f32
    %172 = vector.broadcast %cst_51 : f32 to vector<16x64xf32>
    %173 = arith.mulf %172, %169 : vector<16x64xf32>
    %174 = arith.mulf %173, %169 : vector<16x64xf32>
    %175 = arith.mulf %174, %169 : vector<16x64xf32>
    %176 = arith.addf %169, %175 : vector<16x64xf32>
    %cst_52 = arith.constant 0.797884583 : f32
    %177 = vector.broadcast %cst_52 : f32 to vector<16x64xf32>
    %178 = arith.mulf %177, %176 : vector<16x64xf32>
    %179 = math.tanh %178 : vector<16x64xf32>
    %cst_53 = arith.constant 1.000000e+00 : f32
    %180 = vector.broadcast %cst_53 : f32 to vector<16x64xf32>
    %181 = arith.addf %180, %179 : vector<16x64xf32>
    %182 = arith.mulf %171, %181 : vector<16x64xf32>
    %cst_54 = arith.constant dense<0.000000e+00> : vector<16x32xf32>
    %183 = tpu.matmul %182, %29, %cst_54 {dimension_numbers = #tpu.dot_dimension_numbers<[1], [0], [0], [1], [0, 0, 1, 1], [], []>} : vector<16x64xf32>, vector<64x32xf32>, vector<16x32xf32> -> vector<16x32xf32>
    %184 = vector.broadcast %40 : vector<1x32xf32> to vector<16x32xf32>
    %185 = arith.addf %183, %184 : vector<16x32xf32>
    %186 = arith.addf %166, %185 : vector<16x32xf32>
    %cst_55 = arith.constant dense<0.000000e+00> : vector<16xf32>
    %187 = vector.multi_reduction <add>, %186, %cst_55 [1] : vector<16x32xf32> to vector<16xf32>
    %188 = vector.shape_cast %187 : vector<16xf32> to vector<16x1xf32>
    %cst_56 = arith.constant 3.200000e+01 : f32
    %189 = vector.broadcast %cst_56 : f32 to vector<16x1xf32>
    %190 = arith.divf %188, %189 : vector<16x1xf32>
    %191 = vector.broadcast %190 : vector<16x1xf32> to vector<16x32xf32>
    %192 = arith.subf %186, %191 : vector<16x32xf32>
    %193 = arith.mulf %192, %192 : vector<16x32xf32>
    %cst_57 = arith.constant dense<0.000000e+00> : vector<16xf32>
    %194 = vector.multi_reduction <add>, %193, %cst_57 [1] : vector<16x32xf32> to vector<16xf32>
    %195 = vector.shape_cast %194 : vector<16xf32> to vector<16x1xf32>
    %cst_58 = arith.constant 3.200000e+01 : f32
    %196 = vector.broadcast %cst_58 : f32 to vector<16x1xf32>
    %197 = arith.divf %195, %196 : vector<16x1xf32>
    %198 = vector.broadcast %190 : vector<16x1xf32> to vector<16x32xf32>
    %199 = arith.subf %186, %198 : vector<16x32xf32>
    %cst_59 = arith.constant 9.99999974E-6 : f32
    %200 = vector.broadcast %cst_59 : f32 to vector<16x1xf32>
    %201 = arith.addf %197, %200 : vector<16x1xf32>
    %202 = math.rsqrt %201 : vector<16x1xf32>
    %203 = vector.broadcast %202 : vector<16x1xf32> to vector<16x32xf32>
    %204 = arith.mulf %199, %203 : vector<16x32xf32>
    %205 = vector.broadcast %37 : vector<1x32xf32> to vector<16x32xf32>
    %206 = arith.mulf %204, %205 : vector<16x32xf32>
    %207 = vector.broadcast %38 : vector<1x32xf32> to vector<16x32xf32>
    %208 = arith.addf %206, %207 : vector<16x32xf32>
    %c176 = arith.constant 176 : index
    %c0_60 = arith.constant 0 : index
    %209 = vector.load %arg3[%c176, %c0_60] : memref<312x128xf32, #tpu.memory_space<vmem>>, vector<32x128xf32>
    %c208 = arith.constant 208 : index
    %c0_61 = arith.constant 0 : index
    %210 = vector.load %arg3[%c208, %c0_61] : memref<312x128xf32, #tpu.memory_space<vmem>>, vector<32x64xf32>
    %c240 = arith.constant 240 : index
    %c0_62 = arith.constant 0 : index
    %211 = vector.load %arg3[%c240, %c0_62] : memref<312x128xf32, #tpu.memory_space<vmem>>, vector<64x32xf32>
    %c304 = arith.constant 304 : index
    %c0_63 = arith.constant 0 : index
    %212 = vector.load %arg3[%c304, %c0_63] : memref<312x128xf32, #tpu.memory_space<vmem>>, vector<8x128xf32>
    %213 = vector.extract_strided_slice %212 {offsets = [0, 0], sizes = [1, 32], strides = [1, 1]} : vector<8x128xf32> to vector<1x32xf32>
    %214 = vector.extract_strided_slice %212 {offsets = [0, 32], sizes = [1, 32], strides = [1, 1]} : vector<8x128xf32> to vector<1x32xf32>
    %215 = vector.extract_strided_slice %212 {offsets = [0, 64], sizes = [1, 32], strides = [1, 1]} : vector<8x128xf32> to vector<1x32xf32>
    %216 = vector.extract_strided_slice %212 {offsets = [0, 96], sizes = [1, 32], strides = [1, 1]} : vector<8x128xf32> to vector<1x32xf32>
    %217 = vector.extract_strided_slice %212 {offsets = [1, 0], sizes = [1, 32], strides = [1, 1]} : vector<8x128xf32> to vector<1x32xf32>
    %218 = vector.extract_strided_slice %212 {offsets = [1, 32], sizes = [1, 32], strides = [1, 1]} : vector<8x128xf32> to vector<1x32xf32>
    %219 = vector.extract_strided_slice %212 {offsets = [1, 64], sizes = [1, 32], strides = [1, 1]} : vector<8x128xf32> to vector<1x32xf32>
    %220 = vector.extract_strided_slice %212 {offsets = [1, 96], sizes = [1, 32], strides = [1, 1]} : vector<8x128xf32> to vector<1x32xf32>
    %221 = vector.extract_strided_slice %212 {offsets = [2, 0], sizes = [1, 64], strides = [1, 1]} : vector<8x128xf32> to vector<1x64xf32>
    %222 = vector.extract_strided_slice %212 {offsets = [2, 64], sizes = [1, 32], strides = [1, 1]} : vector<8x128xf32> to vector<1x32xf32>
    %cst_64 = arith.constant dense<0.000000e+00> : vector<16x128xf32>
    %223 = tpu.matmul %208, %209, %cst_64 {dimension_numbers = #tpu.dot_dimension_numbers<[1], [0], [0], [1], [0, 0, 1, 1], [], []>} : vector<16x32xf32>, vector<32x128xf32>, vector<16x128xf32> -> vector<16x128xf32>
    %224 = vector.extract_strided_slice %223 {offsets = [0, 0], sizes = [16, 32], strides = [1, 1]} : vector<16x128xf32> to vector<16x32xf32>
    %225 = vector.broadcast %213 : vector<1x32xf32> to vector<16x32xf32>
    %226 = arith.addf %224, %225 : vector<16x32xf32>
    %227 = vector.extract_strided_slice %223 {offsets = [0, 32], sizes = [16, 32], strides = [1, 1]} : vector<16x128xf32> to vector<16x32xf32>
    %228 = vector.broadcast %214 : vector<1x32xf32> to vector<16x32xf32>
    %229 = arith.addf %227, %228 : vector<16x32xf32>
    %230 = vector.extract_strided_slice %223 {offsets = [0, 64], sizes = [16, 32], strides = [1, 1]} : vector<16x128xf32> to vector<16x32xf32>
    %231 = vector.broadcast %215 : vector<1x32xf32> to vector<16x32xf32>
    %232 = arith.addf %230, %231 : vector<16x32xf32>
    %233 = vector.extract_strided_slice %209 {offsets = [0, 96], sizes = [32, 32], strides = [1, 1]} : vector<32x128xf32> to vector<32x32xf32>
    %c0_65 = arith.constant 0 : index
    %c0_66 = arith.constant 0 : index
    %234 = vector.load %arg2[%c0_65, %c0_66] : memref<2x8xf32, #tpu.memory_space<vmem>>, vector<1x8xf32>
    %235 = vector.extract_strided_slice %226 {offsets = [0, 0], sizes = [8, 32], strides = [1, 1]} : vector<16x32xf32> to vector<8x32xf32>
    %236 = vector.extract_strided_slice %229 {offsets = [0, 0], sizes = [8, 32], strides = [1, 1]} : vector<16x32xf32> to vector<8x32xf32>
    %237 = vector.extract_strided_slice %232 {offsets = [0, 0], sizes = [8, 32], strides = [1, 1]} : vector<16x32xf32> to vector<8x32xf32>
    %238 = vector.extract_strided_slice %235 {offsets = [0, 0], sizes = [8, 16], strides = [1, 1]} : vector<8x32xf32> to vector<8x16xf32>
    %239 = vector.extract_strided_slice %236 {offsets = [0, 0], sizes = [8, 16], strides = [1, 1]} : vector<8x32xf32> to vector<8x16xf32>
    %240 = vector.extract_strided_slice %237 {offsets = [0, 0], sizes = [8, 16], strides = [1, 1]} : vector<8x32xf32> to vector<8x16xf32>
    %cst_67 = arith.constant dense<0.000000e+00> : vector<8x8xf32>
    %241 = tpu.matmul %238, %239, %cst_67 {dimension_numbers = #tpu.dot_dimension_numbers<[1], [1], [0], [0], [0, 0, 1, 0], [], []>} : vector<8x16xf32>, vector<8x16xf32>, vector<8x8xf32> -> vector<8x8xf32>
    %cst_68 = arith.constant 2.500000e-01 : f32
    %242 = vector.broadcast %cst_68 : f32 to vector<8x8xf32>
    %243 = arith.mulf %241, %242 : vector<8x8xf32>
    %244 = vector.broadcast %234 : vector<1x8xf32> to vector<8x8xf32>
    %245 = arith.addf %243, %244 : vector<8x8xf32>
    %cst_69 = arith.constant dense<0xFF800000> : vector<8xf32>
    %246 = vector.multi_reduction <maximumf>, %245, %cst_69 [1] : vector<8x8xf32> to vector<8xf32>
    %247 = vector.shape_cast %246 : vector<8xf32> to vector<8x1xf32>
    %248 = vector.broadcast %247 : vector<8x1xf32> to vector<8x8xf32>
    %249 = arith.subf %245, %248 : vector<8x8xf32>
    %250 = math.exp %249 : vector<8x8xf32>
    %cst_70 = arith.constant dense<0.000000e+00> : vector<8xf32>
    %251 = vector.multi_reduction <add>, %250, %cst_70 [1] : vector<8x8xf32> to vector<8xf32>
    %252 = vector.shape_cast %251 : vector<8xf32> to vector<8x1xf32>
    %253 = tpu.reciprocal %252 {approx = true} : vector<8x1xf32> -> vector<8x1xf32>
    %254 = vector.broadcast %253 : vector<8x1xf32> to vector<8x8xf32>
    %255 = arith.mulf %250, %254 : vector<8x8xf32>
    %cst_71 = arith.constant dense<0.000000e+00> : vector<8x16xf32>
    %256 = tpu.matmul %255, %240, %cst_71 {dimension_numbers = #tpu.dot_dimension_numbers<[1], [0], [0], [1], [0, 0, 1, 1], [], []>} : vector<8x8xf32>, vector<8x16xf32>, vector<8x16xf32> -> vector<8x16xf32>
    %c0_72 = arith.constant 0 : index
    %c0_73 = arith.constant 0 : index
    %257 = vector.load %arg5[%c0_72, %c0_73] : memref<16x32xf32, #tpu.memory_space<vmem>>, vector<8x16xf32>
    tpu.vector_store %arg5[%c0_72, %c0_73], %256 {strides = array<i32>} : memref<16x32xf32, #tpu.memory_space<vmem>>, vector<8x16xf32>,
    %258 = vector.extract_strided_slice %235 {offsets = [0, 16], sizes = [8, 16], strides = [1, 1]} : vector<8x32xf32> to vector<8x16xf32>
    %259 = vector.extract_strided_slice %236 {offsets = [0, 16], sizes = [8, 16], strides = [1, 1]} : vector<8x32xf32> to vector<8x16xf32>
    %260 = vector.extract_strided_slice %237 {offsets = [0, 16], sizes = [8, 16], strides = [1, 1]} : vector<8x32xf32> to vector<8x16xf32>
    %cst_74 = arith.constant dense<0.000000e+00> : vector<8x8xf32>
    %261 = tpu.matmul %258, %259, %cst_74 {dimension_numbers = #tpu.dot_dimension_numbers<[1], [1], [0], [0], [0, 0, 1, 0], [], []>} : vector<8x16xf32>, vector<8x16xf32>, vector<8x8xf32> -> vector<8x8xf32>
    %cst_75 = arith.constant 2.500000e-01 : f32
    %262 = vector.broadcast %cst_75 : f32 to vector<8x8xf32>
    %263 = arith.mulf %261, %262 : vector<8x8xf32>
    %264 = vector.broadcast %234 : vector<1x8xf32> to vector<8x8xf32>
    %265 = arith.addf %263, %264 : vector<8x8xf32>
    %cst_76 = arith.constant dense<0xFF800000> : vector<8xf32>
    %266 = vector.multi_reduction <maximumf>, %265, %cst_76 [1] : vector<8x8xf32> to vector<8xf32>
    %267 = vector.shape_cast %266 : vector<8xf32> to vector<8x1xf32>
    %268 = vector.broadcast %267 : vector<8x1xf32> to vector<8x8xf32>
    %269 = arith.subf %265, %268 : vector<8x8xf32>
    %270 = math.exp %269 : vector<8x8xf32>
    %cst_77 = arith.constant dense<0.000000e+00> : vector<8xf32>
    %271 = vector.multi_reduction <add>, %270, %cst_77 [1] : vector<8x8xf32> to vector<8xf32>
    %272 = vector.shape_cast %271 : vector<8xf32> to vector<8x1xf32>
    %273 = tpu.reciprocal %272 {approx = true} : vector<8x1xf32> -> vector<8x1xf32>
    %274 = vector.broadcast %273 : vector<8x1xf32> to vector<8x8xf32>
    %275 = arith.mulf %270, %274 : vector<8x8xf32>
    %cst_78 = arith.constant dense<0.000000e+00> : vector<8x16xf32>
    %276 = tpu.matmul %275, %260, %cst_78 {dimension_numbers = #tpu.dot_dimension_numbers<[1], [0], [0], [1], [0, 0, 1, 1], [], []>} : vector<8x8xf32>, vector<8x16xf32>, vector<8x16xf32> -> vector<8x16xf32>
    %c0_79 = arith.constant 0 : index
    %c16_80 = arith.constant 16 : index
    %277 = vector.load %arg5[%c0_79, %c16_80] : memref<16x32xf32, #tpu.memory_space<vmem>>, vector<8x16xf32>
    tpu.vector_store %arg5[%c0_79, %c16_80], %276 {strides = array<i32>} : memref<16x32xf32, #tpu.memory_space<vmem>>, vector<8x16xf32>,
    %c1_81 = arith.constant 1 : index
    %c0_82 = arith.constant 0 : index
    %278 = vector.load %arg2[%c1_81, %c0_82] : memref<2x8xf32, #tpu.memory_space<vmem>>, vector<1x8xf32>
    %279 = vector.extract_strided_slice %226 {offsets = [8, 0], sizes = [8, 32], strides = [1, 1]} : vector<16x32xf32> to vector<8x32xf32>
    %280 = vector.extract_strided_slice %229 {offsets = [8, 0], sizes = [8, 32], strides = [1, 1]} : vector<16x32xf32> to vector<8x32xf32>
    %281 = vector.extract_strided_slice %232 {offsets = [8, 0], sizes = [8, 32], strides = [1, 1]} : vector<16x32xf32> to vector<8x32xf32>
    %282 = vector.extract_strided_slice %279 {offsets = [0, 0], sizes = [8, 16], strides = [1, 1]} : vector<8x32xf32> to vector<8x16xf32>
    %283 = vector.extract_strided_slice %280 {offsets = [0, 0], sizes = [8, 16], strides = [1, 1]} : vector<8x32xf32> to vector<8x16xf32>
    %284 = vector.extract_strided_slice %281 {offsets = [0, 0], sizes = [8, 16], strides = [1, 1]} : vector<8x32xf32> to vector<8x16xf32>
    %cst_83 = arith.constant dense<0.000000e+00> : vector<8x8xf32>
    %285 = tpu.matmul %282, %283, %cst_83 {dimension_numbers = #tpu.dot_dimension_numbers<[1], [1], [0], [0], [0, 0, 1, 0], [], []>} : vector<8x16xf32>, vector<8x16xf32>, vector<8x8xf32> -> vector<8x8xf32>
    %cst_84 = arith.constant 2.500000e-01 : f32
    %286 = vector.broadcast %cst_84 : f32 to vector<8x8xf32>
    %287 = arith.mulf %285, %286 : vector<8x8xf32>
    %288 = vector.broadcast %278 : vector<1x8xf32> to vector<8x8xf32>
    %289 = arith.addf %287, %288 : vector<8x8xf32>
    %cst_85 = arith.constant dense<0xFF800000> : vector<8xf32>
    %290 = vector.multi_reduction <maximumf>, %289, %cst_85 [1] : vector<8x8xf32> to vector<8xf32>
    %291 = vector.shape_cast %290 : vector<8xf32> to vector<8x1xf32>
    %292 = vector.broadcast %291 : vector<8x1xf32> to vector<8x8xf32>
    %293 = arith.subf %289, %292 : vector<8x8xf32>
    %294 = math.exp %293 : vector<8x8xf32>
    %cst_86 = arith.constant dense<0.000000e+00> : vector<8xf32>
    %295 = vector.multi_reduction <add>, %294, %cst_86 [1] : vector<8x8xf32> to vector<8xf32>
    %296 = vector.shape_cast %295 : vector<8xf32> to vector<8x1xf32>
    %297 = tpu.reciprocal %296 {approx = true} : vector<8x1xf32> -> vector<8x1xf32>
    %298 = vector.broadcast %297 : vector<8x1xf32> to vector<8x8xf32>
    %299 = arith.mulf %294, %298 : vector<8x8xf32>
    %cst_87 = arith.constant dense<0.000000e+00> : vector<8x16xf32>
    %300 = tpu.matmul %299, %284, %cst_87 {dimension_numbers = #tpu.dot_dimension_numbers<[1], [0], [0], [1], [0, 0, 1, 1], [], []>} : vector<8x8xf32>, vector<8x16xf32>, vector<8x16xf32> -> vector<8x16xf32>
    %c8_88 = arith.constant 8 : index
    %c0_89 = arith.constant 0 : index
    %301 = vector.load %arg5[%c8_88, %c0_89] : memref<16x32xf32, #tpu.memory_space<vmem>>, vector<8x16xf32>
    tpu.vector_store %arg5[%c8_88, %c0_89], %300 {strides = array<i32>} : memref<16x32xf32, #tpu.memory_space<vmem>>, vector<8x16xf32>,
    %302 = vector.extract_strided_slice %279 {offsets = [0, 16], sizes = [8, 16], strides = [1, 1]} : vector<8x32xf32> to vector<8x16xf32>
    %303 = vector.extract_strided_slice %280 {offsets = [0, 16], sizes = [8, 16], strides = [1, 1]} : vector<8x32xf32> to vector<8x16xf32>
    %304 = vector.extract_strided_slice %281 {offsets = [0, 16], sizes = [8, 16], strides = [1, 1]} : vector<8x32xf32> to vector<8x16xf32>
    %cst_90 = arith.constant dense<0.000000e+00> : vector<8x8xf32>
    %305 = tpu.matmul %302, %303, %cst_90 {dimension_numbers = #tpu.dot_dimension_numbers<[1], [1], [0], [0], [0, 0, 1, 0], [], []>} : vector<8x16xf32>, vector<8x16xf32>, vector<8x8xf32> -> vector<8x8xf32>
    %cst_91 = arith.constant 2.500000e-01 : f32
    %306 = vector.broadcast %cst_91 : f32 to vector<8x8xf32>
    %307 = arith.mulf %305, %306 : vector<8x8xf32>
    %308 = vector.broadcast %278 : vector<1x8xf32> to vector<8x8xf32>
    %309 = arith.addf %307, %308 : vector<8x8xf32>
    %cst_92 = arith.constant dense<0xFF800000> : vector<8xf32>
    %310 = vector.multi_reduction <maximumf>, %309, %cst_92 [1] : vector<8x8xf32> to vector<8xf32>
    %311 = vector.shape_cast %310 : vector<8xf32> to vector<8x1xf32>
    %312 = vector.broadcast %311 : vector<8x1xf32> to vector<8x8xf32>
    %313 = arith.subf %309, %312 : vector<8x8xf32>
    %314 = math.exp %313 : vector<8x8xf32>
    %cst_93 = arith.constant dense<0.000000e+00> : vector<8xf32>
    %315 = vector.multi_reduction <add>, %314, %cst_93 [1] : vector<8x8xf32> to vector<8xf32>
    %316 = vector.shape_cast %315 : vector<8xf32> to vector<8x1xf32>
    %317 = tpu.reciprocal %316 {approx = true} : vector<8x1xf32> -> vector<8x1xf32>
    %318 = vector.broadcast %317 : vector<8x1xf32> to vector<8x8xf32>
    %319 = arith.mulf %314, %318 : vector<8x8xf32>
    %cst_94 = arith.constant dense<0.000000e+00> : vector<8x16xf32>
    %320 = tpu.matmul %319, %304, %cst_94 {dimension_numbers = #tpu.dot_dimension_numbers<[1], [0], [0], [1], [0, 0, 1, 1], [], []>} : vector<8x8xf32>, vector<8x16xf32>, vector<8x16xf32> -> vector<8x16xf32>
    %c8_95 = arith.constant 8 : index
    %c16_96 = arith.constant 16 : index
    %321 = vector.load %arg5[%c8_95, %c16_96] : memref<16x32xf32, #tpu.memory_space<vmem>>, vector<8x16xf32>
    tpu.vector_store %arg5[%c8_95, %c16_96], %320 {strides = array<i32>} : memref<16x32xf32, #tpu.memory_space<vmem>>, vector<8x16xf32>,
    %c0_97 = arith.constant 0 : index
    %c0_98 = arith.constant 0 : index
    %322 = vector.load %arg5[%c0_97, %c0_98] : memref<16x32xf32, #tpu.memory_space<vmem>>, vector<16x32xf32>
    %cst_99 = arith.constant dense<0.000000e+00> : vector<16x32xf32>
    %323 = tpu.matmul %322, %233, %cst_99 {dimension_numbers = #tpu.dot_dimension_numbers<[1], [0], [0], [1], [0, 0, 1, 1], [], []>} : vector<16x32xf32>, vector<32x32xf32>, vector<16x32xf32> -> vector<16x32xf32>
    %324 = vector.broadcast %216 : vector<1x32xf32> to vector<16x32xf32>
    %325 = arith.addf %323, %324 : vector<16x32xf32>
    %326 = arith.addf %208, %325 : vector<16x32xf32>
    %cst_100 = arith.constant dense<0.000000e+00> : vector<16xf32>
    %327 = vector.multi_reduction <add>, %326, %cst_100 [1] : vector<16x32xf32> to vector<16xf32>
    %328 = vector.shape_cast %327 : vector<16xf32> to vector<16x1xf32>
    %cst_101 = arith.constant 3.200000e+01 : f32
    %329 = vector.broadcast %cst_101 : f32 to vector<16x1xf32>
    %330 = arith.divf %328, %329 : vector<16x1xf32>
    %331 = vector.broadcast %330 : vector<16x1xf32> to vector<16x32xf32>
    %332 = arith.subf %326, %331 : vector<16x32xf32>
    %333 = arith.mulf %332, %332 : vector<16x32xf32>
    %cst_102 = arith.constant dense<0.000000e+00> : vector<16xf32>
    %334 = vector.multi_reduction <add>, %333, %cst_102 [1] : vector<16x32xf32> to vector<16xf32>
    %335 = vector.shape_cast %334 : vector<16xf32> to vector<16x1xf32>
    %cst_103 = arith.constant 3.200000e+01 : f32
    %336 = vector.broadcast %cst_103 : f32 to vector<16x1xf32>
    %337 = arith.divf %335, %336 : vector<16x1xf32>
    %338 = vector.broadcast %330 : vector<16x1xf32> to vector<16x32xf32>
    %339 = arith.subf %326, %338 : vector<16x32xf32>
    %cst_104 = arith.constant 9.99999974E-6 : f32
    %340 = vector.broadcast %cst_104 : f32 to vector<16x1xf32>
    %341 = arith.addf %337, %340 : vector<16x1xf32>
    %342 = math.rsqrt %341 : vector<16x1xf32>
    %343 = vector.broadcast %342 : vector<16x1xf32> to vector<16x32xf32>
    %344 = arith.mulf %339, %343 : vector<16x32xf32>
    %345 = vector.broadcast %217 : vector<1x32xf32> to vector<16x32xf32>
    %346 = arith.mulf %344, %345 : vector<16x32xf32>
    %347 = vector.broadcast %218 : vector<1x32xf32> to vector<16x32xf32>
    %348 = arith.addf %346, %347 : vector<16x32xf32>
    %cst_105 = arith.constant dense<0.000000e+00> : vector<16x64xf32>
    %349 = tpu.matmul %348, %210, %cst_105 {dimension_numbers = #tpu.dot_dimension_numbers<[1], [0], [0], [1], [0, 0, 1, 1], [], []>} : vector<16x32xf32>, vector<32x64xf32>, vector<16x64xf32> -> vector<16x64xf32>
    %350 = vector.broadcast %221 : vector<1x64xf32> to vector<16x64xf32>
    %351 = arith.addf %349, %350 : vector<16x64xf32>
    %cst_106 = arith.constant 5.000000e-01 : f32
    %352 = vector.broadcast %cst_106 : f32 to vector<16x64xf32>
    %353 = arith.mulf %352, %351 : vector<16x64xf32>
    %cst_107 = arith.constant 4.471500e-02 : f32
    %354 = vector.broadcast %cst_107 : f32 to vector<16x64xf32>
    %355 = arith.mulf %354, %351 : vector<16x64xf32>
    %356 = arith.mulf %355, %351 : vector<16x64xf32>
    %357 = arith.mulf %356, %351 : vector<16x64xf32>
    %358 = arith.addf %351, %357 : vector<16x64xf32>
    %cst_108 = arith.constant 0.797884583 : f32
    %359 = vector.broadcast %cst_108 : f32 to vector<16x64xf32>
    %360 = arith.mulf %359, %358 : vector<16x64xf32>
    %361 = math.tanh %360 : vector<16x64xf32>
    %cst_109 = arith.constant 1.000000e+00 : f32
    %362 = vector.broadcast %cst_109 : f32 to vector<16x64xf32>
    %363 = arith.addf %362, %361 : vector<16x64xf32>
    %364 = arith.mulf %353, %363 : vector<16x64xf32>
    %cst_110 = arith.constant dense<0.000000e+00> : vector<16x32xf32>
    %365 = tpu.matmul %364, %211, %cst_110 {dimension_numbers = #tpu.dot_dimension_numbers<[1], [0], [0], [1], [0, 0, 1, 1], [], []>} : vector<16x64xf32>, vector<64x32xf32>, vector<16x32xf32> -> vector<16x32xf32>
    %366 = vector.broadcast %222 : vector<1x32xf32> to vector<16x32xf32>
    %367 = arith.addf %365, %366 : vector<16x32xf32>
    %368 = arith.addf %348, %367 : vector<16x32xf32>
    %cst_111 = arith.constant dense<0.000000e+00> : vector<16xf32>
    %369 = vector.multi_reduction <add>, %368, %cst_111 [1] : vector<16x32xf32> to vector<16xf32>
    %370 = vector.shape_cast %369 : vector<16xf32> to vector<16x1xf32>
    %cst_112 = arith.constant 3.200000e+01 : f32
    %371 = vector.broadcast %cst_112 : f32 to vector<16x1xf32>
    %372 = arith.divf %370, %371 : vector<16x1xf32>
    %373 = vector.broadcast %372 : vector<16x1xf32> to vector<16x32xf32>
    %374 = arith.subf %368, %373 : vector<16x32xf32>
    %375 = arith.mulf %374, %374 : vector<16x32xf32>
    %cst_113 = arith.constant dense<0.000000e+00> : vector<16xf32>
    %376 = vector.multi_reduction <add>, %375, %cst_113 [1] : vector<16x32xf32> to vector<16xf32>
    %377 = vector.shape_cast %376 : vector<16xf32> to vector<16x1xf32>
    %cst_114 = arith.constant 3.200000e+01 : f32
    %378 = vector.broadcast %cst_114 : f32 to vector<16x1xf32>
    %379 = arith.divf %377, %378 : vector<16x1xf32>
    %380 = vector.broadcast %372 : vector<16x1xf32> to vector<16x32xf32>
    %381 = arith.subf %368, %380 : vector<16x32xf32>
    %cst_115 = arith.constant 9.99999974E-6 : f32
    %382 = vector.broadcast %cst_115 : f32 to vector<16x1xf32>
    %383 = arith.addf %379, %382 : vector<16x1xf32>
    %384 = math.rsqrt %383 : vector<16x1xf32>
    %385 = vector.broadcast %384 : vector<16x1xf32> to vector<16x32xf32>
    %386 = arith.mulf %381, %385 : vector<16x32xf32>
    %387 = vector.broadcast %219 : vector<1x32xf32> to vector<16x32xf32>
    %388 = arith.mulf %386, %387 : vector<16x32xf32>
    %389 = vector.broadcast %220 : vector<1x32xf32> to vector<16x32xf32>
    %390 = arith.addf %388, %389 : vector<16x32xf32>
    %c8_116 = arith.constant 8 : index
    %c0_117 = arith.constant 0 : index
    %391 = vector.load %arg3[%c8_116, %c0_117] : memref<312x128xf32, #tpu.memory_space<vmem>>, vector<32x128xf32>
    %392 = vector.extract_strided_slice %390 {offsets = [0, 0], sizes = [1, 32], strides = [1, 1]} : vector<16x32xf32> to vector<1x32xf32>
    %393 = vector.extract_strided_slice %390 {offsets = [8, 0], sizes = [1, 32], strides = [1, 1]} : vector<16x32xf32> to vector<1x32xf32>
    %cst_118 = arith.constant 0.000000e+00 : f32
    %394 = vector.broadcast %cst_118 : f32 to vector<6x32xf32>
    %395 = tpu.concatenate %392, %393, %394 in 0 : vector<1x32xf32>, vector<1x32xf32>, vector<6x32xf32> -> vector<8x32xf32>
    %cst_119 = arith.constant dense<0.000000e+00> : vector<8x128xf32>
    %396 = tpu.matmul %395, %391, %cst_119 {dimension_numbers = #tpu.dot_dimension_numbers<[1], [0], [0], [1], [0, 0, 1, 1], [], []>} : vector<8x32xf32>, vector<32x128xf32>, vector<8x128xf32> -> vector<8x128xf32>
    %397 = vector.broadcast %3 : vector<1x128xf32> to vector<8x128xf32>
    %398 = arith.addf %396, %397 : vector<8x128xf32>
    %c0_120 = arith.constant 0 : index
    %c0_121 = arith.constant 0 : index
    %399 = vector.load %arg4[%c0_120, %c0_121] : memref<8x128xf32, #tpu.memory_space<vmem>>, vector<8x128xf32>
    tpu.vector_store %arg4[%c0_120, %c0_121], %398 {strides = array<i32>} : memref<8x128xf32, #tpu.memory_space<vmem>>, vector<8x128xf32>,
    return
  }
  func.func @transform_0(%arg0: i32) -> (i32, i32) {
    %c0_i32 = arith.constant 0 : i32
    %c0_i32_0 = arith.constant 0 : i32
    %c0_i32_1 = arith.constant 0 : i32
    return %c0_i32, %c0_i32_0 : i32, i32
  }
  func.func @transform_1(%arg0: i32) -> (i32, i32) {
    %c0_i32 = arith.constant 0 : i32
    %c0_i32_0 = arith.constant 0 : i32
    %c0_i32_1 = arith.constant 0 : i32
    return %c0_i32, %c0_i32_0 : i32, i32
  }
  func.func @transform_2(%arg0: i32) -> (i32, i32) {
    %c0_i32 = arith.constant 0 : i32
    %c0_i32_0 = arith.constant 0 : i32
    %c0_i32_1 = arith.constant 0 : i32
    return %c0_i32, %c0_i32_0 : i32, i32
  }
  func.func @transform_3(%arg0: i32) -> (i32, i32) {
    %c0_i32 = arith.constant 0 : i32
    %c0_i32_0 = arith.constant 0 : i32
    %c0_i32_1 = arith.constant 0 : i32
    return %c0_i32, %c0_i32_0 : i32, i32
  }
}

</mosaic_0001>

<llo_original>
// kernel: tpu_custom_call.1
$region0: #{tpu_custom_call.1}
  #allocation0 [shape = 'u32[]', space=smem, size = 0x4, offset = 0x4, fixed_abs, tag = 'smem constant byte address 0x4 - core index']
  #allocation1 [shape = 'u32[144,128]{1,0:T(1,128)}', space=vmem, size = 0x12000, scoped, tag = 'internal scratch']
  #allocation2 [shape = 'f32[16,32]{1,0:T(8,128)}', space=vmem, size = 0x2000, scoped, tag = 'scratch operand']
  %s0 = inlined_call_operand.hbm [shape: f32[16,32], index: 0, kind: input, shape index: {}]
  %s1 = inlined_call_operand.hbm [shape: f32[2,8], index: 1, kind: input, shape index: {}]
  %s2 = inlined_call_operand.hbm [shape: f32[312,128], index: 2, kind: input, shape index: {}]
  %s3 = inlined_call_operand.hbm [shape: f32[8,128], index: 3, kind: output, shape index: {}]
  %s4 = sld [smem:[#allocation0]]
  $region34: #{tpu_custom_call.1} parent=0
    _
  %s6 = ssub.s32 1, %s4
  %s7 = scalar_select 0, %s6, %s4
  $region1: #{tpu_custom_call.1} parent=0
    #allocation3 [shape = 'u8[8192]{0}', space=vmem, size = 0x2000, scoped, tag = 'input window, operand 0, single buffered']
    #allocation4 [shape = 's32[1]{0}', space=sflag, size = 0x4, scoped, tag = 'scoped memory for tpu_custom_call.1']
    #allocation5 [shape = 's32[1]{0}', space=sflag, size = 0x4, scoped, tag = 'scoped memory for tpu_custom_call.1']
    #allocation6 [shape = 'u8[1024]{0}', space=vmem, size = 0x400, scoped, tag = 'input window, operand 1, single buffered']
    #allocation7 [shape = 's32[1]{0}', space=sflag, size = 0x4, scoped, tag = 'scoped memory for tpu_custom_call.1']
    #allocation8 [shape = 'u8[159744]{0}', space=vmem, size = 0x27000, scoped, tag = 'input window, operand 2, single buffered']
    #allocation9 [shape = 'u8[4096]{0}', space=vmem, size = 0x1000, scoped, tag = 'output window, operand 0, single buffered']
    %8 = vsyncpa [#allocation4], 0
    %9 = vsyncpa [#allocation7], 0
    %10 = vsyncpa [#allocation5], 0
    // Predicated region
    $region2: #{tpu_custom_call.1} parent=1 // pred_check
      _
    $region3: #{tpu_custom_call.1} parent=1 // pred_check_branch
      %12 = sbr.rel (0) target = $region5
    $region4: #{tpu_custom_call.1} parent=1 // pred_region
      %s14 = ssub.s32 256, 256
      %15 = vsyncadd [#allocation4], %s14
      %s16 = sshll.u32 [#allocation3], 4
      %s17 = int_to_ptr.vmem [resolvable:$true] %s16
      %22 = dma.hbm_to_vmem [thread:$0]  %s0, 256, %s17, [#allocation4], 128, 128, 8
    $region5: #{tpu_custom_call.1} parent=1 // pred_fallthru
      _
    // Predicated region
    $region6: #{tpu_custom_call.1} parent=1 // pred_check
      _
    $region7: #{tpu_custom_call.1} parent=1 // pred_check_branch
      %24 = sbr.rel (0) target = $region9
    $region8: #{tpu_custom_call.1} parent=1 // pred_region
      %s26 = ssub.s32 32, 32
      %27 = vsyncadd [#allocation7], %s26
      %s29 = sshll.u32 [#allocation6], 4
      %s30 = int_to_ptr.vmem [resolvable:$true] %s29
      %32 = dma.hbm_to_vmem [thread:$0]  %s1, 32, %s30, [#allocation7]
    $region9: #{tpu_custom_call.1} parent=1 // pred_fallthru
      _
    // Predicated region
    $region10: #{tpu_custom_call.1} parent=1 // pred_check
      _
    $region11: #{tpu_custom_call.1} parent=1 // pred_check_branch
      %34 = sbr.rel (0) target = $region13
    $region12: #{tpu_custom_call.1} parent=1 // pred_region
      %s36 = ssub.s32 4992, 4992
      %37 = vsyncadd [#allocation7], %s36
      %s38 = sshll.u32 [#allocation8], 4
      %s39 = int_to_ptr.vmem [resolvable:$true] %s38
      %44 = dma.hbm_to_vmem [thread:$0]  %s2, 4992, %s39, [#allocation7], 128, 128, 8
    $region13: #{tpu_custom_call.1} parent=1 // pred_fallthru
      _
    // Predicated region
    $region14: #{tpu_custom_call.1} parent=1 // pred_check
      _
    $region15: #{tpu_custom_call.1} parent=1 // pred_check_branch
      %46 = sbr.rel (0) target = $region17
    $region16: #{tpu_custom_call.1} parent=1 // pred_region
      %47 = dma.done [#allocation4], 256
    $region17: #{tpu_custom_call.1} parent=1 // pred_fallthru
      _
    // Predicated region
    $region18: #{tpu_custom_call.1} parent=1 // pred_check
      _
    $region19: #{tpu_custom_call.1} parent=1 // pred_check_branch
      %49 = sbr.rel (0) target = $region21
    $region20: #{tpu_custom_call.1} parent=1 // pred_region
      %50 = dma.done [#allocation7], 32
    $region21: #{tpu_custom_call.1} parent=1 // pred_fallthru
      _
    // Predicated region
    $region22: #{tpu_custom_call.1} parent=1 // pred_check
      _
    $region23: #{tpu_custom_call.1} parent=1 // pred_check_branch
      %52 = sbr.rel (0) target = $region25
    $region24: #{tpu_custom_call.1} parent=1 // pred_region
      %53 = dma.done [#allocation7], 4992
    $region25: #{tpu_custom_call.1} parent=1 // pred_fallthru
      _
    %v54 = vld [vmem:[#allocation8] sm:$0xff]
    %v55 = vld [vmem:[#allocation3] sm:$0xff]
    %v56 = vld [vmem:[#allocation3 + $0x8] sm:$0xff]
    %vm57 = vcmask 261120
    %v58 = vsel %vm57, %v55, 0.0
    %59 = vadd.xlane.f32.xlu0 %v58
    %v60 = vpop.xlane.xlu0 %59
    %v61 = vsel %vm57, %v56, 0.0
    %62 = vadd.xlane.f32.xlu0 %v61
    %v63 = vpop.xlane.xlu0 %62
    %v64 = vrcp.pop 32.0
    %v65 = vmul.f32 %v60, %v64
    %v66 = vmul.f32 %v63, %v64
    %v67 = vsub.f32 %v55, %v65
    %v68 = vsub.f32 %v56, %v66
    %v69 = vmul.f32 %v67, %v67
    %v70 = vmul.f32 %v68, %v68
    %v71 = vsel %vm57, %v69, 0.0
    %72 = vadd.xlane.f32.xlu0 %v71
    %v73 = vpop.xlane.xlu0 %72
    %v74 = vsel %vm57, %v70, 0.0
    %75 = vadd.xlane.f32.xlu0 %v74
    %v76 = vpop.xlane.xlu0 %75
    %v77 = vmul.f32 %v73, %v64
    %v78 = vmul.f32 %v76, %v64
    %v79 = vadd.f32 %v77, 1e-05
    %v80 = vadd.f32 %v78, 1e-05
    %v81 = vrsqrt.pop %v79
    %v82 = vrsqrt.pop %v80
    %v83 = vmul.f32 %v67, %v81
    %v84 = vmul.f32 %v68, %v82
    %v85 = vlaneseq
    %v86 = vshrl.u32 %v85, 7
    %v87 = vsub.s32 0, %v86
    %v88 = vrot.slane %v54, %v87
    %v89 = vmul.f32 %v83, %v88
    %v90 = vmul.f32 %v84, %v88
    %92 = vrot.lane.b32.xlu0 %v88, 96
    %v93 = vpop.permute.xlu0 %92
    %v95 = vadd.f32 %v89, %v93
    %v96 = vadd.f32 %v90, %v93
    %v97 = vld [vmem:[#allocation8 + $0x28] sm:$0xff]
    %v98 = vld [vmem:[#allocation8 + $0x30] sm:$0xff]
    %v99 = vld [vmem:[#allocation8 + $0x38] sm:$0xff]
    %v100 = vld [vmem:[#allocation8 + $0x40] sm:$0xff]
    %v101 = vld [vmem:[#allocation8 + $0x48] sm:$0xff]
    %v102 = vld [vmem:[#allocation8 + $0x50] sm:$0xff]
    %v103 = vld [vmem:[#allocation8 + $0x58] sm:$0xff]
    %v104 = vld [vmem:[#allocation8 + $0x60] sm:$0xff]
    %v105 = vld [vmem:[#allocation8 + $0x68] sm:$0xff]
    %v106 = vld [vmem:[#allocation8 + $0x70] sm:$0xff]
    %v107 = vld [vmem:[#allocation8 + $0x78] sm:$0xff]
    %v108 = vld [vmem:[#allocation8 + $0x80] sm:$0xff]
    %v109 = vld [vmem:[#allocation8 + $0x88] sm:$0xff]
    %v110 = vld [vmem:[#allocation8 + $0x90] sm:$0xff]
    %v111 = vld [vmem:[#allocation8 + $0x98] sm:$0xff]
    %v112 = vld [vmem:[#allocation8 + $0xa0] sm:$0xff]
    %v113 = vld [vmem:[#allocation8 + $0xa8] sm:$0xff]
    %v115 = vsel %vm57, %v95, 0
    %v118 = vsel %vm57, %v96, 0
    %120 = vmatprep.subr.mxu0 0.0
    %121 = vmatpush1.msra.mxu0 0.0
    %122 = vmatprep.subr.mxu0 0.0
    %123 = vmatpush1.msra.mxu0 0.0
    %124 = vmatprep.subr.mxu0 0.0
    %125 = vmatpush1.msra.mxu0 0.0
    %126 = vmatprep.subr.mxu0 0.0
    %127 = vmatpush1.msra.mxu0 0.0
    %128 = vmatprep.subr.mxu0 0.0
    %129 = vmatpush1.msra.mxu0 0.0
    %130 = vmatprep.subr.mxu0 0.0
    %131 = vmatpush1.msra.mxu0 0.0
    %132 = vmatprep.subr.mxu0 0.0
    %133 = vmatpush1.msra.mxu0 0.0
    %134 = vmatprep.subr.mxu0 0.0
    %135 = vmatpush1.msra.mxu0 0.0
    %136 = vmatprep.subr.mxu0 0.0
    %137 = vmatpush1.msra.mxu0 0.0
    %138 = vmatprep.subr.mxu0 0.0
    %139 = vmatpush1.msra.mxu0 0.0
    %140 = vmatprep.subr.mxu0 0.0
    %141 = vmatpush1.msra.mxu0 0.0
    %142 = vmatprep.subr.mxu0 0.0
    %143 = vmatpush1.msra.mxu0 0.0
    %144 = vmatprep.subr.mxu0 0.0
    %145 = vmatpush1.msra.mxu0 %v100
    %146 = vmatprep.subr.mxu0 0.0
    %147 = vmatpush1.msra.mxu0 %v99
    %148 = vmatprep.subr.mxu0 0.0
    %149 = vmatpush1.msra.mxu0 %v98
    %150 = vmatprep.subr.mxu0 0.0
    %151 = vmatpush1.msra.mxu0 %v97
    %152 = vmatprep.subr.mxu0 0.0
    %153 = vmatpush2.msra.mxu0 0.0
    %154 = vmatprep.subr.mxu0 0.0
    %155 = vmatpush2.msra.mxu0 0.0
    %156 = vmatprep.subr.mxu0 0.0
    %157 = vmatpush2.msra.mxu0 0.0
    %158 = vmatprep.subr.mxu0 0.0
    %159 = vmatpush2.msra.mxu0 0.0
    %160 = vmatprep.subr.mxu0 0.0
    %161 = vmatpush2.msra.mxu0 0.0
    %162 = vmatprep.subr.mxu0 0.0
    %163 = vmatpush2.msra.mxu0 0.0
    %164 = vmatprep.subr.mxu0 0.0
    %165 = vmatpush2.msra.mxu0 0.0
    %166 = vmatprep.subr.mxu0 0.0
    %167 = vmatpush2.msra.mxu0 0.0
    %168 = vmatprep.subr.mxu0 0.0
    %169 = vmatpush2.msra.mxu0 0.0
    %170 = vmatprep.subr.mxu0 0.0
    %171 = vmatpush2.msra.mxu0 0.0
    %172 = vmatprep.subr.mxu0 0.0
    %173 = vmatpush2.msra.mxu0 0.0
    %174 = vmatprep.subr.mxu0 0.0
    %175 = vmatpush2.msra.mxu0 0.0
    %176 = vmatprep.subr.mxu0 0.0
    %177 = vmatpush2.msra.mxu0 0.0
    %178 = vmatprep.subr.mxu0 0.0
    %179 = vmatpush2.msra.mxu0 0.0
    %180 = vmatprep.subr.mxu0 0.0
    %181 = vmatpush2.msra.mxu0 0.0
    %182 = vmatprep.subr.mxu0 0.0
    %183 = vmatpush2.msra.mxu0 0.0
    %184 = vmatprep.mubr.f32.mxu0 0.0
    %185 = vmatmul.mubr.f32.gmra.mxu0 %v115
    %v186 = vpop.f32.mrf.mxu0
    %v187 = vadd.f32 0.0, %v186
    %v188 = vpop.f32.mrf.mxu0
    %189 = vmatprep.mubr.f32.mxu0 0.0
    %190 = vmatmul.mubr.f32.gmra.mxu0 %v118
    %v191 = vpop.f32.mrf.mxu0
    %v192 = vadd.f32 0.0, %v191
    %v193 = vpop.f32.mrf.mxu0
    %194 = vdwg.mxu0
    %v195 = vlaneseq
    %v196 = vshrl.u32 %v195, 7
    %v197 = vsub.s32 0, %v196
    %v198 = vrot.slane %v113, %v197
    %v199 = vadd.f32 %v187, %v198
    %v200 = vadd.f32 %v192, %v198
    %v201 = vld [vmem:[#allocation6] sm:$0x1]
    %203 = vrot.lane.b32.xlu0 %v199, 96
    %v204 = vpop.permute.xlu0 %203
    %vm205 = vcmask 130048
    %v206 = vsel %vm205, %v199, 0
    %v208 = vsel %vm205, %v204, 0
    %210 = vmatprep.subr.mxu0 0.0
    %211 = vmatpush1.xpose.msra.mxu0 0.0
    %212 = vmatprep.subr.mxu0 0.0
    %213 = vmatpush1.xpose.msra.mxu0 0.0
    %214 = vmatprep.subr.mxu0 0.0
    %215 = vmatpush1.xpose.msra.mxu0 0.0
    %216 = vmatprep.subr.mxu0 0.0
    %217 = vmatpush1.xpose.msra.mxu0 0.0
    %218 = vmatprep.subr.mxu0 0.0
    %219 = vmatpush1.xpose.msra.mxu0 0.0
    %220 = vmatprep.subr.mxu0 0.0
    %221 = vmatpush1.xpose.msra.mxu0 0.0
    %222 = vmatprep.subr.mxu0 0.0
    %223 = vmatpush1.xpose.msra.mxu0 0.0
    %224 = vmatprep.subr.mxu0 0.0
    %225 = vmatpush1.xpose.msra.mxu0 0.0
    %226 = vmatprep.subr.mxu0 0.0
    %227 = vmatpush1.xpose.msra.mxu0 0.0
    %228 = vmatprep.subr.mxu0 0.0
    %229 = vmatpush1.xpose.msra.mxu0 0.0
    %230 = vmatprep.subr.mxu0 0.0
    %231 = vmatpush1.xpose.msra.mxu0 0.0
    %232 = vmatprep.subr.mxu0 0.0
    %233 = vmatpush1.xpose.msra.mxu0 0.0
    %234 = vmatprep.subr.mxu0 0.0
    %235 = vmatpush1.xpose.msra.mxu0 0.0
    %236 = vmatprep.subr.mxu0 0.0
    %237 = vmatpush1.xpose.msra.mxu0 0.0
    %238 = vmatprep.subr.mxu0 0.0
    %239 = vmatpush1.xpose.msra.mxu0 0.0
    %240 = vmatprep.subr.mxu0 0.0
    %241 = vmatpush1.xpose.msra.mxu0 %v208
    %242 = vmatprep.subr.mxu0 0.0
    %243 = vmatpush2.xpose.msra.mxu0 0.0
    %244 = vmatprep.subr.mxu0 0.0
    %245 = vmatpush2.xpose.msra.mxu0 0.0
    %246 = vmatprep.subr.mxu0 0.0
    %247 = vmatpush2.xpose.msra.mxu0 0.0
    %248 = vmatprep.subr.mxu0 0.0
    %249 = vmatpush2.xpose.msra.mxu0 0.0
    %250 = vmatprep.subr.mxu0 0.0
    %251 = vmatpush2.xpose.msra.mxu0 0.0
    %252 = vmatprep.subr.mxu0 0.0
    %253 = vmatpush2.xpose.msra.mxu0 0.0
    %254 = vmatprep.subr.mxu0 0.0
    %255 = vmatpush2.xpose.msra.mxu0 0.0
    %256 = vmatprep.subr.mxu0 0.0
    %257 = vmatpush2.xpose.msra.mxu0 0.0
    %258 = vmatprep.subr.mxu0 0.0
    %259 = vmatpush2.xpose.msra.mxu0 0.0
    %260 = vmatprep.subr.mxu0 0.0
    %261 = vmatpush2.xpose.msra.mxu0 0.0
    %262 = vmatprep.subr.mxu0 0.0
    %263 = vmatpush2.xpose.msra.mxu0 0.0
    %264 = vmatprep.subr.mxu0 0.0
    %265 = vmatpush2.xpose.msra.mxu0 0.0
    %266 = vmatprep.subr.mxu0 0.0
    %267 = vmatpush2.xpose.msra.mxu0 0.0
    %268 = vmatprep.subr.mxu0 0.0
    %269 = vmatpush2.xpose.msra.mxu0 0.0
    %270 = vmatprep.subr.mxu0 0.0
    %271 = vmatpush2.xpose.msra.mxu0 0.0
    %272 = vmatprep.subr.mxu0 0.0
    %273 = vmatpush2.xpose.msra.mxu0 0.0
    %274 = vmatprep.mubr.f32.mxu0 0.0
    %275 = vmatmul.mubr.f32.gmra.mxu0 %v206
    %v276 = vpop.f32.mrf.mxu0
    %v277 = vadd.f32 0.0, %v276
    %v278 = vpop.f32.mrf.mxu0
    %279 = vdwg.mxu0
    %v280 = vmul.f32 %v277, 0.25
    %v281 = vlaneseq
    %v282 = vshrl.u32 %v281, 7
    %v283 = vsub.s32 0, %v282
    %v284 = vrot.slane %v201, %v283
    %v285 = vadd.f32 %v280, %v284
    %vm286 = vcmask 64512
    %v287 = vsel %vm286, %v285, -inf
    %288 = vmax.xlane.f32.xlu0 %v287
    %v289 = vpop.xlane.xlu0 %288
    %v290 = vsub.f32 %v285, %v289
    %v291 = vmul.f32 %v290, 1.442695
    %v292 = vpow.pop %v291
    %v293 = vsel %vm286, %v292, 0.0
    %294 = vadd.xlane.f32.xlu0 %v293
    %v295 = vpop.xlane.xlu0 %294
    %v296 = vrcp.pop %v295
    %v297 = vmul.f32 %v292, %v296
    %298 = vrot.lane.b32.xlu0 %v199, 64
    %v299 = vpop.permute.xlu0 %298
    %v302 = vsel %vm286, %v297, 0
    %304 = vmatprep.subr.mxu0 0.0
    %305 = vmatpush1.msra.mxu0 0.0
    %306 = vmatprep.subr.mxu0 0.0
    %307 = vmatpush1.msra.mxu0 0.0
    %308 = vmatprep.subr.mxu0 0.0
    %309 = vmatpush1.msra.mxu0 0.0
    %310 = vmatprep.subr.mxu0 0.0
    %311 = vmatpush1.msra.mxu0 0.0
    %312 = vmatprep.subr.mxu0 0.0
    %313 = vmatpush1.msra.mxu0 0.0
    %314 = vmatprep.subr.mxu0 0.0
    %315 = vmatpush1.msra.mxu0 0.0
    %316 = vmatprep.subr.mxu0 0.0
    %317 = vmatpush1.msra.mxu0 0.0
    %318 = vmatprep.subr.mxu0 0.0
    %319 = vmatpush1.msra.mxu0 0.0
    %320 = vmatprep.subr.mxu0 0.0
    %321 = vmatpush1.msra.mxu0 0.0
    %322 = vmatprep.subr.mxu0 0.0
    %323 = vmatpush1.msra.mxu0 0.0
    %324 = vmatprep.subr.mxu0 0.0
    %325 = vmatpush1.msra.mxu0 0.0
    %326 = vmatprep.subr.mxu0 0.0
    %327 = vmatpush1.msra.mxu0 0.0
    %328 = vmatprep.subr.mxu0 0.0
    %329 = vmatpush1.msra.mxu0 0.0
    %330 = vmatprep.subr.mxu0 0.0
    %331 = vmatpush1.msra.mxu0 0.0
    %332 = vmatprep.subr.mxu0 0.0
    %333 = vmatpush1.msra.mxu0 0.0
    %334 = vmatprep.subr.mxu0 0.0
    %335 = vmatpush1.msra.mxu0 %v299
    %336 = vmatprep.subr.mxu0 0.0
    %337 = vmatpush2.msra.mxu0 0.0
    %338 = vmatprep.subr.mxu0 0.0
    %339 = vmatpush2.msra.mxu0 0.0
    %340 = vmatprep.subr.mxu0 0.0
    %341 = vmatpush2.msra.mxu0 0.0
    %342 = vmatprep.subr.mxu0 0.0
    %343 = vmatpush2.msra.mxu0 0.0
    %344 = vmatprep.subr.mxu0 0.0
    %345 = vmatpush2.msra.mxu0 0.0
    %346 = vmatprep.subr.mxu0 0.0
    %347 = vmatpush2.msra.mxu0 0.0
    %348 = vmatprep.subr.mxu0 0.0
    %349 = vmatpush2.msra.mxu0 0.0
    %350 = vmatprep.subr.mxu0 0.0
    %351 = vmatpush2.msra.mxu0 0.0
    %352 = vmatprep.subr.mxu0 0.0
    %353 = vmatpush2.msra.mxu0 0.0
    %354 = vmatprep.subr.mxu0 0.0
    %355 = vmatpush2.msra.mxu0 0.0
    %356 = vmatprep.subr.mxu0 0.0
    %357 = vmatpush2.msra.mxu0 0.0
    %358 = vmatprep.subr.mxu0 0.0
    %359 = vmatpush2.msra.mxu0 0.0
    %360 = vmatprep.subr.mxu0 0.0
    %361 = vmatpush2.msra.mxu0 0.0
    %362 = vmatprep.subr.mxu0 0.0
    %363 = vmatpush2.msra.mxu0 0.0
    %364 = vmatprep.subr.mxu0 0.0
    %365 = vmatpush2.msra.mxu0 0.0
    %366 = vmatprep.subr.mxu0 0.0
    %367 = vmatpush2.msra.mxu0 0.0
    %368 = vmatprep.mubr.f32.mxu0 0.0
    %369 = vmatmul.mubr.f32.gmra.mxu0 %v302
    %v370 = vpop.f32.mrf.mxu0
    %v371 = vadd.f32 0.0, %v370
    %v372 = vpop.f32.mrf.mxu0
    %373 = vdwg.mxu0
    %374 = vst.msk [vmem:[#allocation2] sm:$0xff] %vm205, %v371
    %375 = vrot.lane.b32.xlu0 %v199, 112
    %v376 = vpop.permute.xlu0 %375
    %377 = vrot.lane.b32.xlu0 %v199, 80
    %v378 = vpop.permute.xlu0 %377
    %v379 = vsel %vm205, %v376, 0
    %v381 = vsel %vm205, %v378, 0
    %383 = vmatprep.subr.mxu0 0.0
    %384 = vmatpush1.xpose.msra.mxu0 0.0
    %385 = vmatprep.subr.mxu0 0.0
    %386 = vmatpush1.xpose.msra.mxu0 0.0
    %387 = vmatprep.subr.mxu0 0.0
    %388 = vmatpush1.xpose.msra.mxu0 0.0
    %389 = vmatprep.subr.mxu0 0.0
    %390 = vmatpush1.xpose.msra.mxu0 0.0
    %391 = vmatprep.subr.mxu0 0.0
    %392 = vmatpush1.xpose.msra.mxu0 0.0
    %393 = vmatprep.subr.mxu0 0.0
    %394 = vmatpush1.xpose.msra.mxu0 0.0
    %395 = vmatprep.subr.mxu0 0.0
    %396 = vmatpush1.xpose.msra.mxu0 0.0
    %397 = vmatprep.subr.mxu0 0.0
    %398 = vmatpush1.xpose.msra.mxu0 0.0
    %399 = vmatprep.subr.mxu0 0.0
    %400 = vmatpush1.xpose.msra.mxu0 0.0
    %401 = vmatprep.subr.mxu0 0.0
    %402 = vmatpush1.xpose.msra.mxu0 0.0
    %403 = vmatprep.subr.mxu0 0.0
    %404 = vmatpush1.xpose.msra.mxu0 0.0
    %405 = vmatprep.subr.mxu0 0.0
    %406 = vmatpush1.xpose.msra.mxu0 0.0
    %407 = vmatprep.subr.mxu0 0.0
    %408 = vmatpush1.xpose.msra.mxu0 0.0
    %409 = vmatprep.subr.mxu0 0.0
    %410 = vmatpush1.xpose.msra.mxu0 0.0
    %411 = vmatprep.subr.mxu0 0.0
    %412 = vmatpush1.xpose.msra.mxu0 0.0
    %413 = vmatprep.subr.mxu0 0.0
    %414 = vmatpush1.xpose.msra.mxu0 %v381
    %415 = vmatprep.subr.mxu0 0.0
    %416 = vmatpush2.xpose.msra.mxu0 0.0
    %417 = vmatprep.subr.mxu0 0.0
    %418 = vmatpush2.xpose.msra.mxu0 0.0
    %419 = vmatprep.subr.mxu0 0.0
    %420 = vmatpush2.xpose.msra.mxu0 0.0
    %421 = vmatprep.subr.mxu0 0.0
    %422 = vmatpush2.xpose.msra.mxu0 0.0
    %423 = vmatprep.subr.mxu0 0.0
    %424 = vmatpush2.xpose.msra.mxu0 0.0
    %425 = vmatprep.subr.mxu0 0.0
    %426 = vmatpush2.xpose.msra.mxu0 0.0
    %427 = vmatprep.subr.mxu0 0.0
    %428 = vmatpush2.xpose.msra.mxu0 0.0
    %429 = vmatprep.subr.mxu0 0.0
    %430 = vmatpush2.xpose.msra.mxu0 0.0
    %431 = vmatprep.subr.mxu0 0.0
    %432 = vmatpush2.xpose.msra.mxu0 0.0
    %433 = vmatprep.subr.mxu0 0.0
    %434 = vmatpush2.xpose.msra.mxu0 0.0
    %435 = vmatprep.subr.mxu0 0.0
    %436 = vmatpush2.xpose.msra.mxu0 0.0
    %437 = vmatprep.subr.mxu0 0.0
    %438 = vmatpush2.xpose.msra.mxu0 0.0
    %439 = vmatprep.subr.mxu0 0.0
    %440 = vmatpush2.xpose.msra.mxu0 0.0
    %441 = vmatprep.subr.mxu0 0.0
    %442 = vmatpush2.xpose.msra.mxu0 0.0
    %443 = vmatprep.subr.mxu0 0.0
    %444 = vmatpush2.xpose.msra.mxu0 0.0
    %445 = vmatprep.subr.mxu0 0.0
    %446 = vmatpush2.xpose.msra.mxu0 0.0
    %447 = vmatprep.mubr.f32.mxu0 0.0
    %448 = vmatmul.mubr.f32.gmra.mxu0 %v379
    %v449 = vpop.f32.mrf.mxu0
    %v450 = vadd.f32 0.0, %v449
    %v451 = vpop.f32.mrf.mxu0
    %452 = vdwg.mxu0
    %v453 = vmul.f32 %v450, 0.25
    %v454 = vadd.f32 %v453, %v284
    %v455 = vsel %vm286, %v454, -inf
    %456 = vmax.xlane.f32.xlu0 %v455
    %v457 = vpop.xlane.xlu0 %456
    %v458 = vsub.f32 %v454, %v457
    %v459 = vmul.f32 %v458, 1.442695
    %v460 = vpow.pop %v459
    %v461 = vsel %vm286, %v460, 0.0
    %462 = vadd.xlane.f32.xlu0 %v461
    %v463 = vpop.xlane.xlu0 %462
    %v464 = vrcp.pop %v463
    %v465 = vmul.f32 %v460, %v464
    %466 = vrot.lane.b32.xlu0 %v199, 48
    %v467 = vpop.permute.xlu0 %466
    %v470 = vsel %vm286, %v465, 0
    %472 = vmatprep.subr.mxu0 0.0
    %473 = vmatpush1.msra.mxu0 0.0
    %474 = vmatprep.subr.mxu0 0.0
    %475 = vmatpush1.msra.mxu0 0.0
    %476 = vmatprep.subr.mxu0 0.0
    %477 = vmatpush1.msra.mxu0 0.0
    %478 = vmatprep.subr.mxu0 0.0
    %479 = vmatpush1.msra.mxu0 0.0
    %480 = vmatprep.subr.mxu0 0.0
    %481 = vmatpush1.msra.mxu0 0.0
    %482 = vmatprep.subr.mxu0 0.0
    %483 = vmatpush1.msra.mxu0 0.0
    %484 = vmatprep.subr.mxu0 0.0
    %485 = vmatpush1.msra.mxu0 0.0
    %486 = vmatprep.subr.mxu0 0.0
    %487 = vmatpush1.msra.mxu0 0.0
    %488 = vmatprep.subr.mxu0 0.0
    %489 = vmatpush1.msra.mxu0 0.0
    %490 = vmatprep.subr.mxu0 0.0
    %491 = vmatpush1.msra.mxu0 0.0
    %492 = vmatprep.subr.mxu0 0.0
    %493 = vmatpush1.msra.mxu0 0.0
    %494 = vmatprep.subr.mxu0 0.0
    %495 = vmatpush1.msra.mxu0 0.0
    %496 = vmatprep.subr.mxu0 0.0
    %497 = vmatpush1.msra.mxu0 0.0
    %498 = vmatprep.subr.mxu0 0.0
    %499 = vmatpush1.msra.mxu0 0.0
    %500 = vmatprep.subr.mxu0 0.0
    %501 = vmatpush1.msra.mxu0 0.0
    %502 = vmatprep.subr.mxu0 0.0
    %503 = vmatpush1.msra.mxu0 %v467
    %504 = vmatprep.subr.mxu0 0.0
    %505 = vmatpush2.msra.mxu0 0.0
    %506 = vmatprep.subr.mxu0 0.0
    %507 = vmatpush2.msra.mxu0 0.0
    %508 = vmatprep.subr.mxu0 0.0
    %509 = vmatpush2.msra.mxu0 0.0
    %510 = vmatprep.subr.mxu0 0.0
    %511 = vmatpush2.msra.mxu0 0.0
    %512 = vmatprep.subr.mxu0 0.0
    %513 = vmatpush2.msra.mxu0 0.0
    %514 = vmatprep.subr.mxu0 0.0
    %515 = vmatpush2.msra.mxu0 0.0
    %516 = vmatprep.subr.mxu0 0.0
    %517 = vmatpush2.msra.mxu0 0.0
    %518 = vmatprep.subr.mxu0 0.0
    %519 = vmatpush2.msra.mxu0 0.0
    %520 = vmatprep.subr.mxu0 0.0
    %521 = vmatpush2.msra.mxu0 0.0
    %522 = vmatprep.subr.mxu0 0.0
    %523 = vmatpush2.msra.mxu0 0.0
    %524 = vmatprep.subr.mxu0 0.0
    %525 = vmatpush2.msra.mxu0 0.0
    %526 = vmatprep.subr.mxu0 0.0
    %527 = vmatpush2.msra.mxu0 0.0
    %528 = vmatprep.subr.mxu0 0.0
    %529 = vmatpush2.msra.mxu0 0.0
    %530 = vmatprep.subr.mxu0 0.0
    %531 = vmatpush2.msra.mxu0 0.0
    %532 = vmatprep.subr.mxu0 0.0
    %533 = vmatpush2.msra.mxu0 0.0
    %534 = vmatprep.subr.mxu0 0.0
    %535 = vmatpush2.msra.mxu0 0.0
    %536 = vmatprep.mubr.f32.mxu0 0.0
    %537 = vmatmul.mubr.f32.gmra.mxu0 %v470
    %v538 = vpop.f32.mrf.mxu0
    %v539 = vadd.f32 0.0, %v538
    %v540 = vpop.f32.mrf.mxu0
    %541 = vdwg.mxu0
    %543 = vrot.lane.b32.xlu0 %v539, 16
    %v544 = vpop.permute.xlu0 %543
    %vm546 = vcmask 261248
    %547 = vst.msk [vmem:[#allocation2] sm:$0xff] %vm546, %v544
    %v548 = vld [vmem:[#allocation6 + $0x1] sm:$0x1]
    %550 = vrot.lane.b32.xlu0 %v200, 96
    %v551 = vpop.permute.xlu0 %550
    %v552 = vsel %vm205, %v200, 0
    %v554 = vsel %vm205, %v551, 0
    %556 = vmatprep.subr.mxu0 0.0
    %557 = vmatpush1.xpose.msra.mxu0 0.0
    %558 = vmatprep.subr.mxu0 0.0
    %559 = vmatpush1.xpose.msra.mxu0 0.0
    %560 = vmatprep.subr.mxu0 0.0
    %561 = vmatpush1.xpose.msra.mxu0 0.0
    %562 = vmatprep.subr.mxu0 0.0
    %563 = vmatpush1.xpose.msra.mxu0 0.0
    %564 = vmatprep.subr.mxu0 0.0
    %565 = vmatpush1.xpose.msra.mxu0 0.0
    %566 = vmatprep.subr.mxu0 0.0
    %567 = vmatpush1.xpose.msra.mxu0 0.0
    %568 = vmatprep.subr.mxu0 0.0
    %569 = vmatpush1.xpose.msra.mxu0 0.0
    %570 = vmatprep.subr.mxu0 0.0
    %571 = vmatpush1.xpose.msra.mxu0 0.0
    %572 = vmatprep.subr.mxu0 0.0
    %573 = vmatpush1.xpose.msra.mxu0 0.0
    %574 = vmatprep.subr.mxu0 0.0
    %575 = vmatpush1.xpose.msra.mxu0 0.0
    %576 = vmatprep.subr.mxu0 0.0
    %577 = vmatpush1.xpose.msra.mxu0 0.0
    %578 = vmatprep.subr.mxu0 0.0
    %579 = vmatpush1.xpose.msra.mxu0 0.0
    %580 = vmatprep.subr.mxu0 0.0
    %581 = vmatpush1.xpose.msra.mxu0 0.0
    %582 = vmatprep.subr.mxu0 0.0
    %583 = vmatpush1.xpose.msra.mxu0 0.0
    %584 = vmatprep.subr.mxu0 0.0
    %585 = vmatpush1.xpose.msra.mxu0 0.0
    %586 = vmatprep.subr.mxu0 0.0
    %587 = vmatpush1.xpose.msra.mxu0 %v554
    %588 = vmatprep.subr.mxu0 0.0
    %589 = vmatpush2.xpose.msra.mxu0 0.0
    %590 = vmatprep.subr.mxu0 0.0
    %591 = vmatpush2.xpose.msra.mxu0 0.0
    %592 = vmatprep.subr.mxu0 0.0
    %593 = vmatpush2.xpose.msra.mxu0 0.0
    %594 = vmatprep.subr.mxu0 0.0
    %595 = vmatpush2.xpose.msra.mxu0 0.0
    %596 = vmatprep.subr.mxu0 0.0
    %597 = vmatpush2.xpose.msra.mxu0 0.0
    %598 = vmatprep.subr.mxu0 0.0
    %599 = vmatpush2.xpose.msra.mxu0 0.0
    %600 = vmatprep.subr.mxu0 0.0
    %601 = vmatpush2.xpose.msra.mxu0 0.0
    %602 = vmatprep.subr.mxu0 0.0
    %603 = vmatpush2.xpose.msra.mxu0 0.0
    %604 = vmatprep.subr.mxu0 0.0
    %605 = vmatpush2.xpose.msra.mxu0 0.0
    %606 = vmatprep.subr.mxu0 0.0
    %607 = vmatpush2.xpose.msra.mxu0 0.0
    %608 = vmatprep.subr.mxu0 0.0
    %609 = vmatpush2.xpose.msra.mxu0 0.0
    %610 = vmatprep.subr.mxu0 0.0
    %611 = vmatpush2.xpose.msra.mxu0 0.0
    %612 = vmatprep.subr.mxu0 0.0
    %613 = vmatpush2.xpose.msra.mxu0 0.0
    %614 = vmatprep.subr.mxu0 0.0
    %615 = vmatpush2.xpose.msra.mxu0 0.0
    %616 = vmatprep.subr.mxu0 0.0
    %617 = vmatpush2.xpose.msra.mxu0 0.0
    %618 = vmatprep.subr.mxu0 0.0
    %619 = vmatpush2.xpose.msra.mxu0 0.0
    %620 = vmatprep.mubr.f32.mxu0 0.0
    %621 = vmatmul.mubr.f32.gmra.mxu0 %v552
    %v622 = vpop.f32.mrf.mxu0
    %v623 = vadd.f32 0.0, %v622
    %v624 = vpop.f32.mrf.mxu0
    %625 = vdwg.mxu0
    %v626 = vmul.f32 %v623, 0.25
    %v627 = vlaneseq
    %v628 = vshrl.u32 %v627, 7
    %v629 = vsub.s32 0, %v628
    %v630 = vrot.slane %v548, %v629
    %v631 = vadd.f32 %v626, %v630
    %v632 = vsel %vm286, %v631, -inf
    %633 = vmax.xlane.f32.xlu0 %v632
    %v634 = vpop.xlane.xlu0 %633
    %v635 = vsub.f32 %v631, %v634
    %v636 = vmul.f32 %v635, 1.442695
    %v637 = vpow.pop %v636
    %v638 = vsel %vm286, %v637, 0.0
    %639 = vadd.xlane.f32.xlu0 %v638
    %v640 = vpop.xlane.xlu0 %639
    %v641 = vrcp.pop %v640
    %v642 = vmul.f32 %v637, %v641
    %643 = vrot.lane.b32.xlu0 %v200, 64
    %v644 = vpop.permute.xlu0 %643
    %v647 = vsel %vm286, %v642, 0
    %649 = vmatprep.subr.mxu0 0.0
    %650 = vmatpush1.msra.mxu0 0.0
    %651 = vmatprep.subr.mxu0 0.0
    %652 = vmatpush1.msra.mxu0 0.0
    %653 = vmatprep.subr.mxu0 0.0
    %654 = vmatpush1.msra.mxu0 0.0
    %655 = vmatprep.subr.mxu0 0.0
    %656 = vmatpush1.msra.mxu0 0.0
    %657 = vmatprep.subr.mxu0 0.0
    %658 = vmatpush1.msra.mxu0 0.0
    %659 = vmatprep.subr.mxu0 0.0
    %660 = vmatpush1.msra.mxu0 0.0
    %661 = vmatprep.subr.mxu0 0.0
    %662 = vmatpush1.msra.mxu0 0.0
    %663 = vmatprep.subr.mxu0 0.0
    %664 = vmatpush1.msra.mxu0 0.0
    %665 = vmatprep.subr.mxu0 0.0
    %666 = vmatpush1.msra.mxu0 0.0
    %667 = vmatprep.subr.mxu0 0.0
    %668 = vmatpush1.msra.mxu0 0.0
    %669 = vmatprep.subr.mxu0 0.0
    %670 = vmatpush1.msra.mxu0 0.0
    %671 = vmatprep.subr.mxu0 0.0
    %672 = vmatpush1.msra.mxu0 0.0
    %673 = vmatprep.subr.mxu0 0.0
    %674 = vmatpush1.msra.mxu0 0.0
    %675 = vmatprep.subr.mxu0 0.0
    %676 = vmatpush1.msra.mxu0 0.0
    %677 = vmatprep.subr.mxu0 0.0
    %678 = vmatpush1.msra.mxu0 0.0
    %679 = vmatprep.subr.mxu0 0.0
    %680 = vmatpush1.msra.mxu0 %v644
    %681 = vmatprep.subr.mxu0 0.0
    %682 = vmatpush2.msra.mxu0 0.0
    %683 = vmatprep.subr.mxu0 0.0
    %684 = vmatpush2.msra.mxu0 0.0
    %685 = vmatprep.subr.mxu0 0.0
    %686 = vmatpush2.msra.mxu0 0.0
    %687 = vmatprep.subr.mxu0 0.0
    %688 = vmatpush2.msra.mxu0 0.0
    %689 = vmatprep.subr.mxu0 0.0
    %690 = vmatpush2.msra.mxu0 0.0
    %691 = vmatprep.subr.mxu0 0.0
    %692 = vmatpush2.msra.mxu0 0.0
    %693 = vmatprep.subr.mxu0 0.0
    %694 = vmatpush2.msra.mxu0 0.0
    %695 = vmatprep.subr.mxu0 0.0
    %696 = vmatpush2.msra.mxu0 0.0
    %697 = vmatprep.subr.mxu0 0.0
    %698 = vmatpush2.msra.mxu0 0.0
    %699 = vmatprep.subr.mxu0 0.0
    %700 = vmatpush2.msra.mxu0 0.0
    %701 = vmatprep.subr.mxu0 0.0
    %702 = vmatpush2.msra.mxu0 0.0
    %703 = vmatprep.subr.mxu0 0.0
    %704 = vmatpush2.msra.mxu0 0.0
    %705 = vmatprep.subr.mxu0 0.0
    %706 = vmatpush2.msra.mxu0 0.0
    %707 = vmatprep.subr.mxu0 0.0
    %708 = vmatpush2.msra.mxu0 0.0
    %709 = vmatprep.subr.mxu0 0.0
    %710 = vmatpush2.msra.mxu0 0.0
    %711 = vmatprep.subr.mxu0 0.0
    %712 = vmatpush2.msra.mxu0 0.0
    %713 = vmatprep.mubr.f32.mxu0 0.0
    %714 = vmatmul.mubr.f32.gmra.mxu0 %v647
    %v715 = vpop.f32.mrf.mxu0
    %v716 = vadd.f32 0.0, %v715
    %v717 = vpop.f32.mrf.mxu0
    %718 = vdwg.mxu0
    %719 = vst.msk [vmem:[#allocation2 + $0x8] sm:$0xff] %vm205, %v716
    %720 = vrot.lane.b32.xlu0 %v200, 112
    %v721 = vpop.permute.xlu0 %720
    %722 = vrot.lane.b32.xlu0 %v200, 80
    %v723 = vpop.permute.xlu0 %722
    %v724 = vsel %vm205, %v721, 0
    %v726 = vsel %vm205, %v723, 0
    %728 = vmatprep.subr.mxu0 0.0
    %729 = vmatpush1.xpose.msra.mxu0 0.0
    %730 = vmatprep.subr.mxu0 0.0
    %731 = vmatpush1.xpose.msra.mxu0 0.0
    %732 = vmatprep.subr.mxu0 0.0
    %733 = vmatpush1.xpose.msra.mxu0 0.0
    %734 = vmatprep.subr.mxu0 0.0
    %735 = vmatpush1.xpose.msra.mxu0 0.0
    %736 = vmatprep.subr.mxu0 0.0
    %737 = vmatpush1.xpose.msra.mxu0 0.0
    %738 = vmatprep.subr.mxu0 0.0
    %739 = vmatpush1.xpose.msra.mxu0 0.0
    %740 = vmatprep.subr.mxu0 0.0
    %741 = vmatpush1.xpose.msra.mxu0 0.0
    %742 = vmatprep.subr.mxu0 0.0
    %743 = vmatpush1.xpose.msra.mxu0 0.0
    %744 = vmatprep.subr.mxu0 0.0
    %745 = vmatpush1.xpose.msra.mxu0 0.0
    %746 = vmatprep.subr.mxu0 0.0
    %747 = vmatpush1.xpose.msra.mxu0 0.0
    %748 = vmatprep.subr.mxu0 0.0
    %749 = vmatpush1.xpose.msra.mxu0 0.0
    %750 = vmatprep.subr.mxu0 0.0
    %751 = vmatpush1.xpose.msra.mxu0 0.0
    %752 = vmatprep.subr.mxu0 0.0
    %753 = vmatpush1.xpose.msra.mxu0 0.0
    %754 = vmatprep.subr.mxu0 0.0
    %755 = vmatpush1.xpose.msra.mxu0 0.0
    %756 = vmatprep.subr.mxu0 0.0
    %757 = vmatpush1.xpose.msra.mxu0 0.0
    %758 = vmatprep.subr.mxu0 0.0
    %759 = vmatpush1.xpose.msra.mxu0 %v726
    %760 = vmatprep.subr.mxu0 0.0
    %761 = vmatpush2.xpose.msra.mxu0 0.0
    %762 = vmatprep.subr.mxu0 0.0
    %763 = vmatpush2.xpose.msra.mxu0 0.0
    %764 = vmatprep.subr.mxu0 0.0
    %765 = vmatpush2.xpose.msra.mxu0 0.0
    %766 = vmatprep.subr.mxu0 0.0
    %767 = vmatpush2.xpose.msra.mxu0 0.0
    %768 = vmatprep.subr.mxu0 0.0
    %769 = vmatpush2.xpose.msra.mxu0 0.0
    %770 = vmatprep.subr.mxu0 0.0
    %771 = vmatpush2.xpose.msra.mxu0 0.0
    %772 = vmatprep.subr.mxu0 0.0
    %773 = vmatpush2.xpose.msra.mxu0 0.0
    %774 = vmatprep.subr.mxu0 0.0
    %775 = vmatpush2.xpose.msra.mxu0 0.0
    %776 = vmatprep.subr.mxu0 0.0
    %777 = vmatpush2.xpose.msra.mxu0 0.0
    %778 = vmatprep.subr.mxu0 0.0
    %779 = vmatpush2.xpose.msra.mxu0 0.0
    %780 = vmatprep.subr.mxu0 0.0
    %781 = vmatpush2.xpose.msra.mxu0 0.0
    %782 = vmatprep.subr.mxu0 0.0
    %783 = vmatpush2.xpose.msra.mxu0 0.0
    %784 = vmatprep.subr.mxu0 0.0
    %785 = vmatpush2.xpose.msra.mxu0 0.0
    %786 = vmatprep.subr.mxu0 0.0
    %787 = vmatpush2.xpose.msra.mxu0 0.0
    %788 = vmatprep.subr.mxu0 0.0
    %789 = vmatpush2.xpose.msra.mxu0 0.0
    %790 = vmatprep.subr.mxu0 0.0
    %791 = vmatpush2.xpose.msra.mxu0 0.0
    %792 = vmatprep.mubr.f32.mxu0 0.0
    %793 = vmatmul.mubr.f32.gmra.mxu0 %v724
    %v794 = vpop.f32.mrf.mxu0
    %v795 = vadd.f32 0.0, %v794
    %v796 = vpop.f32.mrf.mxu0
    %797 = vdwg.mxu0
    %v798 = vmul.f32 %v795, 0.25
    %v799 = vadd.f32 %v798, %v630
    %v800 = vsel %vm286, %v799, -inf
    %801 = vmax.xlane.f32.xlu0 %v800
    %v802 = vpop.xlane.xlu0 %801
    %v803 = vsub.f32 %v799, %v802
    %v804 = vmul.f32 %v803, 1.442695
    %v805 = vpow.pop %v804
    %v806 = vsel %vm286, %v805, 0.0
    %807 = vadd.xlane.f32.xlu0 %v806
    %v808 = vpop.xlane.xlu0 %807
    %v809 = vrcp.pop %v808
    %v810 = vmul.f32 %v805, %v809
    %811 = vrot.lane.b32.xlu0 %v200, 48
    %v812 = vpop.permute.xlu0 %811
    %v815 = vsel %vm286, %v810, 0
    %817 = vmatprep.subr.mxu0 0.0
    %818 = vmatpush1.msra.mxu0 0.0
    %819 = vmatprep.subr.mxu0 0.0
    %820 = vmatpush1.msra.mxu0 0.0
    %821 = vmatprep.subr.mxu0 0.0
    %822 = vmatpush1.msra.mxu0 0.0
    %823 = vmatprep.subr.mxu0 0.0
    %824 = vmatpush1.msra.mxu0 0.0
    %825 = vmatprep.subr.mxu0 0.0
    %826 = vmatpush1.msra.mxu0 0.0
    %827 = vmatprep.subr.mxu0 0.0
    %828 = vmatpush1.msra.mxu0 0.0
    %829 = vmatprep.subr.mxu0 0.0
    %830 = vmatpush1.msra.mxu0 0.0
    %831 = vmatprep.subr.mxu0 0.0
    %832 = vmatpush1.msra.mxu0 0.0
    %833 = vmatprep.subr.mxu0 0.0
    %834 = vmatpush1.msra.mxu0 0.0
    %835 = vmatprep.subr.mxu0 0.0
    %836 = vmatpush1.msra.mxu0 0.0
    %837 = vmatprep.subr.mxu0 0.0
    %838 = vmatpush1.msra.mxu0 0.0
    %839 = vmatprep.subr.mxu0 0.0
    %840 = vmatpush1.msra.mxu0 0.0
    %841 = vmatprep.subr.mxu0 0.0
    %842 = vmatpush1.msra.mxu0 0.0
    %843 = vmatprep.subr.mxu0 0.0
    %844 = vmatpush1.msra.mxu0 0.0
    %845 = vmatprep.subr.mxu0 0.0
    %846 = vmatpush1.msra.mxu0 0.0
    %847 = vmatprep.subr.mxu0 0.0
    %848 = vmatpush1.msra.mxu0 %v812
    %849 = vmatprep.subr.mxu0 0.0
    %850 = vmatpush2.msra.mxu0 0.0
    %851 = vmatprep.subr.mxu0 0.0
    %852 = vmatpush2.msra.mxu0 0.0
    %853 = vmatprep.subr.mxu0 0.0
    %854 = vmatpush2.msra.mxu0 0.0
    %855 = vmatprep.subr.mxu0 0.0
    %856 = vmatpush2.msra.mxu0 0.0
    %857 = vmatprep.subr.mxu0 0.0
    %858 = vmatpush2.msra.mxu0 0.0
    %859 = vmatprep.subr.mxu0 0.0
    %860 = vmatpush2.msra.mxu0 0.0
    %861 = vmatprep.subr.mxu0 0.0
    %862 = vmatpush2.msra.mxu0 0.0
    %863 = vmatprep.subr.mxu0 0.0
    %864 = vmatpush2.msra.mxu0 0.0
    %865 = vmatprep.subr.mxu0 0.0
    %866 = vmatpush2.msra.mxu0 0.0
    %867 = vmatprep.subr.mxu0 0.0
    %868 = vmatpush2.msra.mxu0 0.0
    %869 = vmatprep.subr.mxu0 0.0
    %870 = vmatpush2.msra.mxu0 0.0
    %871 = vmatprep.subr.mxu0 0.0
    %872 = vmatpush2.msra.mxu0 0.0
    %873 = vmatprep.subr.mxu0 0.0
    %874 = vmatpush2.msra.mxu0 0.0
    %875 = vmatprep.subr.mxu0 0.0
    %876 = vmatpush2.msra.mxu0 0.0
    %877 = vmatprep.subr.mxu0 0.0
    %878 = vmatpush2.msra.mxu0 0.0
    %879 = vmatprep.subr.mxu0 0.0
    %880 = vmatpush2.msra.mxu0 0.0
    %881 = vmatprep.mubr.f32.mxu0 0.0
    %882 = vmatmul.mubr.f32.gmra.mxu0 %v815
    %v883 = vpop.f32.mrf.mxu0
    %v884 = vadd.f32 0.0, %v883
    %v885 = vpop.f32.mrf.mxu0
    %886 = vdwg.mxu0
    %888 = vrot.lane.b32.xlu0 %v884, 16
    %v889 = vpop.permute.xlu0 %888
    %891 = vst.msk [vmem:[#allocation2 + $0x8] sm:$0xff] %vm546, %v889
    %v892 = vld [vmem:[#allocation2] sm:$0xff]
    %v893 = vld [vmem:[#allocation2 + $0x8] sm:$0xff]
    %898 = vrot.lane.b32.xlu0 %v97, 32
    %v899 = vpop.permute.xlu0 %898
    %900 = vrot.lane.b32.xlu0 %v98, 32
    %v901 = vpop.permute.xlu0 %900
    %902 = vrot.lane.b32.xlu0 %v99, 32
    %v903 = vpop.permute.xlu0 %902
    %904 = vrot.lane.b32.xlu0 %v100, 32
    %v905 = vpop.permute.xlu0 %904
    %911 = vrot.lane.b32.xlu0 %v198, 32
    %v912 = vpop.permute.xlu0 %911
    %v915 = vsel %vm57, %v892, 0
    %v918 = vsel %vm57, %v893, 0
    %920 = vmatprep.subr.mxu0 0.0
    %921 = vmatpush1.msra.mxu0 0.0
    %922 = vmatprep.subr.mxu0 0.0
    %923 = vmatpush1.msra.mxu0 0.0
    %924 = vmatprep.subr.mxu0 0.0
    %925 = vmatpush1.msra.mxu0 0.0
    %926 = vmatprep.subr.mxu0 0.0
    %927 = vmatpush1.msra.mxu0 0.0
    %928 = vmatprep.subr.mxu0 0.0
    %929 = vmatpush1.msra.mxu0 0.0
    %930 = vmatprep.subr.mxu0 0.0
    %931 = vmatpush1.msra.mxu0 0.0
    %932 = vmatprep.subr.mxu0 0.0
    %933 = vmatpush1.msra.mxu0 0.0
    %934 = vmatprep.subr.mxu0 0.0
    %935 = vmatpush1.msra.mxu0 0.0
    %936 = vmatprep.subr.mxu0 0.0
    %937 = vmatpush1.msra.mxu0 0.0
    %938 = vmatprep.subr.mxu0 0.0
    %939 = vmatpush1.msra.mxu0 0.0
    %940 = vmatprep.subr.mxu0 0.0
    %941 = vmatpush1.msra.mxu0 0.0
    %942 = vmatprep.subr.mxu0 0.0
    %943 = vmatpush1.msra.mxu0 0.0
    %944 = vmatprep.subr.mxu0 0.0
    %945 = vmatpush1.msra.mxu0 %v905
    %946 = vmatprep.subr.mxu0 0.0
    %947 = vmatpush1.msra.mxu0 %v903
    %948 = vmatprep.subr.mxu0 0.0
    %949 = vmatpush1.msra.mxu0 %v901
    %950 = vmatprep.subr.mxu0 0.0
    %951 = vmatpush1.msra.mxu0 %v899
    %952 = vmatprep.subr.mxu0 0.0
    %953 = vmatpush2.msra.mxu0 0.0
    %954 = vmatprep.subr.mxu0 0.0
    %955 = vmatpush2.msra.mxu0 0.0
    %956 = vmatprep.subr.mxu0 0.0
    %957 = vmatpush2.msra.mxu0 0.0
    %958 = vmatprep.subr.mxu0 0.0
    %959 = vmatpush2.msra.mxu0 0.0
    %960 = vmatprep.subr.mxu0 0.0
    %961 = vmatpush2.msra.mxu0 0.0
    %962 = vmatprep.subr.mxu0 0.0
    %963 = vmatpush2.msra.mxu0 0.0
    %964 = vmatprep.subr.mxu0 0.0
    %965 = vmatpush2.msra.mxu0 0.0
    %966 = vmatprep.subr.mxu0 0.0
    %967 = vmatpush2.msra.mxu0 0.0
    %968 = vmatprep.subr.mxu0 0.0
    %969 = vmatpush2.msra.mxu0 0.0
    %970 = vmatprep.subr.mxu0 0.0
    %971 = vmatpush2.msra.mxu0 0.0
    %972 = vmatprep.subr.mxu0 0.0
    %973 = vmatpush2.msra.mxu0 0.0
    %974 = vmatprep.subr.mxu0 0.0
    %975 = vmatpush2.msra.mxu0 0.0
    %976 = vmatprep.subr.mxu0 0.0
    %977 = vmatpush2.msra.mxu0 0.0
    %978 = vmatprep.subr.mxu0 0.0
    %979 = vmatpush2.msra.mxu0 0.0
    %980 = vmatprep.subr.mxu0 0.0
    %981 = vmatpush2.msra.mxu0 0.0
    %982 = vmatprep.subr.mxu0 0.0
    %983 = vmatpush2.msra.mxu0 0.0
    %984 = vmatprep.mubr.f32.mxu0 0.0
    %985 = vmatmul.mubr.f32.gmra.mxu0 %v915
    %v986 = vpop.f32.mrf.mxu0
    %v987 = vadd.f32 %v912, %v986
    %v988 = vpop.f32.mrf.mxu0
    %989 = vmatprep.mubr.f32.mxu0 0.0
    %990 = vmatmul.mubr.f32.gmra.mxu0 %v918
    %v991 = vpop.f32.mrf.mxu0
    %v992 = vadd.f32 %v912, %v991
    %v993 = vpop.f32.mrf.mxu0
    %994 = vdwg.mxu0
    %v995 = vadd.f32 %v95, %v987
    %v996 = vadd.f32 %v96, %v992
    %v997 = vsel %vm57, %v995, 0.0
    %998 = vadd.xlane.f32.xlu0 %v997
    %v999 = vpop.xlane.xlu0 %998
    %v1000 = vsel %vm57, %v996, 0.0
    %1001 = vadd.xlane.f32.xlu0 %v1000
    %v1002 = vpop.xlane.xlu0 %1001
    %v1003 = vmul.f32 %v999, %v64
    %v1004 = vmul.f32 %v1002, %v64
    %v1005 = vsub.f32 %v995, %v1003
    %v1006 = vsub.f32 %v996, %v1004
    %v1007 = vmul.f32 %v1005, %v1005
    %v1008 = vmul.f32 %v1006, %v1006
    %v1009 = vsel %vm57, %v1007, 0.0
    %1010 = vadd.xlane.f32.xlu0 %v1009
    %v1011 = vpop.xlane.xlu0 %1010
    %v1012 = vsel %vm57, %v1008, 0.0
    %1013 = vadd.xlane.f32.xlu0 %v1012
    %v1014 = vpop.xlane.xlu0 %1013
    %v1015 = vmul.f32 %v1011, %v64
    %v1016 = vmul.f32 %v1014, %v64
    %v1017 = vadd.f32 %v1015, 1e-05
    %v1018 = vadd.f32 %v1016, 1e-05
    %v1019 = vrsqrt.pop %v1017
    %v1020 = vrsqrt.pop %v1018
    %v1021 = vmul.f32 %v1005, %v1019
    %v1022 = vmul.f32 %v1006, %v1020
    %v1023 = vlaneseq
    %v1024 = vshrl.u32 %v1023, 7
    %v1025 = vsub.s32 1, %v1024
    %v1026 = vrot.slane %v113, %v1025
    %v1027 = vmul.f32 %v1021, %v1026
    %v1028 = vmul.f32 %v1022, %v1026
    %1030 = vrot.lane.b32.xlu0 %v1026, 96
    %v1031 = vpop.permute.xlu0 %1030
    %v1033 = vadd.f32 %v1027, %v1031
    %v1034 = vadd.f32 %v1028, %v1031
    %v1035 = vlaneseq
    %v1036 = vshrl.u32 %v1035, 7
    %v1037 = vsub.s32 2, %v1036
    %v1038 = vrot.slane %v113, %v1037
    %v1040 = vsel %vm57, %v1033, 0
    %v1043 = vsel %vm57, %v1034, 0
    %1045 = vmatprep.subr.mxu0 0.0
    %1046 = vmatpush1.msra.mxu0 0.0
    %1047 = vmatprep.subr.mxu0 0.0
    %1048 = vmatpush1.msra.mxu0 0.0
    %1049 = vmatprep.subr.mxu0 0.0
    %1050 = vmatpush1.msra.mxu0 0.0
    %1051 = vmatprep.subr.mxu0 0.0
    %1052 = vmatpush1.msra.mxu0 0.0
    %1053 = vmatprep.subr.mxu0 0.0
    %1054 = vmatpush1.msra.mxu0 0.0
    %1055 = vmatprep.subr.mxu0 0.0
    %1056 = vmatpush1.msra.mxu0 0.0
    %1057 = vmatprep.subr.mxu0 0.0
    %1058 = vmatpush1.msra.mxu0 0.0
    %1059 = vmatprep.subr.mxu0 0.0
    %1060 = vmatpush1.msra.mxu0 0.0
    %1061 = vmatprep.subr.mxu0 0.0
    %1062 = vmatpush1.msra.mxu0 0.0
    %1063 = vmatprep.subr.mxu0 0.0
    %1064 = vmatpush1.msra.mxu0 0.0
    %1065 = vmatprep.subr.mxu0 0.0
    %1066 = vmatpush1.msra.mxu0 0.0
    %1067 = vmatprep.subr.mxu0 0.0
    %1068 = vmatpush1.msra.mxu0 0.0
    %1069 = vmatprep.subr.mxu0 0.0
    %1070 = vmatpush1.msra.mxu0 %v104
    %1071 = vmatprep.subr.mxu0 0.0
    %1072 = vmatpush1.msra.mxu0 %v103
    %1073 = vmatprep.subr.mxu0 0.0
    %1074 = vmatpush1.msra.mxu0 %v102
    %1075 = vmatprep.subr.mxu0 0.0
    %1076 = vmatpush1.msra.mxu0 %v101
    %1077 = vmatprep.subr.mxu0 0.0
    %1078 = vmatpush2.msra.mxu0 0.0
    %1079 = vmatprep.subr.mxu0 0.0
    %1080 = vmatpush2.msra.mxu0 0.0
    %1081 = vmatprep.subr.mxu0 0.0
    %1082 = vmatpush2.msra.mxu0 0.0
    %1083 = vmatprep.subr.mxu0 0.0
    %1084 = vmatpush2.msra.mxu0 0.0
    %1085 = vmatprep.subr.mxu0 0.0
    %1086 = vmatpush2.msra.mxu0 0.0
    %1087 = vmatprep.subr.mxu0 0.0
    %1088 = vmatpush2.msra.mxu0 0.0
    %1089 = vmatprep.subr.mxu0 0.0
    %1090 = vmatpush2.msra.mxu0 0.0
    %1091 = vmatprep.subr.mxu0 0.0
    %1092 = vmatpush2.msra.mxu0 0.0
    %1093 = vmatprep.subr.mxu0 0.0
    %1094 = vmatpush2.msra.mxu0 0.0
    %1095 = vmatprep.subr.mxu0 0.0
    %1096 = vmatpush2.msra.mxu0 0.0
    %1097 = vmatprep.subr.mxu0 0.0
    %1098 = vmatpush2.msra.mxu0 0.0
    %1099 = vmatprep.subr.mxu0 0.0
    %1100 = vmatpush2.msra.mxu0 0.0
    %1101 = vmatprep.subr.mxu0 0.0
    %1102 = vmatpush2.msra.mxu0 0.0
    %1103 = vmatprep.subr.mxu0 0.0
    %1104 = vmatpush2.msra.mxu0 0.0
    %1105 = vmatprep.subr.mxu0 0.0
    %1106 = vmatpush2.msra.mxu0 0.0
    %1107 = vmatprep.subr.mxu0 0.0
    %1108 = vmatpush2.msra.mxu0 0.0
    %1109 = vmatprep.mubr.f32.mxu0 0.0
    %1110 = vmatmul.mubr.f32.gmra.mxu0 %v1040
    %v1111 = vpop.f32.mrf.mxu0
    %v1112 = vadd.f32 %v1038, %v1111
    %v1113 = vpop.f32.mrf.mxu0
    %1114 = vmatprep.mubr.f32.mxu0 0.0
    %1115 = vmatmul.mubr.f32.gmra.mxu0 %v1043
    %v1116 = vpop.f32.mrf.mxu0
    %v1117 = vadd.f32 %v1038, %v1116
    %v1118 = vpop.f32.mrf.mxu0
    %1119 = vdwg.mxu0
    %v1120 = vmul.f32 %v1112, 0.5
    %v1121 = vmul.f32 %v1117, 0.5
    %v1122 = vmul.f32 %v1112, 0.044715
    %v1123 = vmul.f32 %v1117, 0.044715
    %v1124 = vmul.f32 %v1122, %v1112
    %v1125 = vmul.f32 %v1123, %v1117
    %v1126 = vmul.f32 %v1124, %v1112
    %v1127 = vmul.f32 %v1125, %v1117
    %v1128 = vadd.f32 %v1112, %v1126
    %v1129 = vadd.f32 %v1117, %v1127
    %v1130 = vmul.f32 %v1128, 0.7978846
    %v1131 = vmul.f32 %v1129, 0.7978846
    %v1132 = vtanh.pop %v1130
    %v1133 = vtanh.pop %v1131
    %v1134 = vadd.f32 %v1132, 1.0
    %v1135 = vadd.f32 %v1133, 1.0
    %v1136 = vmul.f32 %v1120, %v1134
    %v1137 = vmul.f32 %v1121, %v1135
    %1139 = vrot.lane.b32.xlu0 %v1038, 64
    %v1140 = vpop.permute.xlu0 %1139
    %vm1142 = vcmask 523264
    %v1144 = vsel %vm1142, %v1136, 0
    %v1147 = vsel %vm1142, %v1137, 0
    %1149 = vmatprep.subr.mxu0 0.0
    %1150 = vmatpush1.msra.mxu0 0.0
    %1151 = vmatprep.subr.mxu0 0.0
    %1152 = vmatpush1.msra.mxu0 0.0
    %1153 = vmatprep.subr.mxu0 0.0
    %1154 = vmatpush1.msra.mxu0 0.0
    %1155 = vmatprep.subr.mxu0 0.0
    %1156 = vmatpush1.msra.mxu0 0.0
    %1157 = vmatprep.subr.mxu0 0.0
    %1158 = vmatpush1.msra.mxu0 0.0
    %1159 = vmatprep.subr.mxu0 0.0
    %1160 = vmatpush1.msra.mxu0 0.0
    %1161 = vmatprep.subr.mxu0 0.0
    %1162 = vmatpush1.msra.mxu0 0.0
    %1163 = vmatprep.subr.mxu0 0.0
    %1164 = vmatpush1.msra.mxu0 0.0
    %1165 = vmatprep.subr.mxu0 0.0
    %1166 = vmatpush1.msra.mxu0 %v112
    %1167 = vmatprep.subr.mxu0 0.0
    %1168 = vmatpush1.msra.mxu0 %v111
    %1169 = vmatprep.subr.mxu0 0.0
    %1170 = vmatpush1.msra.mxu0 %v110
    %1171 = vmatprep.subr.mxu0 0.0
    %1172 = vmatpush1.msra.mxu0 %v109
    %1173 = vmatprep.subr.mxu0 0.0
    %1174 = vmatpush1.msra.mxu0 %v108
    %1175 = vmatprep.subr.mxu0 0.0
    %1176 = vmatpush1.msra.mxu0 %v107
    %1177 = vmatprep.subr.mxu0 0.0
    %1178 = vmatpush1.msra.mxu0 %v106
    %1179 = vmatprep.subr.mxu0 0.0
    %1180 = vmatpush1.msra.mxu0 %v105
    %1181 = vmatprep.subr.mxu0 0.0
    %1182 = vmatpush2.msra.mxu0 0.0
    %1183 = vmatprep.subr.mxu0 0.0
    %1184 = vmatpush2.msra.mxu0 0.0
    %1185 = vmatprep.subr.mxu0 0.0
    %1186 = vmatpush2.msra.mxu0 0.0
    %1187 = vmatprep.subr.mxu0 0.0
    %1188 = vmatpush2.msra.mxu0 0.0
    %1189 = vmatprep.subr.mxu0 0.0
    %1190 = vmatpush2.msra.mxu0 0.0
    %1191 = vmatprep.subr.mxu0 0.0
    %1192 = vmatpush2.msra.mxu0 0.0
    %1193 = vmatprep.subr.mxu0 0.0
    %1194 = vmatpush2.msra.mxu0 0.0
    %1195 = vmatprep.subr.mxu0 0.0
    %1196 = vmatpush2.msra.mxu0 0.0
    %1197 = vmatprep.subr.mxu0 0.0
    %1198 = vmatpush2.msra.mxu0 0.0
    %1199 = vmatprep.subr.mxu0 0.0
    %1200 = vmatpush2.msra.mxu0 0.0
    %1201 = vmatprep.subr.mxu0 0.0
    %1202 = vmatpush2.msra.mxu0 0.0
    %1203 = vmatprep.subr.mxu0 0.0
    %1204 = vmatpush2.msra.mxu0 0.0
    %1205 = vmatprep.subr.mxu0 0.0
    %1206 = vmatpush2.msra.mxu0 0.0
    %1207 = vmatprep.subr.mxu0 0.0
    %1208 = vmatpush2.msra.mxu0 0.0
    %1209 = vmatprep.subr.mxu0 0.0
    %1210 = vmatpush2.msra.mxu0 0.0
    %1211 = vmatprep.subr.mxu0 0.0
    %1212 = vmatpush2.msra.mxu0 0.0
    %1213 = vmatprep.mubr.f32.mxu0 0.0
    %1214 = vmatmul.mubr.f32.gmra.mxu0 %v1144
    %v1215 = vpop.f32.mrf.mxu0
    %v1216 = vadd.f32 %v1140, %v1215
    %v1217 = vpop.f32.mrf.mxu0
    %1218 = vmatprep.mubr.f32.mxu0 0.0
    %1219 = vmatmul.mubr.f32.gmra.mxu0 %v1147
    %v1220 = vpop.f32.mrf.mxu0
    %v1221 = vadd.f32 %v1140, %v1220
    %v1222 = vpop.f32.mrf.mxu0
    %1223 = vdwg.mxu0
    %v1224 = vadd.f32 %v1033, %v1216
    %v1225 = vadd.f32 %v1034, %v1221
    %v1226 = vsel %vm57, %v1224, 0.0
    %1227 = vadd.xlane.f32.xlu0 %v1226
    %v1228 = vpop.xlane.xlu0 %1227
    %v1229 = vsel %vm57, %v1225, 0.0
    %1230 = vadd.xlane.f32.xlu0 %v1229
    %v1231 = vpop.xlane.xlu0 %1230
    %v1232 = vmul.f32 %v1228, %v64
    %v1233 = vmul.f32 %v1231, %v64
    %v1234 = vsub.f32 %v1224, %v1232
    %v1235 = vsub.f32 %v1225, %v1233
    %v1236 = vmul.f32 %v1234, %v1234
    %v1237 = vmul.f32 %v1235, %v1235
    %v1238 = vsel %vm57, %v1236, 0.0
    %1239 = vadd.xlane.f32.xlu0 %v1238
    %v1240 = vpop.xlane.xlu0 %1239
    %v1241 = vsel %vm57, %v1237, 0.0
    %1242 = vadd.xlane.f32.xlu0 %v1241
    %v1243 = vpop.xlane.xlu0 %1242
    %v1244 = vmul.f32 %v1240, %v64
    %v1245 = vmul.f32 %v1243, %v64
    %v1246 = vadd.f32 %v1244, 1e-05
    %v1247 = vadd.f32 %v1245, 1e-05
    %v1248 = vrsqrt.pop %v1246
    %v1249 = vrsqrt.pop %v1247
    %v1250 = vmul.f32 %v1234, %v1248
    %v1251 = vmul.f32 %v1235, %v1249
    %1252 = vrot.lane.b32.xlu0 %v1026, 64
    %v1253 = vpop.permute.xlu0 %1252
    %v1255 = vmul.f32 %v1250, %v1253
    %v1256 = vmul.f32 %v1251, %v1253
    %1257 = vrot.lane.b32.xlu0 %v1026, 32
    %v1258 = vpop.permute.xlu0 %1257
    %v1260 = vadd.f32 %v1255, %v1258
    %v1261 = vadd.f32 %v1256, %v1258
    %v1262 = vld [vmem:[#allocation8 + $0xb0] sm:$0xff]
    %v1263 = vld [vmem:[#allocation8 + $0xb8] sm:$0xff]
    %v1264 = vld [vmem:[#allocation8 + $0xc0] sm:$0xff]
    %v1265 = vld [vmem:[#allocation8 + $0xc8] sm:$0xff]
    %v1266 = vld [vmem:[#allocation8 + $0xd0] sm:$0xff]
    %v1267 = vld [vmem:[#allocation8 + $0xd8] sm:$0xff]
    %v1268 = vld [vmem:[#allocation8 + $0xe0] sm:$0xff]
    %v1269 = vld [vmem:[#allocation8 + $0xe8] sm:$0xff]
    %v1270 = vld [vmem:[#allocation8 + $0xf0] sm:$0xff]
    %v1271 = vld [vmem:[#allocation8 + $0xf8] sm:$0xff]
    %v1272 = vld [vmem:[#allocation8 + $0x100] sm:$0xff]
    %v1273 = vld [vmem:[#allocation8 + $0x108] sm:$0xff]
    %v1274 = vld [vmem:[#allocation8 + $0x110] sm:$0xff]
    %v1275 = vld [vmem:[#allocation8 + $0x118] sm:$0xff]
    %v1276 = vld [vmem:[#allocation8 + $0x120] sm:$0xff]
    %v1277 = vld [vmem:[#allocation8 + $0x128] sm:$0xff]
    %v1278 = vld [vmem:[#allocation8 + $0x130] sm:$0xff]
    %v1280 = vsel %vm57, %v1260, 0
    %v1283 = vsel %vm57, %v1261, 0
    %1285 = vmatprep.subr.mxu0 0.0
    %1286 = vmatpush1.msra.mxu0 0.0
    %1287 = vmatprep.subr.mxu0 0.0
    %1288 = vmatpush1.msra.mxu0 0.0
    %1289 = vmatprep.subr.mxu0 0.0
    %1290 = vmatpush1.msra.mxu0 0.0
    %1291 = vmatprep.subr.mxu0 0.0
    %1292 = vmatpush1.msra.mxu0 0.0
    %1293 = vmatprep.subr.mxu0 0.0
    %1294 = vmatpush1.msra.mxu0 0.0
    %1295 = vmatprep.subr.mxu0 0.0
    %1296 = vmatpush1.msra.mxu0 0.0
    %1297 = vmatprep.subr.mxu0 0.0
    %1298 = vmatpush1.msra.mxu0 0.0
    %1299 = vmatprep.subr.mxu0 0.0
    %1300 = vmatpush1.msra.mxu0 0.0
    %1301 = vmatprep.subr.mxu0 0.0
    %1302 = vmatpush1.msra.mxu0 0.0
    %1303 = vmatprep.subr.mxu0 0.0
    %1304 = vmatpush1.msra.mxu0 0.0
    %1305 = vmatprep.subr.mxu0 0.0
    %1306 = vmatpush1.msra.mxu0 0.0
    %1307 = vmatprep.subr.mxu0 0.0
    %1308 = vmatpush1.msra.mxu0 0.0
    %1309 = vmatprep.subr.mxu0 0.0
    %1310 = vmatpush1.msra.mxu0 %v1265
    %1311 = vmatprep.subr.mxu0 0.0
    %1312 = vmatpush1.msra.mxu0 %v1264
    %1313 = vmatprep.subr.mxu0 0.0
    %1314 = vmatpush1.msra.mxu0 %v1263
    %1315 = vmatprep.subr.mxu0 0.0
    %1316 = vmatpush1.msra.mxu0 %v1262
    %1317 = vmatprep.subr.mxu0 0.0
    %1318 = vmatpush2.msra.mxu0 0.0
    %1319 = vmatprep.subr.mxu0 0.0
    %1320 = vmatpush2.msra.mxu0 0.0
    %1321 = vmatprep.subr.mxu0 0.0
    %1322 = vmatpush2.msra.mxu0 0.0
    %1323 = vmatprep.subr.mxu0 0.0
    %1324 = vmatpush2.msra.mxu0 0.0
    %1325 = vmatprep.subr.mxu0 0.0
    %1326 = vmatpush2.msra.mxu0 0.0
    %1327 = vmatprep.subr.mxu0 0.0
    %1328 = vmatpush2.msra.mxu0 0.0
    %1329 = vmatprep.subr.mxu0 0.0
    %1330 = vmatpush2.msra.mxu0 0.0
    %1331 = vmatprep.subr.mxu0 0.0
    %1332 = vmatpush2.msra.mxu0 0.0
    %1333 = vmatprep.subr.mxu0 0.0
    %1334 = vmatpush2.msra.mxu0 0.0
    %1335 = vmatprep.subr.mxu0 0.0
    %1336 = vmatpush2.msra.mxu0 0.0
    %1337 = vmatprep.subr.mxu0 0.0
    %1338 = vmatpush2.msra.mxu0 0.0
    %1339 = vmatprep.subr.mxu0 0.0
    %1340 = vmatpush2.msra.mxu0 0.0
    %1341 = vmatprep.subr.mxu0 0.0
    %1342 = vmatpush2.msra.mxu0 0.0
    %1343 = vmatprep.subr.mxu0 0.0
    %1344 = vmatpush2.msra.mxu0 0.0
    %1345 = vmatprep.subr.mxu0 0.0
    %1346 = vmatpush2.msra.mxu0 0.0
    %1347 = vmatprep.subr.mxu0 0.0
    %1348 = vmatpush2.msra.mxu0 0.0
    %1349 = vmatprep.mubr.f32.mxu0 0.0
    %1350 = vmatmul.mubr.f32.gmra.mxu0 %v1280
    %v1351 = vpop.f32.mrf.mxu0
    %v1352 = vadd.f32 0.0, %v1351
    %v1353 = vpop.f32.mrf.mxu0
    %1354 = vmatprep.mubr.f32.mxu0 0.0
    %1355 = vmatmul.mubr.f32.gmra.mxu0 %v1283
    %v1356 = vpop.f32.mrf.mxu0
    %v1357 = vadd.f32 0.0, %v1356
    %v1358 = vpop.f32.mrf.mxu0
    %1359 = vdwg.mxu0
    %v1360 = vlaneseq
    %v1361 = vshrl.u32 %v1360, 7
    %v1362 = vsub.s32 0, %v1361
    %v1363 = vrot.slane %v1278, %v1362
    %v1364 = vadd.f32 %v1352, %v1363
    %v1365 = vadd.f32 %v1357, %v1363
    %v1366 = vld [vmem:[#allocation6] sm:$0x1]
    %1368 = vrot.lane.b32.xlu0 %v1364, 96
    %v1369 = vpop.permute.xlu0 %1368
    %v1370 = vsel %vm205, %v1364, 0
    %v1372 = vsel %vm205, %v1369, 0
    %1374 = vmatprep.subr.mxu0 0.0
    %1375 = vmatpush1.xpose.msra.mxu0 0.0
    %1376 = vmatprep.subr.mxu0 0.0
    %1377 = vmatpush1.xpose.msra.mxu0 0.0
    %1378 = vmatprep.subr.mxu0 0.0
    %1379 = vmatpush1.xpose.msra.mxu0 0.0
    %1380 = vmatprep.subr.mxu0 0.0
    %1381 = vmatpush1.xpose.msra.mxu0 0.0
    %1382 = vmatprep.subr.mxu0 0.0
    %1383 = vmatpush1.xpose.msra.mxu0 0.0
    %1384 = vmatprep.subr.mxu0 0.0
    %1385 = vmatpush1.xpose.msra.mxu0 0.0
    %1386 = vmatprep.subr.mxu0 0.0
    %1387 = vmatpush1.xpose.msra.mxu0 0.0
    %1388 = vmatprep.subr.mxu0 0.0
    %1389 = vmatpush1.xpose.msra.mxu0 0.0
    %1390 = vmatprep.subr.mxu0 0.0
    %1391 = vmatpush1.xpose.msra.mxu0 0.0
    %1392 = vmatprep.subr.mxu0 0.0
    %1393 = vmatpush1.xpose.msra.mxu0 0.0
    %1394 = vmatprep.subr.mxu0 0.0
    %1395 = vmatpush1.xpose.msra.mxu0 0.0
    %1396 = vmatprep.subr.mxu0 0.0
    %1397 = vmatpush1.xpose.msra.mxu0 0.0
    %1398 = vmatprep.subr.mxu0 0.0
    %1399 = vmatpush1.xpose.msra.mxu0 0.0
    %1400 = vmatprep.subr.mxu0 0.0
    %1401 = vmatpush1.xpose.msra.mxu0 0.0
    %1402 = vmatprep.subr.mxu0 0.0
    %1403 = vmatpush1.xpose.msra.mxu0 0.0
    %1404 = vmatprep.subr.mxu0 0.0
    %1405 = vmatpush1.xpose.msra.mxu0 %v1372
    %1406 = vmatprep.subr.mxu0 0.0
    %1407 = vmatpush2.xpose.msra.mxu0 0.0
    %1408 = vmatprep.subr.mxu0 0.0
    %1409 = vmatpush2.xpose.msra.mxu0 0.0
    %1410 = vmatprep.subr.mxu0 0.0
    %1411 = vmatpush2.xpose.msra.mxu0 0.0
    %1412 = vmatprep.subr.mxu0 0.0
    %1413 = vmatpush2.xpose.msra.mxu0 0.0
    %1414 = vmatprep.subr.mxu0 0.0
    %1415 = vmatpush2.xpose.msra.mxu0 0.0
    %1416 = vmatprep.subr.mxu0 0.0
    %1417 = vmatpush2.xpose.msra.mxu0 0.0
    %1418 = vmatprep.subr.mxu0 0.0
    %1419 = vmatpush2.xpose.msra.mxu0 0.0
    %1420 = vmatprep.subr.mxu0 0.0
    %1421 = vmatpush2.xpose.msra.mxu0 0.0
    %1422 = vmatprep.subr.mxu0 0.0
    %1423 = vmatpush2.xpose.msra.mxu0 0.0
    %1424 = vmatprep.subr.mxu0 0.0
    %1425 = vmatpush2.xpose.msra.mxu0 0.0
    %1426 = vmatprep.subr.mxu0 0.0
    %1427 = vmatpush2.xpose.msra.mxu0 0.0
    %1428 = vmatprep.subr.mxu0 0.0
    %1429 = vmatpush2.xpose.msra.mxu0 0.0
    %1430 = vmatprep.subr.mxu0 0.0
    %1431 = vmatpush2.xpose.msra.mxu0 0.0
    %1432 = vmatprep.subr.mxu0 0.0
    %1433 = vmatpush2.xpose.msra.mxu0 0.0
    %1434 = vmatprep.subr.mxu0 0.0
    %1435 = vmatpush2.xpose.msra.mxu0 0.0
    %1436 = vmatprep.subr.mxu0 0.0
    %1437 = vmatpush2.xpose.msra.mxu0 0.0
    %1438 = vmatprep.mubr.f32.mxu0 0.0
    %1439 = vmatmul.mubr.f32.gmra.mxu0 %v1370
    %v1440 = vpop.f32.mrf.mxu0
    %v1441 = vadd.f32 0.0, %v1440
    %v1442 = vpop.f32.mrf.mxu0
    %1443 = vdwg.mxu0
    %v1444 = vmul.f32 %v1441, 0.25
    %v1445 = vlaneseq
    %v1446 = vshrl.u32 %v1445, 7
    %v1447 = vsub.s32 0, %v1446
    %v1448 = vrot.slane %v1366, %v1447
    %v1449 = vadd.f32 %v1444, %v1448
    %v1450 = vsel %vm286, %v1449, -inf
    %1451 = vmax.xlane.f32.xlu0 %v1450
    %v1452 = vpop.xlane.xlu0 %1451
    %v1453 = vsub.f32 %v1449, %v1452
    %v1454 = vmul.f32 %v1453, 1.442695
    %v1455 = vpow.pop %v1454
    %v1456 = vsel %vm286, %v1455, 0.0
    %1457 = vadd.xlane.f32.xlu0 %v1456
    %v1458 = vpop.xlane.xlu0 %1457
    %v1459 = vrcp.pop %v1458
    %v1460 = vmul.f32 %v1455, %v1459
    %1461 = vrot.lane.b32.xlu0 %v1364, 64
    %v1462 = vpop.permute.xlu0 %1461
    %v1465 = vsel %vm286, %v1460, 0
    %1467 = vmatprep.subr.mxu0 0.0
    %1468 = vmatpush1.msra.mxu0 0.0
    %1469 = vmatprep.subr.mxu0 0.0
    %1470 = vmatpush1.msra.mxu0 0.0
    %1471 = vmatprep.subr.mxu0 0.0
    %1472 = vmatpush1.msra.mxu0 0.0
    %1473 = vmatprep.subr.mxu0 0.0
    %1474 = vmatpush1.msra.mxu0 0.0
    %1475 = vmatprep.subr.mxu0 0.0
    %1476 = vmatpush1.msra.mxu0 0.0
    %1477 = vmatprep.subr.mxu0 0.0
    %1478 = vmatpush1.msra.mxu0 0.0
    %1479 = vmatprep.subr.mxu0 0.0
    %1480 = vmatpush1.msra.mxu0 0.0
    %1481 = vmatprep.subr.mxu0 0.0
    %1482 = vmatpush1.msra.mxu0 0.0
    %1483 = vmatprep.subr.mxu0 0.0
    %1484 = vmatpush1.msra.mxu0 0.0
    %1485 = vmatprep.subr.mxu0 0.0
    %1486 = vmatpush1.msra.mxu0 0.0
    %1487 = vmatprep.subr.mxu0 0.0
    %1488 = vmatpush1.msra.mxu0 0.0
    %1489 = vmatprep.subr.mxu0 0.0
    %1490 = vmatpush1.msra.mxu0 0.0
    %1491 = vmatprep.subr.mxu0 0.0
    %1492 = vmatpush1.msra.mxu0 0.0
    %1493 = vmatprep.subr.mxu0 0.0
    %1494 = vmatpush1.msra.mxu0 0.0
    %1495 = vmatprep.subr.mxu0 0.0
    %1496 = vmatpush1.msra.mxu0 0.0
    %1497 = vmatprep.subr.mxu0 0.0
    %1498 = vmatpush1.msra.mxu0 %v1462
    %1499 = vmatprep.subr.mxu0 0.0
    %1500 = vmatpush2.msra.mxu0 0.0
    %1501 = vmatprep.subr.mxu0 0.0
    %1502 = vmatpush2.msra.mxu0 0.0
    %1503 = vmatprep.subr.mxu0 0.0
    %1504 = vmatpush2.msra.mxu0 0.0
    %1505 = vmatprep.subr.mxu0 0.0
    %1506 = vmatpush2.msra.mxu0 0.0
    %1507 = vmatprep.subr.mxu0 0.0
    %1508 = vmatpush2.msra.mxu0 0.0
    %1509 = vmatprep.subr.mxu0 0.0
    %1510 = vmatpush2.msra.mxu0 0.0
    %1511 = vmatprep.subr.mxu0 0.0
    %1512 = vmatpush2.msra.mxu0 0.0
    %1513 = vmatprep.subr.mxu0 0.0
    %1514 = vmatpush2.msra.mxu0 0.0
    %1515 = vmatprep.subr.mxu0 0.0
    %1516 = vmatpush2.msra.mxu0 0.0
    %1517 = vmatprep.subr.mxu0 0.0
    %1518 = vmatpush2.msra.mxu0 0.0
    %1519 = vmatprep.subr.mxu0 0.0
    %1520 = vmatpush2.msra.mxu0 0.0
    %1521 = vmatprep.subr.mxu0 0.0
    %1522 = vmatpush2.msra.mxu0 0.0
    %1523 = vmatprep.subr.mxu0 0.0
    %1524 = vmatpush2.msra.mxu0 0.0
    %1525 = vmatprep.subr.mxu0 0.0
    %1526 = vmatpush2.msra.mxu0 0.0
    %1527 = vmatprep.subr.mxu0 0.0
    %1528 = vmatpush2.msra.mxu0 0.0
    %1529 = vmatprep.subr.mxu0 0.0
    %1530 = vmatpush2.msra.mxu0 0.0
    %1531 = vmatprep.mubr.f32.mxu0 0.0
    %1532 = vmatmul.mubr.f32.gmra.mxu0 %v1465
    %v1533 = vpop.f32.mrf.mxu0
    %v1534 = vadd.f32 0.0, %v1533
    %v1535 = vpop.f32.mrf.mxu0
    %1536 = vdwg.mxu0
    %1537 = vst.msk [vmem:[#allocation2] sm:$0xff] %vm205, %v1534
    %1538 = vrot.lane.b32.xlu0 %v1364, 112
    %v1539 = vpop.permute.xlu0 %1538
    %1540 = vrot.lane.b32.xlu0 %v1364, 80
    %v1541 = vpop.permute.xlu0 %1540
    %v1542 = vsel %vm205, %v1539, 0
    %v1544 = vsel %vm205, %v1541, 0
    %1546 = vmatprep.subr.mxu0 0.0
    %1547 = vmatpush1.xpose.msra.mxu0 0.0
    %1548 = vmatprep.subr.mxu0 0.0
    %1549 = vmatpush1.xpose.msra.mxu0 0.0
    %1550 = vmatprep.subr.mxu0 0.0
    %1551 = vmatpush1.xpose.msra.mxu0 0.0
    %1552 = vmatprep.subr.mxu0 0.0
    %1553 = vmatpush1.xpose.msra.mxu0 0.0
    %1554 = vmatprep.subr.mxu0 0.0
    %1555 = vmatpush1.xpose.msra.mxu0 0.0
    %1556 = vmatprep.subr.mxu0 0.0
    %1557 = vmatpush1.xpose.msra.mxu0 0.0
    %1558 = vmatprep.subr.mxu0 0.0
    %1559 = vmatpush1.xpose.msra.mxu0 0.0
    %1560 = vmatprep.subr.mxu0 0.0
    %1561 = vmatpush1.xpose.msra.mxu0 0.0
    %1562 = vmatprep.subr.mxu0 0.0
    %1563 = vmatpush1.xpose.msra.mxu0 0.0
    %1564 = vmatprep.subr.mxu0 0.0
    %1565 = vmatpush1.xpose.msra.mxu0 0.0
    %1566 = vmatprep.subr.mxu0 0.0
    %1567 = vmatpush1.xpose.msra.mxu0 0.0
    %1568 = vmatprep.subr.mxu0 0.0
    %1569 = vmatpush1.xpose.msra.mxu0 0.0
    %1570 = vmatprep.subr.mxu0 0.0
    %1571 = vmatpush1.xpose.msra.mxu0 0.0
    %1572 = vmatprep.subr.mxu0 0.0
    %1573 = vmatpush1.xpose.msra.mxu0 0.0
    %1574 = vmatprep.subr.mxu0 0.0
    %1575 = vmatpush1.xpose.msra.mxu0 0.0
    %1576 = vmatprep.subr.mxu0 0.0
    %1577 = vmatpush1.xpose.msra.mxu0 %v1544
    %1578 = vmatprep.subr.mxu0 0.0
    %1579 = vmatpush2.xpose.msra.mxu0 0.0
    %1580 = vmatprep.subr.mxu0 0.0
    %1581 = vmatpush2.xpose.msra.mxu0 0.0
    %1582 = vmatprep.subr.mxu0 0.0
    %1583 = vmatpush2.xpose.msra.mxu0 0.0
    %1584 = vmatprep.subr.mxu0 0.0
    %1585 = vmatpush2.xpose.msra.mxu0 0.0
    %1586 = vmatprep.subr.mxu0 0.0
    %1587 = vmatpush2.xpose.msra.mxu0 0.0
    %1588 = vmatprep.subr.mxu0 0.0
    %1589 = vmatpush2.xpose.msra.mxu0 0.0
    %1590 = vmatprep.subr.mxu0 0.0
    %1591 = vmatpush2.xpose.msra.mxu0 0.0
    %1592 = vmatprep.subr.mxu0 0.0
    %1593 = vmatpush2.xpose.msra.mxu0 0.0
    %1594 = vmatprep.subr.mxu0 0.0
    %1595 = vmatpush2.xpose.msra.mxu0 0.0
    %1596 = vmatprep.subr.mxu0 0.0
    %1597 = vmatpush2.xpose.msra.mxu0 0.0
    %1598 = vmatprep.subr.mxu0 0.0
    %1599 = vmatpush2.xpose.msra.mxu0 0.0
    %1600 = vmatprep.subr.mxu0 0.0
    %1601 = vmatpush2.xpose.msra.mxu0 0.0
    %1602 = vmatprep.subr.mxu0 0.0
    %1603 = vmatpush2.xpose.msra.mxu0 0.0
    %1604 = vmatprep.subr.mxu0 0.0
    %1605 = vmatpush2.xpose.msra.mxu0 0.0
    %1606 = vmatprep.subr.mxu0 0.0
    %1607 = vmatpush2.xpose.msra.mxu0 0.0
    %1608 = vmatprep.subr.mxu0 0.0
    %1609 = vmatpush2.xpose.msra.mxu0 0.0
    %1610 = vmatprep.mubr.f32.mxu0 0.0
    %1611 = vmatmul.mubr.f32.gmra.mxu0 %v1542
    %v1612 = vpop.f32.mrf.mxu0
    %v1613 = vadd.f32 0.0, %v1612
    %v1614 = vpop.f32.mrf.mxu0
    %1615 = vdwg.mxu0
    %v1616 = vmul.f32 %v1613, 0.25
    %v1617 = vadd.f32 %v1616, %v1448
    %v1618 = vsel %vm286, %v1617, -inf
    %1619 = vmax.xlane.f32.xlu0 %v1618
    %v1620 = vpop.xlane.xlu0 %1619
    %v1621 = vsub.f32 %v1617, %v1620
    %v1622 = vmul.f32 %v1621, 1.442695
    %v1623 = vpow.pop %v1622
    %v1624 = vsel %vm286, %v1623, 0.0
    %1625 = vadd.xlane.f32.xlu0 %v1624
    %v1626 = vpop.xlane.xlu0 %1625
    %v1627 = vrcp.pop %v1626
    %v1628 = vmul.f32 %v1623, %v1627
    %1629 = vrot.lane.b32.xlu0 %v1364, 48
    %v1630 = vpop.permute.xlu0 %1629
    %v1633 = vsel %vm286, %v1628, 0
    %1635 = vmatprep.subr.mxu0 0.0
    %1636 = vmatpush1.msra.mxu0 0.0
    %1637 = vmatprep.subr.mxu0 0.0
    %1638 = vmatpush1.msra.mxu0 0.0
    %1639 = vmatprep.subr.mxu0 0.0
    %1640 = vmatpush1.msra.mxu0 0.0
    %1641 = vmatprep.subr.mxu0 0.0
    %1642 = vmatpush1.msra.mxu0 0.0
    %1643 = vmatprep.subr.mxu0 0.0
    %1644 = vmatpush1.msra.mxu0 0.0
    %1645 = vmatprep.subr.mxu0 0.0
    %1646 = vmatpush1.msra.mxu0 0.0
    %1647 = vmatprep.subr.mxu0 0.0
    %1648 = vmatpush1.msra.mxu0 0.0
    %1649 = vmatprep.subr.mxu0 0.0
    %1650 = vmatpush1.msra.mxu0 0.0
    %1651 = vmatprep.subr.mxu0 0.0
    %1652 = vmatpush1.msra.mxu0 0.0
    %1653 = vmatprep.subr.mxu0 0.0
    %1654 = vmatpush1.msra.mxu0 0.0
    %1655 = vmatprep.subr.mxu0 0.0
    %1656 = vmatpush1.msra.mxu0 0.0
    %1657 = vmatprep.subr.mxu0 0.0
    %1658 = vmatpush1.msra.mxu0 0.0
    %1659 = vmatprep.subr.mxu0 0.0
    %1660 = vmatpush1.msra.mxu0 0.0
    %1661 = vmatprep.subr.mxu0 0.0
    %1662 = vmatpush1.msra.mxu0 0.0
    %1663 = vmatprep.subr.mxu0 0.0
    %1664 = vmatpush1.msra.mxu0 0.0
    %1665 = vmatprep.subr.mxu0 0.0
    %1666 = vmatpush1.msra.mxu0 %v1630
    %1667 = vmatprep.subr.mxu0 0.0
    %1668 = vmatpush2.msra.mxu0 0.0
    %1669 = vmatprep.subr.mxu0 0.0
    %1670 = vmatpush2.msra.mxu0 0.0
    %1671 = vmatprep.subr.mxu0 0.0
    %1672 = vmatpush2.msra.mxu0 0.0
    %1673 = vmatprep.subr.mxu0 0.0
    %1674 = vmatpush2.msra.mxu0 0.0
    %1675 = vmatprep.subr.mxu0 0.0
    %1676 = vmatpush2.msra.mxu0 0.0
    %1677 = vmatprep.subr.mxu0 0.0
    %1678 = vmatpush2.msra.mxu0 0.0
    %1679 = vmatprep.subr.mxu0 0.0
    %1680 = vmatpush2.msra.mxu0 0.0
    %1681 = vmatprep.subr.mxu0 0.0
    %1682 = vmatpush2.msra.mxu0 0.0
    %1683 = vmatprep.subr.mxu0 0.0
    %1684 = vmatpush2.msra.mxu0 0.0
    %1685 = vmatprep.subr.mxu0 0.0
    %1686 = vmatpush2.msra.mxu0 0.0
    %1687 = vmatprep.subr.mxu0 0.0
    %1688 = vmatpush2.msra.mxu0 0.0
    %1689 = vmatprep.subr.mxu0 0.0
    %1690 = vmatpush2.msra.mxu0 0.0
    %1691 = vmatprep.subr.mxu0 0.0
    %1692 = vmatpush2.msra.mxu0 0.0
    %1693 = vmatprep.subr.mxu0 0.0
    %1694 = vmatpush2.msra.mxu0 0.0
    %1695 = vmatprep.subr.mxu0 0.0
    %1696 = vmatpush2.msra.mxu0 0.0
    %1697 = vmatprep.subr.mxu0 0.0
    %1698 = vmatpush2.msra.mxu0 0.0
    %1699 = vmatprep.mubr.f32.mxu0 0.0
    %1700 = vmatmul.mubr.f32.gmra.mxu0 %v1633
    %v1701 = vpop.f32.mrf.mxu0
    %v1702 = vadd.f32 0.0, %v1701
    %v1703 = vpop.f32.mrf.mxu0
    %1704 = vdwg.mxu0
    %1706 = vrot.lane.b32.xlu0 %v1702, 16
    %v1707 = vpop.permute.xlu0 %1706
    %1709 = vst.msk [vmem:[#allocation2] sm:$0xff] %vm546, %v1707
    %v1710 = vld [vmem:[#allocation6 + $0x1] sm:$0x1]
    %1712 = vrot.lane.b32.xlu0 %v1365, 96
    %v1713 = vpop.permute.xlu0 %1712
    %v1714 = vsel %vm205, %v1365, 0
    %v1716 = vsel %vm205, %v1713, 0
    %1718 = vmatprep.subr.mxu0 0.0
    %1719 = vmatpush1.xpose.msra.mxu0 0.0
    %1720 = vmatprep.subr.mxu0 0.0
    %1721 = vmatpush1.xpose.msra.mxu0 0.0
    %1722 = vmatprep.subr.mxu0 0.0
    %1723 = vmatpush1.xpose.msra.mxu0 0.0
    %1724 = vmatprep.subr.mxu0 0.0
    %1725 = vmatpush1.xpose.msra.mxu0 0.0
    %1726 = vmatprep.subr.mxu0 0.0
    %1727 = vmatpush1.xpose.msra.mxu0 0.0
    %1728 = vmatprep.subr.mxu0 0.0
    %1729 = vmatpush1.xpose.msra.mxu0 0.0
    %1730 = vmatprep.subr.mxu0 0.0
    %1731 = vmatpush1.xpose.msra.mxu0 0.0
    %1732 = vmatprep.subr.mxu0 0.0
    %1733 = vmatpush1.xpose.msra.mxu0 0.0
    %1734 = vmatprep.subr.mxu0 0.0
    %1735 = vmatpush1.xpose.msra.mxu0 0.0
    %1736 = vmatprep.subr.mxu0 0.0
    %1737 = vmatpush1.xpose.msra.mxu0 0.0
    %1738 = vmatprep.subr.mxu0 0.0
    %1739 = vmatpush1.xpose.msra.mxu0 0.0
    %1740 = vmatprep.subr.mxu0 0.0
    %1741 = vmatpush1.xpose.msra.mxu0 0.0
    %1742 = vmatprep.subr.mxu0 0.0
    %1743 = vmatpush1.xpose.msra.mxu0 0.0
    %1744 = vmatprep.subr.mxu0 0.0
    %1745 = vmatpush1.xpose.msra.mxu0 0.0
    %1746 = vmatprep.subr.mxu0 0.0
    %1747 = vmatpush1.xpose.msra.mxu0 0.0
    %1748 = vmatprep.subr.mxu0 0.0
    %1749 = vmatpush1.xpose.msra.mxu0 %v1716
    %1750 = vmatprep.subr.mxu0 0.0
    %1751 = vmatpush2.xpose.msra.mxu0 0.0
    %1752 = vmatprep.subr.mxu0 0.0
    %1753 = vmatpush2.xpose.msra.mxu0 0.0
    %1754 = vmatprep.subr.mxu0 0.0
    %1755 = vmatpush2.xpose.msra.mxu0 0.0
    %1756 = vmatprep.subr.mxu0 0.0
    %1757 = vmatpush2.xpose.msra.mxu0 0.0
    %1758 = vmatprep.subr.mxu0 0.0
    %1759 = vmatpush2.xpose.msra.mxu0 0.0
    %1760 = vmatprep.subr.mxu0 0.0
    %1761 = vmatpush2.xpose.msra.mxu0 0.0
    %1762 = vmatprep.subr.mxu0 0.0
    %1763 = vmatpush2.xpose.msra.mxu0 0.0
    %1764 = vmatprep.subr.mxu0 0.0
    %1765 = vmatpush2.xpose.msra.mxu0 0.0
    %1766 = vmatprep.subr.mxu0 0.0
    %1767 = vmatpush2.xpose.msra.mxu0 0.0
    %1768 = vmatprep.subr.mxu0 0.0
    %1769 = vmatpush2.xpose.msra.mxu0 0.0
    %1770 = vmatprep.subr.mxu0 0.0
    %1771 = vmatpush2.xpose.msra.mxu0 0.0
    %1772 = vmatprep.subr.mxu0 0.0
    %1773 = vmatpush2.xpose.msra.mxu0 0.0
    %1774 = vmatprep.subr.mxu0 0.0
    %1775 = vmatpush2.xpose.msra.mxu0 0.0
    %1776 = vmatprep.subr.mxu0 0.0
    %1777 = vmatpush2.xpose.msra.mxu0 0.0
    %1778 = vmatprep.subr.mxu0 0.0
    %1779 = vmatpush2.xpose.msra.mxu0 0.0
    %1780 = vmatprep.subr.mxu0 0.0
    %1781 = vmatpush2.xpose.msra.mxu0 0.0
    %1782 = vmatprep.mubr.f32.mxu0 0.0
    %1783 = vmatmul.mubr.f32.gmra.mxu0 %v1714
    %v1784 = vpop.f32.mrf.mxu0
    %v1785 = vadd.f32 0.0, %v1784
    %v1786 = vpop.f32.mrf.mxu0
    %1787 = vdwg.mxu0
    %v1788 = vmul.f32 %v1785, 0.25
    %v1789 = vlaneseq
    %v1790 = vshrl.u32 %v1789, 7
    %v1791 = vsub.s32 0, %v1790
    %v1792 = vrot.slane %v1710, %v1791
    %v1793 = vadd.f32 %v1788, %v1792
    %v1794 = vsel %vm286, %v1793, -inf
    %1795 = vmax.xlane.f32.xlu0 %v1794
    %v1796 = vpop.xlane.xlu0 %1795
    %v1797 = vsub.f32 %v1793, %v1796
    %v1798 = vmul.f32 %v1797, 1.442695
    %v1799 = vpow.pop %v1798
    %v1800 = vsel %vm286, %v1799, 0.0
    %1801 = vadd.xlane.f32.xlu0 %v1800
    %v1802 = vpop.xlane.xlu0 %1801
    %v1803 = vrcp.pop %v1802
    %v1804 = vmul.f32 %v1799, %v1803
    %1805 = vrot.lane.b32.xlu0 %v1365, 64
    %v1806 = vpop.permute.xlu0 %1805
    %v1809 = vsel %vm286, %v1804, 0
    %1811 = vmatprep.subr.mxu0 0.0
    %1812 = vmatpush1.msra.mxu0 0.0
    %1813 = vmatprep.subr.mxu0 0.0
    %1814 = vmatpush1.msra.mxu0 0.0
    %1815 = vmatprep.subr.mxu0 0.0
    %1816 = vmatpush1.msra.mxu0 0.0
    %1817 = vmatprep.subr.mxu0 0.0
    %1818 = vmatpush1.msra.mxu0 0.0
    %1819 = vmatprep.subr.mxu0 0.0
    %1820 = vmatpush1.msra.mxu0 0.0
    %1821 = vmatprep.subr.mxu0 0.0
    %1822 = vmatpush1.msra.mxu0 0.0
    %1823 = vmatprep.subr.mxu0 0.0
    %1824 = vmatpush1.msra.mxu0 0.0
    %1825 = vmatprep.subr.mxu0 0.0
    %1826 = vmatpush1.msra.mxu0 0.0
    %1827 = vmatprep.subr.mxu0 0.0
    %1828 = vmatpush1.msra.mxu0 0.0
    %1829 = vmatprep.subr.mxu0 0.0
    %1830 = vmatpush1.msra.mxu0 0.0
    %1831 = vmatprep.subr.mxu0 0.0
    %1832 = vmatpush1.msra.mxu0 0.0
    %1833 = vmatprep.subr.mxu0 0.0
    %1834 = vmatpush1.msra.mxu0 0.0
    %1835 = vmatprep.subr.mxu0 0.0
    %1836 = vmatpush1.msra.mxu0 0.0
    %1837 = vmatprep.subr.mxu0 0.0
    %1838 = vmatpush1.msra.mxu0 0.0
    %1839 = vmatprep.subr.mxu0 0.0
    %1840 = vmatpush1.msra.mxu0 0.0
    %1841 = vmatprep.subr.mxu0 0.0
    %1842 = vmatpush1.msra.mxu0 %v1806
    %1843 = vmatprep.subr.mxu0 0.0
    %1844 = vmatpush2.msra.mxu0 0.0
    %1845 = vmatprep.subr.mxu0 0.0
    %1846 = vmatpush2.msra.mxu0 0.0
    %1847 = vmatprep.subr.mxu0 0.0
    %1848 = vmatpush2.msra.mxu0 0.0
    %1849 = vmatprep.subr.mxu0 0.0
    %1850 = vmatpush2.msra.mxu0 0.0
    %1851 = vmatprep.subr.mxu0 0.0
    %1852 = vmatpush2.msra.mxu0 0.0
    %1853 = vmatprep.subr.mxu0 0.0
    %1854 = vmatpush2.msra.mxu0 0.0
    %1855 = vmatprep.subr.mxu0 0.0
    %1856 = vmatpush2.msra.mxu0 0.0
    %1857 = vmatprep.subr.mxu0 0.0
    %1858 = vmatpush2.msra.mxu0 0.0
    %1859 = vmatprep.subr.mxu0 0.0
    %1860 = vmatpush2.msra.mxu0 0.0
    %1861 = vmatprep.subr.mxu0 0.0
    %1862 = vmatpush2.msra.mxu0 0.0
    %1863 = vmatprep.subr.mxu0 0.0
    %1864 = vmatpush2.msra.mxu0 0.0
    %1865 = vmatprep.subr.mxu0 0.0
    %1866 = vmatpush2.msra.mxu0 0.0
    %1867 = vmatprep.subr.mxu0 0.0
    %1868 = vmatpush2.msra.mxu0 0.0
    %1869 = vmatprep.subr.mxu0 0.0
    %1870 = vmatpush2.msra.mxu0 0.0
    %1871 = vmatprep.subr.mxu0 0.0
    %1872 = vmatpush2.msra.mxu0 0.0
    %1873 = vmatprep.subr.mxu0 0.0
    %1874 = vmatpush2.msra.mxu0 0.0
    %1875 = vmatprep.mubr.f32.mxu0 0.0
    %1876 = vmatmul.mubr.f32.gmra.mxu0 %v1809
    %v1877 = vpop.f32.mrf.mxu0
    %v1878 = vadd.f32 0.0, %v1877
    %v1879 = vpop.f32.mrf.mxu0
    %1880 = vdwg.mxu0
    %1881 = vst.msk [vmem:[#allocation2 + $0x8] sm:$0xff] %vm205, %v1878
    %1882 = vrot.lane.b32.xlu0 %v1365, 112
    %v1883 = vpop.permute.xlu0 %1882
    %1884 = vrot.lane.b32.xlu0 %v1365, 80
    %v1885 = vpop.permute.xlu0 %1884
    %v1886 = vsel %vm205, %v1883, 0
    %v1888 = vsel %vm205, %v1885, 0
    %1890 = vmatprep.subr.mxu0 0.0
    %1891 = vmatpush1.xpose.msra.mxu0 0.0
    %1892 = vmatprep.subr.mxu0 0.0
    %1893 = vmatpush1.xpose.msra.mxu0 0.0
    %1894 = vmatprep.subr.mxu0 0.0
    %1895 = vmatpush1.xpose.msra.mxu0 0.0
    %1896 = vmatprep.subr.mxu0 0.0
    %1897 = vmatpush1.xpose.msra.mxu0 0.0
    %1898 = vmatprep.subr.mxu0 0.0
    %1899 = vmatpush1.xpose.msra.mxu0 0.0
    %1900 = vmatprep.subr.mxu0 0.0
    %1901 = vmatpush1.xpose.msra.mxu0 0.0
    %1902 = vmatprep.subr.mxu0 0.0
    %1903 = vmatpush1.xpose.msra.mxu0 0.0
    %1904 = vmatprep.subr.mxu0 0.0
    %1905 = vmatpush1.xpose.msra.mxu0 0.0
    %1906 = vmatprep.subr.mxu0 0.0
    %1907 = vmatpush1.xpose.msra.mxu0 0.0
    %1908 = vmatprep.subr.mxu0 0.0
    %1909 = vmatpush1.xpose.msra.mxu0 0.0
    %1910 = vmatprep.subr.mxu0 0.0
    %1911 = vmatpush1.xpose.msra.mxu0 0.0
    %1912 = vmatprep.subr.mxu0 0.0
    %1913 = vmatpush1.xpose.msra.mxu0 0.0
    %1914 = vmatprep.subr.mxu0 0.0
    %1915 = vmatpush1.xpose.msra.mxu0 0.0
    %1916 = vmatprep.subr.mxu0 0.0
    %1917 = vmatpush1.xpose.msra.mxu0 0.0
    %1918 = vmatprep.subr.mxu0 0.0
    %1919 = vmatpush1.xpose.msra.mxu0 0.0
    %1920 = vmatprep.subr.mxu0 0.0
    %1921 = vmatpush1.xpose.msra.mxu0 %v1888
    %1922 = vmatprep.subr.mxu0 0.0
    %1923 = vmatpush2.xpose.msra.mxu0 0.0
    %1924 = vmatprep.subr.mxu0 0.0
    %1925 = vmatpush2.xpose.msra.mxu0 0.0
    %1926 = vmatprep.subr.mxu0 0.0
    %1927 = vmatpush2.xpose.msra.mxu0 0.0
    %1928 = vmatprep.subr.mxu0 0.0
    %1929 = vmatpush2.xpose.msra.mxu0 0.0
    %1930 = vmatprep.subr.mxu0 0.0
    %1931 = vmatpush2.xpose.msra.mxu0 0.0
    %1932 = vmatprep.subr.mxu0 0.0
    %1933 = vmatpush2.xpose.msra.mxu0 0.0
    %1934 = vmatprep.subr.mxu0 0.0
    %1935 = vmatpush2.xpose.msra.mxu0 0.0
    %1936 = vmatprep.subr.mxu0 0.0
    %1937 = vmatpush2.xpose.msra.mxu0 0.0
    %1938 = vmatprep.subr.mxu0 0.0
    %1939 = vmatpush2.xpose.msra.mxu0 0.0
    %1940 = vmatprep.subr.mxu0 0.0
    %1941 = vmatpush2.xpose.msra.mxu0 0.0
    %1942 = vmatprep.subr.mxu0 0.0
    %1943 = vmatpush2.xpose.msra.mxu0 0.0
    %1944 = vmatprep.subr.mxu0 0.0
    %1945 = vmatpush2.xpose.msra.mxu0 0.0
    %1946 = vmatprep.subr.mxu0 0.0
    %1947 = vmatpush2.xpose.msra.mxu0 0.0
    %1948 = vmatprep.subr.mxu0 0.0
    %1949 = vmatpush2.xpose.msra.mxu0 0.0
    %1950 = vmatprep.subr.mxu0 0.0
    %1951 = vmatpush2.xpose.msra.mxu0 0.0
    %1952 = vmatprep.subr.mxu0 0.0
    %1953 = vmatpush2.xpose.msra.mxu0 0.0
    %1954 = vmatprep.mubr.f32.mxu0 0.0
    %1955 = vmatmul.mubr.f32.gmra.mxu0 %v1886
    %v1956 = vpop.f32.mrf.mxu0
    %v1957 = vadd.f32 0.0, %v1956
    %v1958 = vpop.f32.mrf.mxu0
    %1959 = vdwg.mxu0
    %v1960 = vmul.f32 %v1957, 0.25
    %v1961 = vadd.f32 %v1960, %v1792
    %v1962 = vsel %vm286, %v1961, -inf
    %1963 = vmax.xlane.f32.xlu0 %v1962
    %v1964 = vpop.xlane.xlu0 %1963
    %v1965 = vsub.f32 %v1961, %v1964
    %v1966 = vmul.f32 %v1965, 1.442695
    %v1967 = vpow.pop %v1966
    %v1968 = vsel %vm286, %v1967, 0.0
    %1969 = vadd.xlane.f32.xlu0 %v1968
    %v1970 = vpop.xlane.xlu0 %1969
    %v1971 = vrcp.pop %v1970
    %v1972 = vmul.f32 %v1967, %v1971
    %1973 = vrot.lane.b32.xlu0 %v1365, 48
    %v1974 = vpop.permute.xlu0 %1973
    %v1977 = vsel %vm286, %v1972, 0
    %1979 = vmatprep.subr.mxu0 0.0
    %1980 = vmatpush1.msra.mxu0 0.0
    %1981 = vmatprep.subr.mxu0 0.0
    %1982 = vmatpush1.msra.mxu0 0.0
    %1983 = vmatprep.subr.mxu0 0.0
    %1984 = vmatpush1.msra.mxu0 0.0
    %1985 = vmatprep.subr.mxu0 0.0
    %1986 = vmatpush1.msra.mxu0 0.0
    %1987 = vmatprep.subr.mxu0 0.0
    %1988 = vmatpush1.msra.mxu0 0.0
    %1989 = vmatprep.subr.mxu0 0.0
    %1990 = vmatpush1.msra.mxu0 0.0
    %1991 = vmatprep.subr.mxu0 0.0
    %1992 = vmatpush1.msra.mxu0 0.0
    %1993 = vmatprep.subr.mxu0 0.0
    %1994 = vmatpush1.msra.mxu0 0.0
    %1995 = vmatprep.subr.mxu0 0.0
    %1996 = vmatpush1.msra.mxu0 0.0
    %1997 = vmatprep.subr.mxu0 0.0
    %1998 = vmatpush1.msra.mxu0 0.0
    %1999 = vmatprep.subr.mxu0 0.0
    %2000 = vmatpush1.msra.mxu0 0.0
    %2001 = vmatprep.subr.mxu0 0.0
    %2002 = vmatpush1.msra.mxu0 0.0
    %2003 = vmatprep.subr.mxu0 0.0
    %2004 = vmatpush1.msra.mxu0 0.0
    %2005 = vmatprep.subr.mxu0 0.0
    %2006 = vmatpush1.msra.mxu0 0.0
    %2007 = vmatprep.subr.mxu0 0.0
    %2008 = vmatpush1.msra.mxu0 0.0
    %2009 = vmatprep.subr.mxu0 0.0
    %2010 = vmatpush1.msra.mxu0 %v1974
    %2011 = vmatprep.subr.mxu0 0.0
    %2012 = vmatpush2.msra.mxu0 0.0
    %2013 = vmatprep.subr.mxu0 0.0
    %2014 = vmatpush2.msra.mxu0 0.0
    %2015 = vmatprep.subr.mxu0 0.0
    %2016 = vmatpush2.msra.mxu0 0.0
    %2017 = vmatprep.subr.mxu0 0.0
    %2018 = vmatpush2.msra.mxu0 0.0
    %2019 = vmatprep.subr.mxu0 0.0
    %2020 = vmatpush2.msra.mxu0 0.0
    %2021 = vmatprep.subr.mxu0 0.0
    %2022 = vmatpush2.msra.mxu0 0.0
    %2023 = vmatprep.subr.mxu0 0.0
    %2024 = vmatpush2.msra.mxu0 0.0
    %2025 = vmatprep.subr.mxu0 0.0
    %2026 = vmatpush2.msra.mxu0 0.0
    %2027 = vmatprep.subr.mxu0 0.0
    %2028 = vmatpush2.msra.mxu0 0.0
    %2029 = vmatprep.subr.mxu0 0.0
    %2030 = vmatpush2.msra.mxu0 0.0
    %2031 = vmatprep.subr.mxu0 0.0
    %2032 = vmatpush2.msra.mxu0 0.0
    %2033 = vmatprep.subr.mxu0 0.0
    %2034 = vmatpush2.msra.mxu0 0.0
    %2035 = vmatprep.subr.mxu0 0.0
    %2036 = vmatpush2.msra.mxu0 0.0
    %2037 = vmatprep.subr.mxu0 0.0
    %2038 = vmatpush2.msra.mxu0 0.0
    %2039 = vmatprep.subr.mxu0 0.0
    %2040 = vmatpush2.msra.mxu0 0.0
    %2041 = vmatprep.subr.mxu0 0.0
    %2042 = vmatpush2.msra.mxu0 0.0
    %2043 = vmatprep.mubr.f32.mxu0 0.0
    %2044 = vmatmul.mubr.f32.gmra.mxu0 %v1977
    %v2045 = vpop.f32.mrf.mxu0
    %v2046 = vadd.f32 0.0, %v2045
    %v2047 = vpop.f32.mrf.mxu0
    %2048 = vdwg.mxu0
    %2050 = vrot.lane.b32.xlu0 %v2046, 16
    %v2051 = vpop.permute.xlu0 %2050
    %2053 = vst.msk [vmem:[#allocation2 + $0x8] sm:$0xff] %vm546, %v2051
    %v2054 = vld [vmem:[#allocation2] sm:$0xff]
    %v2055 = vld [vmem:[#allocation2 + $0x8] sm:$0xff]
    %2060 = vrot.lane.b32.xlu0 %v1262, 32
    %v2061 = vpop.permute.xlu0 %2060
    %2062 = vrot.lane.b32.xlu0 %v1263, 32
    %v2063 = vpop.permute.xlu0 %2062
    %2064 = vrot.lane.b32.xlu0 %v1264, 32
    %v2065 = vpop.permute.xlu0 %2064
    %2066 = vrot.lane.b32.xlu0 %v1265, 32
    %v2067 = vpop.permute.xlu0 %2066
    %2073 = vrot.lane.b32.xlu0 %v1363, 32
    %v2074 = vpop.permute.xlu0 %2073
    %v2077 = vsel %vm57, %v2054, 0
    %v2080 = vsel %vm57, %v2055, 0
    %2082 = vmatprep.subr.mxu0 0.0
    %2083 = vmatpush1.msra.mxu0 0.0
    %2084 = vmatprep.subr.mxu0 0.0
    %2085 = vmatpush1.msra.mxu0 0.0
    %2086 = vmatprep.subr.mxu0 0.0
    %2087 = vmatpush1.msra.mxu0 0.0
    %2088 = vmatprep.subr.mxu0 0.0
    %2089 = vmatpush1.msra.mxu0 0.0
    %2090 = vmatprep.subr.mxu0 0.0
    %2091 = vmatpush1.msra.mxu0 0.0
    %2092 = vmatprep.subr.mxu0 0.0
    %2093 = vmatpush1.msra.mxu0 0.0
    %2094 = vmatprep.subr.mxu0 0.0
    %2095 = vmatpush1.msra.mxu0 0.0
    %2096 = vmatprep.subr.mxu0 0.0
    %2097 = vmatpush1.msra.mxu0 0.0
    %2098 = vmatprep.subr.mxu0 0.0
    %2099 = vmatpush1.msra.mxu0 0.0
    %2100 = vmatprep.subr.mxu0 0.0
    %2101 = vmatpush1.msra.mxu0 0.0
    %2102 = vmatprep.subr.mxu0 0.0
    %2103 = vmatpush1.msra.mxu0 0.0
    %2104 = vmatprep.subr.mxu0 0.0
    %2105 = vmatpush1.msra.mxu0 0.0
    %2106 = vmatprep.subr.mxu0 0.0
    %2107 = vmatpush1.msra.mxu0 %v2067
    %2108 = vmatprep.subr.mxu0 0.0
    %2109 = vmatpush1.msra.mxu0 %v2065
    %2110 = vmatprep.subr.mxu0 0.0
    %2111 = vmatpush1.msra.mxu0 %v2063
    %2112 = vmatprep.subr.mxu0 0.0
    %2113 = vmatpush1.msra.mxu0 %v2061
    %2114 = vmatprep.subr.mxu0 0.0
    %2115 = vmatpush2.msra.mxu0 0.0
    %2116 = vmatprep.subr.mxu0 0.0
    %2117 = vmatpush2.msra.mxu0 0.0
    %2118 = vmatprep.subr.mxu0 0.0
    %2119 = vmatpush2.msra.mxu0 0.0
    %2120 = vmatprep.subr.mxu0 0.0
    %2121 = vmatpush2.msra.mxu0 0.0
    %2122 = vmatprep.subr.mxu0 0.0
    %2123 = vmatpush2.msra.mxu0 0.0
    %2124 = vmatprep.subr.mxu0 0.0
    %2125 = vmatpush2.msra.mxu0 0.0
    %2126 = vmatprep.subr.mxu0 0.0
    %2127 = vmatpush2.msra.mxu0 0.0
    %2128 = vmatprep.subr.mxu0 0.0
    %2129 = vmatpush2.msra.mxu0 0.0
    %2130 = vmatprep.subr.mxu0 0.0
    %2131 = vmatpush2.msra.mxu0 0.0
    %2132 = vmatprep.subr.mxu0 0.0
    %2133 = vmatpush2.msra.mxu0 0.0
    %2134 = vmatprep.subr.mxu0 0.0
    %2135 = vmatpush2.msra.mxu0 0.0
    %2136 = vmatprep.subr.mxu0 0.0
    %2137 = vmatpush2.msra.mxu0 0.0
    %2138 = vmatprep.subr.mxu0 0.0
    %2139 = vmatpush2.msra.mxu0 0.0
    %2140 = vmatprep.subr.mxu0 0.0
    %2141 = vmatpush2.msra.mxu0 0.0
    %2142 = vmatprep.subr.mxu0 0.0
    %2143 = vmatpush2.msra.mxu0 0.0
    %2144 = vmatprep.subr.mxu0 0.0
    %2145 = vmatpush2.msra.mxu0 0.0
    %2146 = vmatprep.mubr.f32.mxu0 0.0
    %2147 = vmatmul.mubr.f32.gmra.mxu0 %v2077
    %v2148 = vpop.f32.mrf.mxu0
    %v2149 = vadd.f32 %v2074, %v2148
    %v2150 = vpop.f32.mrf.mxu0
    %2151 = vmatprep.mubr.f32.mxu0 0.0
    %2152 = vmatmul.mubr.f32.gmra.mxu0 %v2080
    %v2153 = vpop.f32.mrf.mxu0
    %v2154 = vadd.f32 %v2074, %v2153
    %v2155 = vpop.f32.mrf.mxu0
    %2156 = vdwg.mxu0
    %v2157 = vadd.f32 %v1260, %v2149
    %v2158 = vadd.f32 %v1261, %v2154
    %v2159 = vsel %vm57, %v2157, 0.0
    %2160 = vadd.xlane.f32.xlu0 %v2159
    %v2161 = vpop.xlane.xlu0 %2160
    %v2162 = vsel %vm57, %v2158, 0.0
    %2163 = vadd.xlane.f32.xlu0 %v2162
    %v2164 = vpop.xlane.xlu0 %2163
    %v2165 = vmul.f32 %v2161, %v64
    %v2166 = vmul.f32 %v2164, %v64
    %v2167 = vsub.f32 %v2157, %v2165
    %v2168 = vsub.f32 %v2158, %v2166
    %v2169 = vmul.f32 %v2167, %v2167
    %v2170 = vmul.f32 %v2168, %v2168
    %v2171 = vsel %vm57, %v2169, 0.0
    %2172 = vadd.xlane.f32.xlu0 %v2171
    %v2173 = vpop.xlane.xlu0 %2172
    %v2174 = vsel %vm57, %v2170, 0.0
    %2175 = vadd.xlane.f32.xlu0 %v2174
    %v2176 = vpop.xlane.xlu0 %2175
    %v2177 = vmul.f32 %v2173, %v64
    %v2178 = vmul.f32 %v2176, %v64
    %v2179 = vadd.f32 %v2177, 1e-05
    %v2180 = vadd.f32 %v2178, 1e-05
    %v2181 = vrsqrt.pop %v2179
    %v2182 = vrsqrt.pop %v2180
    %v2183 = vmul.f32 %v2167, %v2181
    %v2184 = vmul.f32 %v2168, %v2182
    %v2185 = vlaneseq
    %v2186 = vshrl.u32 %v2185, 7
    %v2187 = vsub.s32 1, %v2186
    %v2188 = vrot.slane %v1278, %v2187
    %v2189 = vmul.f32 %v2183, %v2188
    %v2190 = vmul.f32 %v2184, %v2188
    %2192 = vrot.lane.b32.xlu0 %v2188, 96
    %v2193 = vpop.permute.xlu0 %2192
    %v2195 = vadd.f32 %v2189, %v2193
    %v2196 = vadd.f32 %v2190, %v2193
    %v2197 = vlaneseq
    %v2198 = vshrl.u32 %v2197, 7
    %v2199 = vsub.s32 2, %v2198
    %v2200 = vrot.slane %v1278, %v2199
    %v2202 = vsel %vm57, %v2195, 0
    %v2205 = vsel %vm57, %v2196, 0
    %2207 = vmatprep.subr.mxu0 0.0
    %2208 = vmatpush1.msra.mxu0 0.0
    %2209 = vmatprep.subr.mxu0 0.0
    %2210 = vmatpush1.msra.mxu0 0.0
    %2211 = vmatprep.subr.mxu0 0.0
    %2212 = vmatpush1.msra.mxu0 0.0
    %2213 = vmatprep.subr.mxu0 0.0
    %2214 = vmatpush1.msra.mxu0 0.0
    %2215 = vmatprep.subr.mxu0 0.0
    %2216 = vmatpush1.msra.mxu0 0.0
    %2217 = vmatprep.subr.mxu0 0.0
    %2218 = vmatpush1.msra.mxu0 0.0
    %2219 = vmatprep.subr.mxu0 0.0
    %2220 = vmatpush1.msra.mxu0 0.0
    %2221 = vmatprep.subr.mxu0 0.0
    %2222 = vmatpush1.msra.mxu0 0.0
    %2223 = vmatprep.subr.mxu0 0.0
    %2224 = vmatpush1.msra.mxu0 0.0
    %2225 = vmatprep.subr.mxu0 0.0
    %2226 = vmatpush1.msra.mxu0 0.0
    %2227 = vmatprep.subr.mxu0 0.0
    %2228 = vmatpush1.msra.mxu0 0.0
    %2229 = vmatprep.subr.mxu0 0.0
    %2230 = vmatpush1.msra.mxu0 0.0
    %2231 = vmatprep.subr.mxu0 0.0
    %2232 = vmatpush1.msra.mxu0 %v1269
    %2233 = vmatprep.subr.mxu0 0.0
    %2234 = vmatpush1.msra.mxu0 %v1268
    %2235 = vmatprep.subr.mxu0 0.0
    %2236 = vmatpush1.msra.mxu0 %v1267
    %2237 = vmatprep.subr.mxu0 0.0
    %2238 = vmatpush1.msra.mxu0 %v1266
    %2239 = vmatprep.subr.mxu0 0.0
    %2240 = vmatpush2.msra.mxu0 0.0
    %2241 = vmatprep.subr.mxu0 0.0
    %2242 = vmatpush2.msra.mxu0 0.0
    %2243 = vmatprep.subr.mxu0 0.0
    %2244 = vmatpush2.msra.mxu0 0.0
    %2245 = vmatprep.subr.mxu0 0.0
    %2246 = vmatpush2.msra.mxu0 0.0
    %2247 = vmatprep.subr.mxu0 0.0
    %2248 = vmatpush2.msra.mxu0 0.0
    %2249 = vmatprep.subr.mxu0 0.0
    %2250 = vmatpush2.msra.mxu0 0.0
    %2251 = vmatprep.subr.mxu0 0.0
    %2252 = vmatpush2.msra.mxu0 0.0
    %2253 = vmatprep.subr.mxu0 0.0
    %2254 = vmatpush2.msra.mxu0 0.0
    %2255 = vmatprep.subr.mxu0 0.0
    %2256 = vmatpush2.msra.mxu0 0.0
    %2257 = vmatprep.subr.mxu0 0.0
    %2258 = vmatpush2.msra.mxu0 0.0
    %2259 = vmatprep.subr.mxu0 0.0
    %2260 = vmatpush2.msra.mxu0 0.0
    %2261 = vmatprep.subr.mxu0 0.0
    %2262 = vmatpush2.msra.mxu0 0.0
    %2263 = vmatprep.subr.mxu0 0.0
    %2264 = vmatpush2.msra.mxu0 0.0
    %2265 = vmatprep.subr.mxu0 0.0
    %2266 = vmatpush2.msra.mxu0 0.0
    %2267 = vmatprep.subr.mxu0 0.0
    %2268 = vmatpush2.msra.mxu0 0.0
    %2269 = vmatprep.subr.mxu0 0.0
    %2270 = vmatpush2.msra.mxu0 0.0
    %2271 = vmatprep.mubr.f32.mxu0 0.0
    %2272 = vmatmul.mubr.f32.gmra.mxu0 %v2202
    %v2273 = vpop.f32.mrf.mxu0
    %v2274 = vadd.f32 %v2200, %v2273
    %v2275 = vpop.f32.mrf.mxu0
    %2276 = vmatprep.mubr.f32.mxu0 0.0
    %2277 = vmatmul.mubr.f32.gmra.mxu0 %v2205
    %v2278 = vpop.f32.mrf.mxu0
    %v2279 = vadd.f32 %v2200, %v2278
    %v2280 = vpop.f32.mrf.mxu0
    %2281 = vdwg.mxu0
    %v2282 = vmul.f32 %v2274, 0.5
    %v2283 = vmul.f32 %v2279, 0.5
    %v2284 = vmul.f32 %v2274, 0.044715
    %v2285 = vmul.f32 %v2279, 0.044715
    %v2286 = vmul.f32 %v2284, %v2274
    %v2287 = vmul.f32 %v2285, %v2279
    %v2288 = vmul.f32 %v2286, %v2274
    %v2289 = vmul.f32 %v2287, %v2279
    %v2290 = vadd.f32 %v2274, %v2288
    %v2291 = vadd.f32 %v2279, %v2289
    %v2292 = vmul.f32 %v2290, 0.7978846
    %v2293 = vmul.f32 %v2291, 0.7978846
    %v2294 = vtanh.pop %v2292
    %v2295 = vtanh.pop %v2293
    %v2296 = vadd.f32 %v2294, 1.0
    %v2297 = vadd.f32 %v2295, 1.0
    %v2298 = vmul.f32 %v2282, %v2296
    %v2299 = vmul.f32 %v2283, %v2297
    %2301 = vrot.lane.b32.xlu0 %v2200, 64
    %v2302 = vpop.permute.xlu0 %2301
    %v2305 = vsel %vm1142, %v2298, 0
    %v2308 = vsel %vm1142, %v2299, 0
    %2310 = vmatprep.subr.mxu0 0.0
    %2311 = vmatpush1.msra.mxu0 0.0
    %2312 = vmatprep.subr.mxu0 0.0
    %2313 = vmatpush1.msra.mxu0 0.0
    %2314 = vmatprep.subr.mxu0 0.0
    %2315 = vmatpush1.msra.mxu0 0.0
    %2316 = vmatprep.subr.mxu0 0.0
    %2317 = vmatpush1.msra.mxu0 0.0
    %2318 = vmatprep.subr.mxu0 0.0
    %2319 = vmatpush1.msra.mxu0 0.0
    %2320 = vmatprep.subr.mxu0 0.0
    %2321 = vmatpush1.msra.mxu0 0.0
    %2322 = vmatprep.subr.mxu0 0.0
    %2323 = vmatpush1.msra.mxu0 0.0
    %2324 = vmatprep.subr.mxu0 0.0
    %2325 = vmatpush1.msra.mxu0 0.0
    %2326 = vmatprep.subr.mxu0 0.0
    %2327 = vmatpush1.msra.mxu0 %v1277
    %2328 = vmatprep.subr.mxu0 0.0
    %2329 = vmatpush1.msra.mxu0 %v1276
    %2330 = vmatprep.subr.mxu0 0.0
    %2331 = vmatpush1.msra.mxu0 %v1275
    %2332 = vmatprep.subr.mxu0 0.0
    %2333 = vmatpush1.msra.mxu0 %v1274
    %2334 = vmatprep.subr.mxu0 0.0
    %2335 = vmatpush1.msra.mxu0 %v1273
    %2336 = vmatprep.subr.mxu0 0.0
    %2337 = vmatpush1.msra.mxu0 %v1272
    %2338 = vmatprep.subr.mxu0 0.0
    %2339 = vmatpush1.msra.mxu0 %v1271
    %2340 = vmatprep.subr.mxu0 0.0
    %2341 = vmatpush1.msra.mxu0 %v1270
    %2342 = vmatprep.subr.mxu0 0.0
    %2343 = vmatpush2.msra.mxu0 0.0
    %2344 = vmatprep.subr.mxu0 0.0
    %2345 = vmatpush2.msra.mxu0 0.0
    %2346 = vmatprep.subr.mxu0 0.0
    %2347 = vmatpush2.msra.mxu0 0.0
    %2348 = vmatprep.subr.mxu0 0.0
    %2349 = vmatpush2.msra.mxu0 0.0
    %2350 = vmatprep.subr.mxu0 0.0
    %2351 = vmatpush2.msra.mxu0 0.0
    %2352 = vmatprep.subr.mxu0 0.0
    %2353 = vmatpush2.msra.mxu0 0.0
    %2354 = vmatprep.subr.mxu0 0.0
    %2355 = vmatpush2.msra.mxu0 0.0
    %2356 = vmatprep.subr.mxu0 0.0
    %2357 = vmatpush2.msra.mxu0 0.0
    %2358 = vmatprep.subr.mxu0 0.0
    %2359 = vmatpush2.msra.mxu0 0.0
    %2360 = vmatprep.subr.mxu0 0.0
    %2361 = vmatpush2.msra.mxu0 0.0
    %2362 = vmatprep.subr.mxu0 0.0
    %2363 = vmatpush2.msra.mxu0 0.0
    %2364 = vmatprep.subr.mxu0 0.0
    %2365 = vmatpush2.msra.mxu0 0.0
    %2366 = vmatprep.subr.mxu0 0.0
    %2367 = vmatpush2.msra.mxu0 0.0
    %2368 = vmatprep.subr.mxu0 0.0
    %2369 = vmatpush2.msra.mxu0 0.0
    %2370 = vmatprep.subr.mxu0 0.0
    %2371 = vmatpush2.msra.mxu0 0.0
    %2372 = vmatprep.subr.mxu0 0.0
    %2373 = vmatpush2.msra.mxu0 0.0
    %2374 = vmatprep.mubr.f32.mxu0 0.0
    %2375 = vmatmul.mubr.f32.gmra.mxu0 %v2305
    %v2376 = vpop.f32.mrf.mxu0
    %v2377 = vadd.f32 %v2302, %v2376
    %v2378 = vpop.f32.mrf.mxu0
    %2379 = vmatprep.mubr.f32.mxu0 0.0
    %2380 = vmatmul.mubr.f32.gmra.mxu0 %v2308
    %v2381 = vpop.f32.mrf.mxu0
    %v2382 = vadd.f32 %v2302, %v2381
    %v2383 = vpop.f32.mrf.mxu0
    %2384 = vdwg.mxu0
    %v2385 = vadd.f32 %v2195, %v2377
    %v2386 = vadd.f32 %v2196, %v2382
    %v2387 = vsel %vm57, %v2385, 0.0
    %2388 = vadd.xlane.f32.xlu0 %v2387
    %v2389 = vpop.xlane.xlu0 %2388
    %v2390 = vsel %vm57, %v2386, 0.0
    %2391 = vadd.xlane.f32.xlu0 %v2390
    %v2392 = vpop.xlane.xlu0 %2391
    %v2393 = vmul.f32 %v2389, %v64
    %v2394 = vmul.f32 %v2392, %v64
    %v2395 = vsub.f32 %v2385, %v2393
    %v2396 = vsub.f32 %v2386, %v2394
    %v2397 = vmul.f32 %v2395, %v2395
    %v2398 = vmul.f32 %v2396, %v2396
    %v2399 = vsel %vm57, %v2397, 0.0
    %2400 = vadd.xlane.f32.xlu0 %v2399
    %v2401 = vpop.xlane.xlu0 %2400
    %v2402 = vsel %vm57, %v2398, 0.0
    %2403 = vadd.xlane.f32.xlu0 %v2402
    %v2404 = vpop.xlane.xlu0 %2403
    %v2405 = vmul.f32 %v2401, %v64
    %v2406 = vmul.f32 %v2404, %v64
    %v2407 = vadd.f32 %v2405, 1e-05
    %v2408 = vadd.f32 %v2406, 1e-05
    %v2409 = vrsqrt.pop %v2407
    %v2410 = vrsqrt.pop %v2408
    %v2411 = vmul.f32 %v2395, %v2409
    %v2412 = vmul.f32 %v2396, %v2410
    %2413 = vrot.lane.b32.xlu0 %v2188, 64
    %v2414 = vpop.permute.xlu0 %2413
    %v2416 = vmul.f32 %v2411, %v2414
    %v2417 = vmul.f32 %v2412, %v2414
    %2418 = vrot.lane.b32.xlu0 %v2188, 32
    %v2419 = vpop.permute.xlu0 %2418
    %v2421 = vadd.f32 %v2416, %v2419
    %v2422 = vadd.f32 %v2417, %v2419
    %v2423 = vld [vmem:[#allocation8 + $0x8] sm:$0xff]
    %v2424 = vld [vmem:[#allocation8 + $0x10] sm:$0xff]
    %v2425 = vld [vmem:[#allocation8 + $0x18] sm:$0xff]
    %v2426 = vld [vmem:[#allocation8 + $0x20] sm:$0xff]
    %v2428 = vrot.slane %v2422, 7
    %vm2430 = vcmask 1040384
    %v2431 = vsel %vm2430, %v2421, %v2428
    %vm2432 = vcmask 1041408
    %v2433 = vsel %vm2432, %v2431, 0.0
    %v2434 = vlaneseq
    %v2435 = vshrl.u32 %v2434, 7
    %v2436 = vsub.s32 1, %v2435
    %v2437 = vrot.slane %v54, %v2436
    %v2439 = vsel %vm57, %v2433, 0
    %2441 = vmatprep.subr.mxu0 0.0
    %2442 = vmatpush1.msra.mxu0 0.0
    %2443 = vmatprep.subr.mxu0 0.0
    %2444 = vmatpush1.msra.mxu0 0.0
    %2445 = vmatprep.subr.mxu0 0.0
    %2446 = vmatpush1.msra.mxu0 0.0
    %2447 = vmatprep.subr.mxu0 0.0
    %2448 = vmatpush1.msra.mxu0 0.0
    %2449 = vmatprep.subr.mxu0 0.0
    %2450 = vmatpush1.msra.mxu0 0.0
    %2451 = vmatprep.subr.mxu0 0.0
    %2452 = vmatpush1.msra.mxu0 0.0
    %2453 = vmatprep.subr.mxu0 0.0
    %2454 = vmatpush1.msra.mxu0 0.0
    %2455 = vmatprep.subr.mxu0 0.0
    %2456 = vmatpush1.msra.mxu0 0.0
    %2457 = vmatprep.subr.mxu0 0.0
    %2458 = vmatpush1.msra.mxu0 0.0
    %2459 = vmatprep.subr.mxu0 0.0
    %2460 = vmatpush1.msra.mxu0 0.0
    %2461 = vmatprep.subr.mxu0 0.0
    %2462 = vmatpush1.msra.mxu0 0.0
    %2463 = vmatprep.subr.mxu0 0.0
    %2464 = vmatpush1.msra.mxu0 0.0
    %2465 = vmatprep.subr.mxu0 0.0
    %2466 = vmatpush1.msra.mxu0 %v2426
    %2467 = vmatprep.subr.mxu0 0.0
    %2468 = vmatpush1.msra.mxu0 %v2425
    %2469 = vmatprep.subr.mxu0 0.0
    %2470 = vmatpush1.msra.mxu0 %v2424
    %2471 = vmatprep.subr.mxu0 0.0
    %2472 = vmatpush1.msra.mxu0 %v2423
    %2473 = vmatprep.subr.mxu0 0.0
    %2474 = vmatpush2.msra.mxu0 0.0
    %2475 = vmatprep.subr.mxu0 0.0
    %2476 = vmatpush2.msra.mxu0 0.0
    %2477 = vmatprep.subr.mxu0 0.0
    %2478 = vmatpush2.msra.mxu0 0.0
    %2479 = vmatprep.subr.mxu0 0.0
    %2480 = vmatpush2.msra.mxu0 0.0
    %2481 = vmatprep.subr.mxu0 0.0
    %2482 = vmatpush2.msra.mxu0 0.0
    %2483 = vmatprep.subr.mxu0 0.0
    %2484 = vmatpush2.msra.mxu0 0.0
    %2485 = vmatprep.subr.mxu0 0.0
    %2486 = vmatpush2.msra.mxu0 0.0
    %2487 = vmatprep.subr.mxu0 0.0
    %2488 = vmatpush2.msra.mxu0 0.0
    %2489 = vmatprep.subr.mxu0 0.0
    %2490 = vmatpush2.msra.mxu0 0.0
    %2491 = vmatprep.subr.mxu0 0.0
    %2492 = vmatpush2.msra.mxu0 0.0
    %2493 = vmatprep.subr.mxu0 0.0
    %2494 = vmatpush2.msra.mxu0 0.0
    %2495 = vmatprep.subr.mxu0 0.0
    %2496 = vmatpush2.msra.mxu0 0.0
    %2497 = vmatprep.subr.mxu0 0.0
    %2498 = vmatpush2.msra.mxu0 0.0
    %2499 = vmatprep.subr.mxu0 0.0
    %2500 = vmatpush2.msra.mxu0 0.0
    %2501 = vmatprep.subr.mxu0 0.0
    %2502 = vmatpush2.msra.mxu0 0.0
    %2503 = vmatprep.subr.mxu0 0.0
    %2504 = vmatpush2.msra.mxu0 0.0
    %2505 = vmatprep.mubr.f32.mxu0 0.0
    %2506 = vmatmul.mubr.f32.gmra.mxu0 %v2439
    %v2507 = vpop.f32.mrf.mxu0
    %v2508 = vadd.f32 %v2437, %v2507
    %v2509 = vpop.f32.mrf.mxu0
    %2510 = vdwg.mxu0
    %2511 = vst [vmem:[#allocation9] sm:$0xff] %v2508
    // Predicated region
    $region26: #{tpu_custom_call.1} parent=1 // pred_check
      _
    $region27: #{tpu_custom_call.1} parent=1 // pred_check_branch
      %2513 = sbr.rel (0) target = $region29
    $region28: #{tpu_custom_call.1} parent=1 // pred_region
      %s2515 = ssub.s32 128, 128
      %2516 = vsyncadd [#allocation5], %s2515
      %s2518 = sshll.u32 [#allocation9], 4
      %s2519 = int_to_ptr.vmem [resolvable:$true] %s2518
      %2521 = dma.vmem_to_hbm [thread:$0]  %s2519, 128, %s3, [#allocation5]
    $region29: #{tpu_custom_call.1} parent=1 // pred_fallthru
      _
    // Predicated region
    $region30: #{tpu_custom_call.1} parent=1 // pred_check
      _
    $region31: #{tpu_custom_call.1} parent=1 // pred_check_branch
      %2523 = sbr.rel (0) target = $region33
    $region32: #{tpu_custom_call.1} parent=1 // pred_region
      %2524 = dma.done [#allocation5], 128
    $region33: #{tpu_custom_call.1} parent=1 // pred_fallthru
      _
    %2525 = vsyncpa [#allocation4], 1
    %2526 = vsyncpa [#allocation7], 1
    %2527 = vsyncpa [#allocation5], 1

</llo_original>
